<compile_context>
chip_gen: v7x
topology: tpu7x:2x2x1
jax: 0.10.0
libtpu: 0.0.40
codegen_flags: <defaults>
</compile_context>

<pallas_src>
import math
import jax
import jax.numpy as jnp
from jax.experimental import pallas as pl
from jax.experimental.pallas import tpu as pltpu

# ----------------------------- model config ---------------------------------
BATCH = 2
SEQ = 8
HIDDEN = 32
NUM_HEADS = 4
HEAD_DIM = HIDDEN // NUM_HEADS
INTERMEDIATE = 64
NUM_LAYERS = 2
VOCAB = 50
MAX_POS = 64
NUM_CLASS = 3
LN_EPS = 1e-12


# ----------------------------- kernel helpers --------------------------------
def _layer_norm(x, gamma, beta):
    mu = jnp.mean(x, axis=-1, keepdims=True)
    var = jnp.mean((x - mu) * (x - mu), axis=-1, keepdims=True)
    return (x - mu) * jax.lax.rsqrt(var + LN_EPS) * gamma + beta


def _gelu(x):
    # TODO(synk): HF BERT uses exact erf-GELU; tanh approximation used here
    # (keeps lowering on the EUP tanh path, numerically ~1e-3 close).
    c = math.sqrt(2.0 / math.pi)
    return 0.5 * x * (1.0 + jnp.tanh(c * (x + 0.044715 * x * x * x)))


# --------------------------- fused forward kernel -----------------------------
def bert_forward_kernel(emb_ref, bias_ref,
                        emb_ln_g, emb_ln_b,
                        wqkv, bqkv, wo, bo,
                        ln1_g, ln1_b, w1, b1, w2, b2, ln2_g, ln2_b,
                        pool_w, pool_b, head_w, head_b,
                        out_ref):
    scale = 1.0 / math.sqrt(HEAD_DIM)
    bias = bias_ref[...]                                   # (B*S, B*S), hoisted

    # Embedding LayerNorm (embedding gather itself is done in the wrapper).
    x = _layer_norm(emb_ref[...], emb_ln_g[...], emb_ln_b[...])   # (B*S, H)

    # Encoder layers, statically unrolled (weights stacked along layer axis).
    for l in range(NUM_LAYERS):
        # Fused QKV projection: one (B*S, H) @ (H, 3H) MXU pass.
        qkv = jnp.dot(x, wqkv[l], preferred_element_type=jnp.float32) + bqkv[l]
        q = qkv[:, 0:HIDDEN] * scale          # fold 1/sqrt(d) into Q once
        k = qkv[:, HIDDEN:2 * HIDDEN]
        v = qkv[:, 2 * HIDDEN:3 * HIDDEN]

        ctx_parts = []
        for h in range(NUM_HEADS):
            lo, hi = h * HEAD_DIM, (h + 1) * HEAD_DIM
            scores = jnp.dot(q[:, lo:hi], k[:, lo:hi].T,
                             preferred_element_type=jnp.float32)
            scores = scores + bias                          # no broadcast needed
            m = jnp.max(scores, axis=-1, keepdims=True)
            p = jnp.exp(scores - m)
            denom = jnp.sum(p, axis=-1, keepdims=True)
            p = p * pl.reciprocal(denom, approx=True)       # EUP slot
            ctx_parts.append(jnp.dot(p, v[:, lo:hi],
                                     preferred_element_type=jnp.float32))
        ctx = jnp.concatenate(ctx_parts, axis=-1)           # (B*S, H)

        # Single output projection instead of per-head accumulation.
        attn_out = jnp.dot(ctx, wo[l], preferred_element_type=jnp.float32) + bo[l]
        x = _layer_norm(x + attn_out, ln1_g[l], ln1_b[l])

        h1 = _gelu(jnp.dot(x, w1[l], preferred_element_type=jnp.float32) + b1[l])
        h2 = jnp.dot(h1, w2[l], preferred_element_type=jnp.float32) + b2[l]
        x = _layer_norm(x + h2, ln2_g[l], ln2_b[l])

    # Pooler on the [CLS] rows (rows 0, S, 2S, ... of the folded batch).
    cls = jnp.concatenate(
        [x[b * SEQ:b * SEQ + 1, :] for b in range(BATCH)], axis=0)     # (B, H)
    pooled = jnp.tanh(
        jnp.dot(cls, pool_w[...], preferred_element_type=jnp.float32) + pool_b[...])
    out_ref[...] = (jnp.dot(pooled, head_w[...],
                            preferred_element_type=jnp.float32) + head_b[...])


def _full_spec(arr):
    nd = arr.ndim
    return pl.BlockSpec(arr.shape, lambda i, _nd=nd: (0,) * _nd)


# ------------------------------ forward wrapper -------------------------------
def custom_bert_forward(params, src_input_ids, src_attention_mask):
    # task == 'classification' path of custom_Bert.forward
    B, S = src_input_ids.shape
    H = HIDDEN

    # Embedding lookup (gather) stays in plain JAX; token_type_ids assumed 0.
    we = params['word_emb'][src_input_ids]                   # (B, S, H)
    pe = params['pos_emb'][:S]                               # (S, H)
    te = params['type_emb'][0]                               # (H,)
    emb = (we + pe[None, :, :] + te[None, None, :]).reshape(B * S, H)

    # get_extended_attention_mask: (1 - mask) * -10000 additive key bias,
    # plus block-diagonal masking so folded batch rows never cross-attend.
    key_bias = (1.0 - src_attention_mask.astype(jnp.float32)) * -10000.0  # (B,S)
    batch_id = jnp.repeat(jnp.arange(B), S)                  # (B*S,)
    same = batch_id[:, None] == batch_id[None, :]            # (B*S, B*S)
    bias = jnp.where(same, key_bias.reshape(1, B * S),
                     jnp.float32(-10000.0))                  # (B*S, B*S)

    args = [emb, bias,
            params['emb_ln_g'], params['emb_ln_b'],
            params['wqkv'], params['bqkv'], params['wo'], params['bo'],
            params['ln1_g'], params['ln1_b'], params['w1'], params['b1'],
            params['w2'], params['b2'], params['ln2_g'], params['ln2_b'],
            params['pool_w'], params['pool_b'],
            params['head_w'], params['head_b']]

    logits = pl.pallas_call(
        bert_forward_kernel,
        out_shape=jax.ShapeDtypeStruct((B, NUM_CLASS), jnp.float32),
        grid_spec=pltpu.PrefetchScalarGridSpec(
            num_scalar_prefetch=0, grid=(1,),
            in_specs=[_full_spec(a) for a in args],
            out_specs=pl.BlockSpec((B, NUM_CLASS), lambda i: (0, 0))),
        compiler_params=pltpu.CompilerParams(
            dimension_semantics=("arbitrary",)),
    )(*args)

    # TODO(synk): variational branch of the original module references
    # undefined attributes (encoder1_embedding / model1 / latent_module) and
    # cannot execute; dist_loss is 0 as in the non-variational path.
    dist_loss = jnp.float32(0.0)
    return logits, dist_loss


# ------------------------------ parameter init --------------------------------
def init_params(key):
    std = 0.02
    L, H, I, C = NUM_LAYERS, HIDDEN, INTERMEDIATE, NUM_CLASS
    ks = jax.random.split(key, 9)

    def dense(k, shape):
        return jax.random.normal(k, shape, jnp.float32) * std

    return {
        'word_emb': dense(ks[0], (VOCAB, H)),
        'pos_emb': dense(ks[1], (MAX_POS, H)),
        'type_emb': dense(ks[2], (2, H)),
        'emb_ln_g': jnp.ones((1, H), jnp.float32),
        'emb_ln_b': jnp.zeros((1, H), jnp.float32),
        # Q/K/V weights concatenated to (H, 3H); all layers stacked on axis 0.
        'wqkv': dense(ks[3], (L, H, 3 * H)),
        'bqkv': jnp.zeros((L, 1, 3 * H), jnp.float32),
        'wo': dense(ks[4], (L, H, H)),
        'bo': jnp.zeros((L, 1, H), jnp.float32),
        'ln1_g': jnp.ones((L, 1, H), jnp.float32),
        'ln1_b': jnp.zeros((L, 1, H), jnp.float32),
        'w1': dense(ks[5], (L, H, I)),
        'b1': jnp.zeros((L, 1, I), jnp.float32),
        'w2': dense(ks[6], (L, I, H)),
        'b2': jnp.zeros((L, 1, H), jnp.float32),
        'ln2_g': jnp.ones((L, 1, H), jnp.float32),
        'ln2_b': jnp.zeros((L, 1, H), jnp.float32),
        'pool_w': dense(ks[7], (H, H)),
        'pool_b': jnp.zeros((1, H), jnp.float32),
        'head_w': dense(ks[8], (H, C)),
        'head_b': jnp.zeros((1, C), jnp.float32),
    }


# ----------------------------------- main -------------------------------------
if __name__ == "__main__":
    root = jax.random.PRNGKey(0)
    k_param, k_ids = jax.random.split(root)
    params = init_params(k_param)

    src_input_ids = jax.random.randint(k_ids, (BATCH, SEQ), 0, VOCAB, jnp.int32)
    src_attention_mask = jnp.ones((BATCH, SEQ), jnp.int32)
    # pad out the last two tokens of the second sequence
    src_attention_mask = src_attention_mask.at[1, SEQ - 2:].set(0)

    fwd = jax.jit(lambda ids, m: custom_bert_forward(params, ids, m))
    logits, dist_loss = fwd(src_input_ids, src_attention_mask)
    jax.block_until_ready(logits)
    jax.block_until_ready(dist_loss)
    assert logits.shape == (BATCH, NUM_CLASS)
    print("KERNEL_OK")
</pallas_src>

<mosaic_0001>
module attributes {stable_mosaic.version = 11 : i64} {
  func.func @bert_forward_kernel(%arg0: i32, %arg1: memref<16x32xf32, #tpu.memory_space<vmem>>, %arg2: memref<16x16xf32, #tpu.memory_space<vmem>>, %arg3: memref<1x32xf32, #tpu.memory_space<vmem>>, %arg4: memref<1x32xf32, #tpu.memory_space<vmem>>, %arg5: memref<2x32x96xf32, #tpu.memory_space<vmem>>, %arg6: memref<2x1x96xf32, #tpu.memory_space<vmem>>, %arg7: memref<2x32x32xf32, #tpu.memory_space<vmem>>, %arg8: memref<2x1x32xf32, #tpu.memory_space<vmem>>, %arg9: memref<2x1x32xf32, #tpu.memory_space<vmem>>, %arg10: memref<2x1x32xf32, #tpu.memory_space<vmem>>, %arg11: memref<2x32x64xf32, #tpu.memory_space<vmem>>, %arg12: memref<2x1x64xf32, #tpu.memory_space<vmem>>, %arg13: memref<2x64x32xf32, #tpu.memory_space<vmem>>, %arg14: memref<2x1x32xf32, #tpu.memory_space<vmem>>, %arg15: memref<2x1x32xf32, #tpu.memory_space<vmem>>, %arg16: memref<2x1x32xf32, #tpu.memory_space<vmem>>, %arg17: memref<32x32xf32, #tpu.memory_space<vmem>>, %arg18: memref<1x32xf32, #tpu.memory_space<vmem>>, %arg19: memref<32x3xf32, #tpu.memory_space<vmem>>, %arg20: memref<1x3xf32, #tpu.memory_space<vmem>>, %arg21: memref<2x3xf32, #tpu.memory_space<vmem>>) attributes {dimension_semantics = [#tpu.dimension_semantics<arbitrary>], iteration_bounds = array<i64: 1>, scalar_prefetch = 0 : i64, scratch_operands = 0 : i64, tpu.core_type = #tpu.core_type<tc>, window_params = [{pipeline_mode = #tpu.pipeline_mode<synchronous>, transform_indices = @transform_0, window_bounds = array<i64: 16, 32>}, {pipeline_mode = #tpu.pipeline_mode<synchronous>, transform_indices = @transform_1, window_bounds = array<i64: 16, 16>}, {pipeline_mode = #tpu.pipeline_mode<synchronous>, transform_indices = @transform_2, window_bounds = array<i64: 1, 32>}, {pipeline_mode = #tpu.pipeline_mode<synchronous>, transform_indices = @transform_3, window_bounds = array<i64: 1, 32>}, {pipeline_mode = #tpu.pipeline_mode<synchronous>, transform_indices = @transform_4, window_bounds = array<i64: 2, 32, 96>}, {pipeline_mode = #tpu.pipeline_mode<synchronous>, transform_indices = @transform_5, window_bounds = array<i64: 2, 1, 96>}, {pipeline_mode = #tpu.pipeline_mode<synchronous>, transform_indices = @transform_6, window_bounds = array<i64: 2, 32, 32>}, {pipeline_mode = #tpu.pipeline_mode<synchronous>, transform_indices = @transform_7, window_bounds = array<i64: 2, 1, 32>}, {pipeline_mode = #tpu.pipeline_mode<synchronous>, transform_indices = @transform_8, window_bounds = array<i64: 2, 1, 32>}, {pipeline_mode = #tpu.pipeline_mode<synchronous>, transform_indices = @transform_9, window_bounds = array<i64: 2, 1, 32>}, {pipeline_mode = #tpu.pipeline_mode<synchronous>, transform_indices = @transform_10, window_bounds = array<i64: 2, 32, 64>}, {pipeline_mode = #tpu.pipeline_mode<synchronous>, transform_indices = @transform_11, window_bounds = array<i64: 2, 1, 64>}, {pipeline_mode = #tpu.pipeline_mode<synchronous>, transform_indices = @transform_12, window_bounds = array<i64: 2, 64, 32>}, {pipeline_mode = #tpu.pipeline_mode<synchronous>, transform_indices = @transform_13, window_bounds = array<i64: 2, 1, 32>}, {pipeline_mode = #tpu.pipeline_mode<synchronous>, transform_indices = @transform_14, window_bounds = array<i64: 2, 1, 32>}, {pipeline_mode = #tpu.pipeline_mode<synchronous>, transform_indices = @transform_15, window_bounds = array<i64: 2, 1, 32>}, {pipeline_mode = #tpu.pipeline_mode<synchronous>, transform_indices = @transform_16, window_bounds = array<i64: 32, 32>}, {pipeline_mode = #tpu.pipeline_mode<synchronous>, transform_indices = @transform_17, window_bounds = array<i64: 1, 32>}, {pipeline_mode = #tpu.pipeline_mode<synchronous>, transform_indices = @transform_18, window_bounds = array<i64: 32, 3>}, {pipeline_mode = #tpu.pipeline_mode<synchronous>, transform_indices = @transform_19, window_bounds = array<i64: 1, 3>}, {pipeline_mode = #tpu.pipeline_mode<synchronous>, transform_indices = @transform_20, window_bounds = array<i64: 2, 3>}]} {
    %c0 = arith.constant 0 : index
    %c0_0 = arith.constant 0 : index
    %0 = vector.load %arg2[%c0, %c0_0] : memref<16x16xf32, #tpu.memory_space<vmem>>, vector<16x16xf32>
    %c0_1 = arith.constant 0 : index
    %c0_2 = arith.constant 0 : index
    %1 = vector.load %arg1[%c0_1, %c0_2] : memref<16x32xf32, #tpu.memory_space<vmem>>, vector<16x32xf32>
    %c0_3 = arith.constant 0 : index
    %c0_4 = arith.constant 0 : index
    %2 = vector.load %arg3[%c0_3, %c0_4] : memref<1x32xf32, #tpu.memory_space<vmem>>, vector<1x32xf32>
    %c0_5 = arith.constant 0 : index
    %c0_6 = arith.constant 0 : index
    %3 = vector.load %arg4[%c0_5, %c0_6] : memref<1x32xf32, #tpu.memory_space<vmem>>, vector<1x32xf32>
    %cst = arith.constant dense<0.000000e+00> : vector<16xf32>
    %4 = vector.multi_reduction <add>, %1, %cst [1] : vector<16x32xf32> to vector<16xf32>
    %5 = vector.shape_cast %4 : vector<16xf32> to vector<16x1xf32>
    %cst_7 = arith.constant 3.200000e+01 : f32
    %6 = vector.broadcast %cst_7 : f32 to vector<16x1xf32>
    %7 = arith.divf %5, %6 : vector<16x1xf32>
    %8 = vector.broadcast %7 : vector<16x1xf32> to vector<16x32xf32>
    %9 = arith.subf %1, %8 : vector<16x32xf32>
    %10 = vector.broadcast %7 : vector<16x1xf32> to vector<16x32xf32>
    %11 = arith.subf %1, %10 : vector<16x32xf32>
    %12 = arith.mulf %9, %11 : vector<16x32xf32>
    %cst_8 = arith.constant dense<0.000000e+00> : vector<16xf32>
    %13 = vector.multi_reduction <add>, %12, %cst_8 [1] : vector<16x32xf32> to vector<16xf32>
    %14 = vector.shape_cast %13 : vector<16xf32> to vector<16x1xf32>
    %cst_9 = arith.constant 3.200000e+01 : f32
    %15 = vector.broadcast %cst_9 : f32 to vector<16x1xf32>
    %16 = arith.divf %14, %15 : vector<16x1xf32>
    %17 = vector.broadcast %7 : vector<16x1xf32> to vector<16x32xf32>
    %18 = arith.subf %1, %17 : vector<16x32xf32>
    %cst_10 = arith.constant 9.99999996E-13 : f32
    %19 = vector.broadcast %cst_10 : f32 to vector<16x1xf32>
    %20 = arith.addf %16, %19 : vector<16x1xf32>
    %21 = math.rsqrt %20 : vector<16x1xf32>
    %22 = vector.broadcast %21 : vector<16x1xf32> to vector<16x32xf32>
    %23 = arith.mulf %18, %22 : vector<16x32xf32>
    %24 = vector.broadcast %2 : vector<1x32xf32> to vector<16x32xf32>
    %25 = arith.mulf %23, %24 : vector<16x32xf32>
    %26 = vector.broadcast %3 : vector<1x32xf32> to vector<16x32xf32>
    %27 = arith.addf %25, %26 : vector<16x32xf32>
    %c0_11 = arith.constant 0 : index
    %c0_12 = arith.constant 0 : index
    %c0_13 = arith.constant 0 : index
    %28 = vector.load %arg5[%c0_11, %c0_12, %c0_13] : memref<2x32x96xf32, #tpu.memory_space<vmem>>, vector<1x32x96xf32>
    %29 = vector.shape_cast %28 : vector<1x32x96xf32> to vector<32x96xf32>
    %cst_14 = arith.constant dense<0.000000e+00> : vector<16x96xf32>
    %30 = tpu.matmul %27, %29, %cst_14 {dimension_numbers = #tpu.dot_dimension_numbers<[1], [0], [0], [1], [0, 0, 1, 1], [], []>} : vector<16x32xf32>, vector<32x96xf32>, vector<16x96xf32> -> vector<16x96xf32>
    %c0_15 = arith.constant 0 : index
    %c0_16 = arith.constant 0 : index
    %c0_17 = arith.constant 0 : index
    %31 = vector.load %arg6[%c0_15, %c0_16, %c0_17] : memref<2x1x96xf32, #tpu.memory_space<vmem>>, vector<1x1x96xf32>
    %32 = vector.shape_cast %31 : vector<1x1x96xf32> to vector<1x96xf32>
    %33 = vector.broadcast %32 : vector<1x96xf32> to vector<16x96xf32>
    %34 = arith.addf %30, %33 : vector<16x96xf32>
    %35 = vector.extract_strided_slice %34 {offsets = [0, 0], sizes = [16, 32], strides = [1, 1]} : vector<16x96xf32> to vector<16x32xf32>
    %cst_18 = arith.constant 0.353553385 : f32
    %36 = vector.broadcast %cst_18 : f32 to vector<16x32xf32>
    %37 = arith.mulf %35, %36 : vector<16x32xf32>
    %38 = vector.extract_strided_slice %34 {offsets = [0, 32], sizes = [16, 32], strides = [1, 1]} : vector<16x96xf32> to vector<16x32xf32>
    %39 = vector.extract_strided_slice %34 {offsets = [0, 64], sizes = [16, 32], strides = [1, 1]} : vector<16x96xf32> to vector<16x32xf32>
    %40 = vector.extract_strided_slice %37 {offsets = [0, 0], sizes = [16, 8], strides = [1, 1]} : vector<16x32xf32> to vector<16x8xf32>
    %41 = vector.extract_strided_slice %38 {offsets = [0, 0], sizes = [16, 8], strides = [1, 1]} : vector<16x32xf32> to vector<16x8xf32>
    %42 = tpu.transpose %41, [1, 0] : vector<16x8xf32> -> vector<8x16xf32>
    %cst_19 = arith.constant dense<0.000000e+00> : vector<16x16xf32>
    %43 = tpu.matmul %40, %42, %cst_19 {dimension_numbers = #tpu.dot_dimension_numbers<[1], [0], [0], [1], [0, 0, 1, 1], [], []>} : vector<16x8xf32>, vector<8x16xf32>, vector<16x16xf32> -> vector<16x16xf32>
    %44 = arith.addf %43, %0 : vector<16x16xf32>
    %cst_20 = arith.constant dense<0xFF800000> : vector<16xf32>
    %45 = vector.multi_reduction <maximumf>, %44, %cst_20 [1] : vector<16x16xf32> to vector<16xf32>
    %46 = vector.shape_cast %45 : vector<16xf32> to vector<16x1xf32>
    %47 = vector.broadcast %46 : vector<16x1xf32> to vector<16x16xf32>
    %48 = arith.subf %44, %47 : vector<16x16xf32>
    %49 = math.exp %48 : vector<16x16xf32>
    %cst_21 = arith.constant dense<0.000000e+00> : vector<16xf32>
    %50 = vector.multi_reduction <add>, %49, %cst_21 [1] : vector<16x16xf32> to vector<16xf32>
    %51 = vector.shape_cast %50 : vector<16xf32> to vector<16x1xf32>
    %52 = tpu.reciprocal %51 {approx = true} : vector<16x1xf32> -> vector<16x1xf32>
    %53 = vector.broadcast %52 : vector<16x1xf32> to vector<16x16xf32>
    %54 = arith.mulf %49, %53 : vector<16x16xf32>
    %55 = vector.extract_strided_slice %39 {offsets = [0, 0], sizes = [16, 8], strides = [1, 1]} : vector<16x32xf32> to vector<16x8xf32>
    %cst_22 = arith.constant dense<0.000000e+00> : vector<16x8xf32>
    %56 = tpu.matmul %54, %55, %cst_22 {dimension_numbers = #tpu.dot_dimension_numbers<[1], [0], [0], [1], [0, 0, 1, 1], [], []>} : vector<16x16xf32>, vector<16x8xf32>, vector<16x8xf32> -> vector<16x8xf32>
    %57 = vector.extract_strided_slice %37 {offsets = [0, 8], sizes = [16, 8], strides = [1, 1]} : vector<16x32xf32> to vector<16x8xf32>
    %58 = vector.extract_strided_slice %38 {offsets = [0, 8], sizes = [16, 8], strides = [1, 1]} : vector<16x32xf32> to vector<16x8xf32>
    %59 = tpu.transpose %58, [1, 0] : vector<16x8xf32> -> vector<8x16xf32>
    %cst_23 = arith.constant dense<0.000000e+00> : vector<16x16xf32>
    %60 = tpu.matmul %57, %59, %cst_23 {dimension_numbers = #tpu.dot_dimension_numbers<[1], [0], [0], [1], [0, 0, 1, 1], [], []>} : vector<16x8xf32>, vector<8x16xf32>, vector<16x16xf32> -> vector<16x16xf32>
    %61 = arith.addf %60, %0 : vector<16x16xf32>
    %cst_24 = arith.constant dense<0xFF800000> : vector<16xf32>
    %62 = vector.multi_reduction <maximumf>, %61, %cst_24 [1] : vector<16x16xf32> to vector<16xf32>
    %63 = vector.shape_cast %62 : vector<16xf32> to vector<16x1xf32>
    %64 = vector.broadcast %63 : vector<16x1xf32> to vector<16x16xf32>
    %65 = arith.subf %61, %64 : vector<16x16xf32>
    %66 = math.exp %65 : vector<16x16xf32>
    %cst_25 = arith.constant dense<0.000000e+00> : vector<16xf32>
    %67 = vector.multi_reduction <add>, %66, %cst_25 [1] : vector<16x16xf32> to vector<16xf32>
    %68 = vector.shape_cast %67 : vector<16xf32> to vector<16x1xf32>
    %69 = tpu.reciprocal %68 {approx = true} : vector<16x1xf32> -> vector<16x1xf32>
    %70 = vector.broadcast %69 : vector<16x1xf32> to vector<16x16xf32>
    %71 = arith.mulf %66, %70 : vector<16x16xf32>
    %72 = vector.extract_strided_slice %39 {offsets = [0, 8], sizes = [16, 8], strides = [1, 1]} : vector<16x32xf32> to vector<16x8xf32>
    %cst_26 = arith.constant dense<0.000000e+00> : vector<16x8xf32>
    %73 = tpu.matmul %71, %72, %cst_26 {dimension_numbers = #tpu.dot_dimension_numbers<[1], [0], [0], [1], [0, 0, 1, 1], [], []>} : vector<16x16xf32>, vector<16x8xf32>, vector<16x8xf32> -> vector<16x8xf32>
    %74 = vector.extract_strided_slice %37 {offsets = [0, 16], sizes = [16, 8], strides = [1, 1]} : vector<16x32xf32> to vector<16x8xf32>
    %75 = vector.extract_strided_slice %38 {offsets = [0, 16], sizes = [16, 8], strides = [1, 1]} : vector<16x32xf32> to vector<16x8xf32>
    %76 = tpu.transpose %75, [1, 0] : vector<16x8xf32> -> vector<8x16xf32>
    %cst_27 = arith.constant dense<0.000000e+00> : vector<16x16xf32>
    %77 = tpu.matmul %74, %76, %cst_27 {dimension_numbers = #tpu.dot_dimension_numbers<[1], [0], [0], [1], [0, 0, 1, 1], [], []>} : vector<16x8xf32>, vector<8x16xf32>, vector<16x16xf32> -> vector<16x16xf32>
    %78 = arith.addf %77, %0 : vector<16x16xf32>
    %cst_28 = arith.constant dense<0xFF800000> : vector<16xf32>
    %79 = vector.multi_reduction <maximumf>, %78, %cst_28 [1] : vector<16x16xf32> to vector<16xf32>
    %80 = vector.shape_cast %79 : vector<16xf32> to vector<16x1xf32>
    %81 = vector.broadcast %80 : vector<16x1xf32> to vector<16x16xf32>
    %82 = arith.subf %78, %81 : vector<16x16xf32>
    %83 = math.exp %82 : vector<16x16xf32>
    %cst_29 = arith.constant dense<0.000000e+00> : vector<16xf32>
    %84 = vector.multi_reduction <add>, %83, %cst_29 [1] : vector<16x16xf32> to vector<16xf32>
    %85 = vector.shape_cast %84 : vector<16xf32> to vector<16x1xf32>
    %86 = tpu.reciprocal %85 {approx = true} : vector<16x1xf32> -> vector<16x1xf32>
    %87 = vector.broadcast %86 : vector<16x1xf32> to vector<16x16xf32>
    %88 = arith.mulf %83, %87 : vector<16x16xf32>
    %89 = vector.extract_strided_slice %39 {offsets = [0, 16], sizes = [16, 8], strides = [1, 1]} : vector<16x32xf32> to vector<16x8xf32>
    %cst_30 = arith.constant dense<0.000000e+00> : vector<16x8xf32>
    %90 = tpu.matmul %88, %89, %cst_30 {dimension_numbers = #tpu.dot_dimension_numbers<[1], [0], [0], [1], [0, 0, 1, 1], [], []>} : vector<16x16xf32>, vector<16x8xf32>, vector<16x8xf32> -> vector<16x8xf32>
    %91 = vector.extract_strided_slice %37 {offsets = [0, 24], sizes = [16, 8], strides = [1, 1]} : vector<16x32xf32> to vector<16x8xf32>
    %92 = vector.extract_strided_slice %38 {offsets = [0, 24], sizes = [16, 8], strides = [1, 1]} : vector<16x32xf32> to vector<16x8xf32>
    %93 = tpu.transpose %92, [1, 0] : vector<16x8xf32> -> vector<8x16xf32>
    %cst_31 = arith.constant dense<0.000000e+00> : vector<16x16xf32>
    %94 = tpu.matmul %91, %93, %cst_31 {dimension_numbers = #tpu.dot_dimension_numbers<[1], [0], [0], [1], [0, 0, 1, 1], [], []>} : vector<16x8xf32>, vector<8x16xf32>, vector<16x16xf32> -> vector<16x16xf32>
    %95 = arith.addf %94, %0 : vector<16x16xf32>
    %cst_32 = arith.constant dense<0xFF800000> : vector<16xf32>
    %96 = vector.multi_reduction <maximumf>, %95, %cst_32 [1] : vector<16x16xf32> to vector<16xf32>
    %97 = vector.shape_cast %96 : vector<16xf32> to vector<16x1xf32>
    %98 = vector.broadcast %97 : vector<16x1xf32> to vector<16x16xf32>
    %99 = arith.subf %95, %98 : vector<16x16xf32>
    %100 = math.exp %99 : vector<16x16xf32>
    %cst_33 = arith.constant dense<0.000000e+00> : vector<16xf32>
    %101 = vector.multi_reduction <add>, %100, %cst_33 [1] : vector<16x16xf32> to vector<16xf32>
    %102 = vector.shape_cast %101 : vector<16xf32> to vector<16x1xf32>
    %103 = tpu.reciprocal %102 {approx = true} : vector<16x1xf32> -> vector<16x1xf32>
    %104 = vector.broadcast %103 : vector<16x1xf32> to vector<16x16xf32>
    %105 = arith.mulf %100, %104 : vector<16x16xf32>
    %106 = vector.extract_strided_slice %39 {offsets = [0, 24], sizes = [16, 8], strides = [1, 1]} : vector<16x32xf32> to vector<16x8xf32>
    %cst_34 = arith.constant dense<0.000000e+00> : vector<16x8xf32>
    %107 = tpu.matmul %105, %106, %cst_34 {dimension_numbers = #tpu.dot_dimension_numbers<[1], [0], [0], [1], [0, 0, 1, 1], [], []>} : vector<16x16xf32>, vector<16x8xf32>, vector<16x8xf32> -> vector<16x8xf32>
    %108 = tpu.concatenate %56, %73, %90, %107 in 1 : vector<16x8xf32>, vector<16x8xf32>, vector<16x8xf32>, vector<16x8xf32> -> vector<16x32xf32>
    %c0_35 = arith.constant 0 : index
    %c0_36 = arith.constant 0 : index
    %c0_37 = arith.constant 0 : index
    %109 = vector.load %arg7[%c0_35, %c0_36, %c0_37] : memref<2x32x32xf32, #tpu.memory_space<vmem>>, vector<1x32x32xf32>
    %110 = vector.shape_cast %109 : vector<1x32x32xf32> to vector<32x32xf32>
    %cst_38 = arith.constant dense<0.000000e+00> : vector<16x32xf32>
    %111 = tpu.matmul %108, %110, %cst_38 {dimension_numbers = #tpu.dot_dimension_numbers<[1], [0], [0], [1], [0, 0, 1, 1], [], []>} : vector<16x32xf32>, vector<32x32xf32>, vector<16x32xf32> -> vector<16x32xf32>
    %c0_39 = arith.constant 0 : index
    %c0_40 = arith.constant 0 : index
    %c0_41 = arith.constant 0 : index
    %112 = vector.load %arg8[%c0_39, %c0_40, %c0_41] : memref<2x1x32xf32, #tpu.memory_space<vmem>>, vector<1x1x32xf32>
    %113 = vector.shape_cast %112 : vector<1x1x32xf32> to vector<1x32xf32>
    %114 = vector.broadcast %113 : vector<1x32xf32> to vector<16x32xf32>
    %115 = arith.addf %111, %114 : vector<16x32xf32>
    %116 = arith.addf %27, %115 : vector<16x32xf32>
    %c0_42 = arith.constant 0 : index
    %c0_43 = arith.constant 0 : index
    %c0_44 = arith.constant 0 : index
    %117 = vector.load %arg9[%c0_42, %c0_43, %c0_44] : memref<2x1x32xf32, #tpu.memory_space<vmem>>, vector<1x1x32xf32>
    %118 = vector.shape_cast %117 : vector<1x1x32xf32> to vector<1x32xf32>
    %c0_45 = arith.constant 0 : index
    %c0_46 = arith.constant 0 : index
    %c0_47 = arith.constant 0 : index
    %119 = vector.load %arg10[%c0_45, %c0_46, %c0_47] : memref<2x1x32xf32, #tpu.memory_space<vmem>>, vector<1x1x32xf32>
    %120 = vector.shape_cast %119 : vector<1x1x32xf32> to vector<1x32xf32>
    %cst_48 = arith.constant dense<0.000000e+00> : vector<16xf32>
    %121 = vector.multi_reduction <add>, %116, %cst_48 [1] : vector<16x32xf32> to vector<16xf32>
    %122 = vector.shape_cast %121 : vector<16xf32> to vector<16x1xf32>
    %cst_49 = arith.constant 3.200000e+01 : f32
    %123 = vector.broadcast %cst_49 : f32 to vector<16x1xf32>
    %124 = arith.divf %122, %123 : vector<16x1xf32>
    %125 = vector.broadcast %124 : vector<16x1xf32> to vector<16x32xf32>
    %126 = arith.subf %116, %125 : vector<16x32xf32>
    %127 = vector.broadcast %124 : vector<16x1xf32> to vector<16x32xf32>
    %128 = arith.subf %116, %127 : vector<16x32xf32>
    %129 = arith.mulf %126, %128 : vector<16x32xf32>
    %cst_50 = arith.constant dense<0.000000e+00> : vector<16xf32>
    %130 = vector.multi_reduction <add>, %129, %cst_50 [1] : vector<16x32xf32> to vector<16xf32>
    %131 = vector.shape_cast %130 : vector<16xf32> to vector<16x1xf32>
    %cst_51 = arith.constant 3.200000e+01 : f32
    %132 = vector.broadcast %cst_51 : f32 to vector<16x1xf32>
    %133 = arith.divf %131, %132 : vector<16x1xf32>
    %134 = vector.broadcast %124 : vector<16x1xf32> to vector<16x32xf32>
    %135 = arith.subf %116, %134 : vector<16x32xf32>
    %cst_52 = arith.constant 9.99999996E-13 : f32
    %136 = vector.broadcast %cst_52 : f32 to vector<16x1xf32>
    %137 = arith.addf %133, %136 : vector<16x1xf32>
    %138 = math.rsqrt %137 : vector<16x1xf32>
    %139 = vector.broadcast %138 : vector<16x1xf32> to vector<16x32xf32>
    %140 = arith.mulf %135, %139 : vector<16x32xf32>
    %141 = vector.broadcast %118 : vector<1x32xf32> to vector<16x32xf32>
    %142 = arith.mulf %140, %141 : vector<16x32xf32>
    %143 = vector.broadcast %120 : vector<1x32xf32> to vector<16x32xf32>
    %144 = arith.addf %142, %143 : vector<16x32xf32>
    %c0_53 = arith.constant 0 : index
    %c0_54 = arith.constant 0 : index
    %c0_55 = arith.constant 0 : index
    %145 = vector.load %arg11[%c0_53, %c0_54, %c0_55] : memref<2x32x64xf32, #tpu.memory_space<vmem>>, vector<1x32x64xf32>
    %146 = vector.shape_cast %145 : vector<1x32x64xf32> to vector<32x64xf32>
    %cst_56 = arith.constant dense<0.000000e+00> : vector<16x64xf32>
    %147 = tpu.matmul %144, %146, %cst_56 {dimension_numbers = #tpu.dot_dimension_numbers<[1], [0], [0], [1], [0, 0, 1, 1], [], []>} : vector<16x32xf32>, vector<32x64xf32>, vector<16x64xf32> -> vector<16x64xf32>
    %c0_57 = arith.constant 0 : index
    %c0_58 = arith.constant 0 : index
    %c0_59 = arith.constant 0 : index
    %148 = vector.load %arg12[%c0_57, %c0_58, %c0_59] : memref<2x1x64xf32, #tpu.memory_space<vmem>>, vector<1x1x64xf32>
    %149 = vector.shape_cast %148 : vector<1x1x64xf32> to vector<1x64xf32>
    %150 = vector.broadcast %149 : vector<1x64xf32> to vector<16x64xf32>
    %151 = arith.addf %147, %150 : vector<16x64xf32>
    %cst_60 = arith.constant 5.000000e-01 : f32
    %152 = vector.broadcast %cst_60 : f32 to vector<16x64xf32>
    %153 = arith.mulf %152, %151 : vector<16x64xf32>
    %cst_61 = arith.constant 4.471500e-02 : f32
    %154 = vector.broadcast %cst_61 : f32 to vector<16x64xf32>
    %155 = arith.mulf %154, %151 : vector<16x64xf32>
    %156 = arith.mulf %155, %151 : vector<16x64xf32>
    %157 = arith.mulf %156, %151 : vector<16x64xf32>
    %158 = arith.addf %151, %157 : vector<16x64xf32>
    %cst_62 = arith.constant 0.797884583 : f32
    %159 = vector.broadcast %cst_62 : f32 to vector<16x64xf32>
    %160 = arith.mulf %159, %158 : vector<16x64xf32>
    %161 = math.tanh %160 : vector<16x64xf32>
    %cst_63 = arith.constant 1.000000e+00 : f32
    %162 = vector.broadcast %cst_63 : f32 to vector<16x64xf32>
    %163 = arith.addf %162, %161 : vector<16x64xf32>
    %164 = arith.mulf %153, %163 : vector<16x64xf32>
    %c0_64 = arith.constant 0 : index
    %c0_65 = arith.constant 0 : index
    %c0_66 = arith.constant 0 : index
    %165 = vector.load %arg13[%c0_64, %c0_65, %c0_66] : memref<2x64x32xf32, #tpu.memory_space<vmem>>, vector<1x64x32xf32>
    %166 = vector.shape_cast %165 : vector<1x64x32xf32> to vector<64x32xf32>
    %cst_67 = arith.constant dense<0.000000e+00> : vector<16x32xf32>
    %167 = tpu.matmul %164, %166, %cst_67 {dimension_numbers = #tpu.dot_dimension_numbers<[1], [0], [0], [1], [0, 0, 1, 1], [], []>} : vector<16x64xf32>, vector<64x32xf32>, vector<16x32xf32> -> vector<16x32xf32>
    %c0_68 = arith.constant 0 : index
    %c0_69 = arith.constant 0 : index
    %c0_70 = arith.constant 0 : index
    %168 = vector.load %arg14[%c0_68, %c0_69, %c0_70] : memref<2x1x32xf32, #tpu.memory_space<vmem>>, vector<1x1x32xf32>
    %169 = vector.shape_cast %168 : vector<1x1x32xf32> to vector<1x32xf32>
    %170 = vector.broadcast %169 : vector<1x32xf32> to vector<16x32xf32>
    %171 = arith.addf %167, %170 : vector<16x32xf32>
    %172 = arith.addf %144, %171 : vector<16x32xf32>
    %c0_71 = arith.constant 0 : index
    %c0_72 = arith.constant 0 : index
    %c0_73 = arith.constant 0 : index
    %173 = vector.load %arg15[%c0_71, %c0_72, %c0_73] : memref<2x1x32xf32, #tpu.memory_space<vmem>>, vector<1x1x32xf32>
    %174 = vector.shape_cast %173 : vector<1x1x32xf32> to vector<1x32xf32>
    %c0_74 = arith.constant 0 : index
    %c0_75 = arith.constant 0 : index
    %c0_76 = arith.constant 0 : index
    %175 = vector.load %arg16[%c0_74, %c0_75, %c0_76] : memref<2x1x32xf32, #tpu.memory_space<vmem>>, vector<1x1x32xf32>
    %176 = vector.shape_cast %175 : vector<1x1x32xf32> to vector<1x32xf32>
    %cst_77 = arith.constant dense<0.000000e+00> : vector<16xf32>
    %177 = vector.multi_reduction <add>, %172, %cst_77 [1] : vector<16x32xf32> to vector<16xf32>
    %178 = vector.shape_cast %177 : vector<16xf32> to vector<16x1xf32>
    %cst_78 = arith.constant 3.200000e+01 : f32
    %179 = vector.broadcast %cst_78 : f32 to vector<16x1xf32>
    %180 = arith.divf %178, %179 : vector<16x1xf32>
    %181 = vector.broadcast %180 : vector<16x1xf32> to vector<16x32xf32>
    %182 = arith.subf %172, %181 : vector<16x32xf32>
    %183 = vector.broadcast %180 : vector<16x1xf32> to vector<16x32xf32>
    %184 = arith.subf %172, %183 : vector<16x32xf32>
    %185 = arith.mulf %182, %184 : vector<16x32xf32>
    %cst_79 = arith.constant dense<0.000000e+00> : vector<16xf32>
    %186 = vector.multi_reduction <add>, %185, %cst_79 [1] : vector<16x32xf32> to vector<16xf32>
    %187 = vector.shape_cast %186 : vector<16xf32> to vector<16x1xf32>
    %cst_80 = arith.constant 3.200000e+01 : f32
    %188 = vector.broadcast %cst_80 : f32 to vector<16x1xf32>
    %189 = arith.divf %187, %188 : vector<16x1xf32>
    %190 = vector.broadcast %180 : vector<16x1xf32> to vector<16x32xf32>
    %191 = arith.subf %172, %190 : vector<16x32xf32>
    %cst_81 = arith.constant 9.99999996E-13 : f32
    %192 = vector.broadcast %cst_81 : f32 to vector<16x1xf32>
    %193 = arith.addf %189, %192 : vector<16x1xf32>
    %194 = math.rsqrt %193 : vector<16x1xf32>
    %195 = vector.broadcast %194 : vector<16x1xf32> to vector<16x32xf32>
    %196 = arith.mulf %191, %195 : vector<16x32xf32>
    %197 = vector.broadcast %174 : vector<1x32xf32> to vector<16x32xf32>
    %198 = arith.mulf %196, %197 : vector<16x32xf32>
    %199 = vector.broadcast %176 : vector<1x32xf32> to vector<16x32xf32>
    %200 = arith.addf %198, %199 : vector<16x32xf32>
    %c1 = arith.constant 1 : index
    %c0_82 = arith.constant 0 : index
    %c0_83 = arith.constant 0 : index
    %201 = vector.load %arg5[%c1, %c0_82, %c0_83] : memref<2x32x96xf32, #tpu.memory_space<vmem>>, vector<1x32x96xf32>
    %202 = vector.shape_cast %201 : vector<1x32x96xf32> to vector<32x96xf32>
    %cst_84 = arith.constant dense<0.000000e+00> : vector<16x96xf32>
    %203 = tpu.matmul %200, %202, %cst_84 {dimension_numbers = #tpu.dot_dimension_numbers<[1], [0], [0], [1], [0, 0, 1, 1], [], []>} : vector<16x32xf32>, vector<32x96xf32>, vector<16x96xf32> -> vector<16x96xf32>
    %c1_85 = arith.constant 1 : index
    %c0_86 = arith.constant 0 : index
    %c0_87 = arith.constant 0 : index
    %204 = vector.load %arg6[%c1_85, %c0_86, %c0_87] : memref<2x1x96xf32, #tpu.memory_space<vmem>>, vector<1x1x96xf32>
    %205 = vector.shape_cast %204 : vector<1x1x96xf32> to vector<1x96xf32>
    %206 = vector.broadcast %205 : vector<1x96xf32> to vector<16x96xf32>
    %207 = arith.addf %203, %206 : vector<16x96xf32>
    %208 = vector.extract_strided_slice %207 {offsets = [0, 0], sizes = [16, 32], strides = [1, 1]} : vector<16x96xf32> to vector<16x32xf32>
    %cst_88 = arith.constant 0.353553385 : f32
    %209 = vector.broadcast %cst_88 : f32 to vector<16x32xf32>
    %210 = arith.mulf %208, %209 : vector<16x32xf32>
    %211 = vector.extract_strided_slice %207 {offsets = [0, 32], sizes = [16, 32], strides = [1, 1]} : vector<16x96xf32> to vector<16x32xf32>
    %212 = vector.extract_strided_slice %207 {offsets = [0, 64], sizes = [16, 32], strides = [1, 1]} : vector<16x96xf32> to vector<16x32xf32>
    %213 = vector.extract_strided_slice %210 {offsets = [0, 0], sizes = [16, 8], strides = [1, 1]} : vector<16x32xf32> to vector<16x8xf32>
    %214 = vector.extract_strided_slice %211 {offsets = [0, 0], sizes = [16, 8], strides = [1, 1]} : vector<16x32xf32> to vector<16x8xf32>
    %215 = tpu.transpose %214, [1, 0] : vector<16x8xf32> -> vector<8x16xf32>
    %cst_89 = arith.constant dense<0.000000e+00> : vector<16x16xf32>
    %216 = tpu.matmul %213, %215, %cst_89 {dimension_numbers = #tpu.dot_dimension_numbers<[1], [0], [0], [1], [0, 0, 1, 1], [], []>} : vector<16x8xf32>, vector<8x16xf32>, vector<16x16xf32> -> vector<16x16xf32>
    %217 = arith.addf %216, %0 : vector<16x16xf32>
    %cst_90 = arith.constant dense<0xFF800000> : vector<16xf32>
    %218 = vector.multi_reduction <maximumf>, %217, %cst_90 [1] : vector<16x16xf32> to vector<16xf32>
    %219 = vector.shape_cast %218 : vector<16xf32> to vector<16x1xf32>
    %220 = vector.broadcast %219 : vector<16x1xf32> to vector<16x16xf32>
    %221 = arith.subf %217, %220 : vector<16x16xf32>
    %222 = math.exp %221 : vector<16x16xf32>
    %cst_91 = arith.constant dense<0.000000e+00> : vector<16xf32>
    %223 = vector.multi_reduction <add>, %222, %cst_91 [1] : vector<16x16xf32> to vector<16xf32>
    %224 = vector.shape_cast %223 : vector<16xf32> to vector<16x1xf32>
    %225 = tpu.reciprocal %224 {approx = true} : vector<16x1xf32> -> vector<16x1xf32>
    %226 = vector.broadcast %225 : vector<16x1xf32> to vector<16x16xf32>
    %227 = arith.mulf %222, %226 : vector<16x16xf32>
    %228 = vector.extract_strided_slice %212 {offsets = [0, 0], sizes = [16, 8], strides = [1, 1]} : vector<16x32xf32> to vector<16x8xf32>
    %cst_92 = arith.constant dense<0.000000e+00> : vector<16x8xf32>
    %229 = tpu.matmul %227, %228, %cst_92 {dimension_numbers = #tpu.dot_dimension_numbers<[1], [0], [0], [1], [0, 0, 1, 1], [], []>} : vector<16x16xf32>, vector<16x8xf32>, vector<16x8xf32> -> vector<16x8xf32>
    %230 = vector.extract_strided_slice %210 {offsets = [0, 8], sizes = [16, 8], strides = [1, 1]} : vector<16x32xf32> to vector<16x8xf32>
    %231 = vector.extract_strided_slice %211 {offsets = [0, 8], sizes = [16, 8], strides = [1, 1]} : vector<16x32xf32> to vector<16x8xf32>
    %232 = tpu.transpose %231, [1, 0] : vector<16x8xf32> -> vector<8x16xf32>
    %cst_93 = arith.constant dense<0.000000e+00> : vector<16x16xf32>
    %233 = tpu.matmul %230, %232, %cst_93 {dimension_numbers = #tpu.dot_dimension_numbers<[1], [0], [0], [1], [0, 0, 1, 1], [], []>} : vector<16x8xf32>, vector<8x16xf32>, vector<16x16xf32> -> vector<16x16xf32>
    %234 = arith.addf %233, %0 : vector<16x16xf32>
    %cst_94 = arith.constant dense<0xFF800000> : vector<16xf32>
    %235 = vector.multi_reduction <maximumf>, %234, %cst_94 [1] : vector<16x16xf32> to vector<16xf32>
    %236 = vector.shape_cast %235 : vector<16xf32> to vector<16x1xf32>
    %237 = vector.broadcast %236 : vector<16x1xf32> to vector<16x16xf32>
    %238 = arith.subf %234, %237 : vector<16x16xf32>
    %239 = math.exp %238 : vector<16x16xf32>
    %cst_95 = arith.constant dense<0.000000e+00> : vector<16xf32>
    %240 = vector.multi_reduction <add>, %239, %cst_95 [1] : vector<16x16xf32> to vector<16xf32>
    %241 = vector.shape_cast %240 : vector<16xf32> to vector<16x1xf32>
    %242 = tpu.reciprocal %241 {approx = true} : vector<16x1xf32> -> vector<16x1xf32>
    %243 = vector.broadcast %242 : vector<16x1xf32> to vector<16x16xf32>
    %244 = arith.mulf %239, %243 : vector<16x16xf32>
    %245 = vector.extract_strided_slice %212 {offsets = [0, 8], sizes = [16, 8], strides = [1, 1]} : vector<16x32xf32> to vector<16x8xf32>
    %cst_96 = arith.constant dense<0.000000e+00> : vector<16x8xf32>
    %246 = tpu.matmul %244, %245, %cst_96 {dimension_numbers = #tpu.dot_dimension_numbers<[1], [0], [0], [1], [0, 0, 1, 1], [], []>} : vector<16x16xf32>, vector<16x8xf32>, vector<16x8xf32> -> vector<16x8xf32>
    %247 = vector.extract_strided_slice %210 {offsets = [0, 16], sizes = [16, 8], strides = [1, 1]} : vector<16x32xf32> to vector<16x8xf32>
    %248 = vector.extract_strided_slice %211 {offsets = [0, 16], sizes = [16, 8], strides = [1, 1]} : vector<16x32xf32> to vector<16x8xf32>
    %249 = tpu.transpose %248, [1, 0] : vector<16x8xf32> -> vector<8x16xf32>
    %cst_97 = arith.constant dense<0.000000e+00> : vector<16x16xf32>
    %250 = tpu.matmul %247, %249, %cst_97 {dimension_numbers = #tpu.dot_dimension_numbers<[1], [0], [0], [1], [0, 0, 1, 1], [], []>} : vector<16x8xf32>, vector<8x16xf32>, vector<16x16xf32> -> vector<16x16xf32>
    %251 = arith.addf %250, %0 : vector<16x16xf32>
    %cst_98 = arith.constant dense<0xFF800000> : vector<16xf32>
    %252 = vector.multi_reduction <maximumf>, %251, %cst_98 [1] : vector<16x16xf32> to vector<16xf32>
    %253 = vector.shape_cast %252 : vector<16xf32> to vector<16x1xf32>
    %254 = vector.broadcast %253 : vector<16x1xf32> to vector<16x16xf32>
    %255 = arith.subf %251, %254 : vector<16x16xf32>
    %256 = math.exp %255 : vector<16x16xf32>
    %cst_99 = arith.constant dense<0.000000e+00> : vector<16xf32>
    %257 = vector.multi_reduction <add>, %256, %cst_99 [1] : vector<16x16xf32> to vector<16xf32>
    %258 = vector.shape_cast %257 : vector<16xf32> to vector<16x1xf32>
    %259 = tpu.reciprocal %258 {approx = true} : vector<16x1xf32> -> vector<16x1xf32>
    %260 = vector.broadcast %259 : vector<16x1xf32> to vector<16x16xf32>
    %261 = arith.mulf %256, %260 : vector<16x16xf32>
    %262 = vector.extract_strided_slice %212 {offsets = [0, 16], sizes = [16, 8], strides = [1, 1]} : vector<16x32xf32> to vector<16x8xf32>
    %cst_100 = arith.constant dense<0.000000e+00> : vector<16x8xf32>
    %263 = tpu.matmul %261, %262, %cst_100 {dimension_numbers = #tpu.dot_dimension_numbers<[1], [0], [0], [1], [0, 0, 1, 1], [], []>} : vector<16x16xf32>, vector<16x8xf32>, vector<16x8xf32> -> vector<16x8xf32>
    %264 = vector.extract_strided_slice %210 {offsets = [0, 24], sizes = [16, 8], strides = [1, 1]} : vector<16x32xf32> to vector<16x8xf32>
    %265 = vector.extract_strided_slice %211 {offsets = [0, 24], sizes = [16, 8], strides = [1, 1]} : vector<16x32xf32> to vector<16x8xf32>
    %266 = tpu.transpose %265, [1, 0] : vector<16x8xf32> -> vector<8x16xf32>
    %cst_101 = arith.constant dense<0.000000e+00> : vector<16x16xf32>
    %267 = tpu.matmul %264, %266, %cst_101 {dimension_numbers = #tpu.dot_dimension_numbers<[1], [0], [0], [1], [0, 0, 1, 1], [], []>} : vector<16x8xf32>, vector<8x16xf32>, vector<16x16xf32> -> vector<16x16xf32>
    %268 = arith.addf %267, %0 : vector<16x16xf32>
    %cst_102 = arith.constant dense<0xFF800000> : vector<16xf32>
    %269 = vector.multi_reduction <maximumf>, %268, %cst_102 [1] : vector<16x16xf32> to vector<16xf32>
    %270 = vector.shape_cast %269 : vector<16xf32> to vector<16x1xf32>
    %271 = vector.broadcast %270 : vector<16x1xf32> to vector<16x16xf32>
    %272 = arith.subf %268, %271 : vector<16x16xf32>
    %273 = math.exp %272 : vector<16x16xf32>
    %cst_103 = arith.constant dense<0.000000e+00> : vector<16xf32>
    %274 = vector.multi_reduction <add>, %273, %cst_103 [1] : vector<16x16xf32> to vector<16xf32>
    %275 = vector.shape_cast %274 : vector<16xf32> to vector<16x1xf32>
    %276 = tpu.reciprocal %275 {approx = true} : vector<16x1xf32> -> vector<16x1xf32>
    %277 = vector.broadcast %276 : vector<16x1xf32> to vector<16x16xf32>
    %278 = arith.mulf %273, %277 : vector<16x16xf32>
    %279 = vector.extract_strided_slice %212 {offsets = [0, 24], sizes = [16, 8], strides = [1, 1]} : vector<16x32xf32> to vector<16x8xf32>
    %cst_104 = arith.constant dense<0.000000e+00> : vector<16x8xf32>
    %280 = tpu.matmul %278, %279, %cst_104 {dimension_numbers = #tpu.dot_dimension_numbers<[1], [0], [0], [1], [0, 0, 1, 1], [], []>} : vector<16x16xf32>, vector<16x8xf32>, vector<16x8xf32> -> vector<16x8xf32>
    %281 = tpu.concatenate %229, %246, %263, %280 in 1 : vector<16x8xf32>, vector<16x8xf32>, vector<16x8xf32>, vector<16x8xf32> -> vector<16x32xf32>
    %c1_105 = arith.constant 1 : index
    %c0_106 = arith.constant 0 : index
    %c0_107 = arith.constant 0 : index
    %282 = vector.load %arg7[%c1_105, %c0_106, %c0_107] : memref<2x32x32xf32, #tpu.memory_space<vmem>>, vector<1x32x32xf32>
    %283 = vector.shape_cast %282 : vector<1x32x32xf32> to vector<32x32xf32>
    %cst_108 = arith.constant dense<0.000000e+00> : vector<16x32xf32>
    %284 = tpu.matmul %281, %283, %cst_108 {dimension_numbers = #tpu.dot_dimension_numbers<[1], [0], [0], [1], [0, 0, 1, 1], [], []>} : vector<16x32xf32>, vector<32x32xf32>, vector<16x32xf32> -> vector<16x32xf32>
    %c1_109 = arith.constant 1 : index
    %c0_110 = arith.constant 0 : index
    %c0_111 = arith.constant 0 : index
    %285 = vector.load %arg8[%c1_109, %c0_110, %c0_111] : memref<2x1x32xf32, #tpu.memory_space<vmem>>, vector<1x1x32xf32>
    %286 = vector.shape_cast %285 : vector<1x1x32xf32> to vector<1x32xf32>
    %287 = vector.broadcast %286 : vector<1x32xf32> to vector<16x32xf32>
    %288 = arith.addf %284, %287 : vector<16x32xf32>
    %289 = arith.addf %200, %288 : vector<16x32xf32>
    %c1_112 = arith.constant 1 : index
    %c0_113 = arith.constant 0 : index
    %c0_114 = arith.constant 0 : index
    %290 = vector.load %arg9[%c1_112, %c0_113, %c0_114] : memref<2x1x32xf32, #tpu.memory_space<vmem>>, vector<1x1x32xf32>
    %291 = vector.shape_cast %290 : vector<1x1x32xf32> to vector<1x32xf32>
    %c1_115 = arith.constant 1 : index
    %c0_116 = arith.constant 0 : index
    %c0_117 = arith.constant 0 : index
    %292 = vector.load %arg10[%c1_115, %c0_116, %c0_117] : memref<2x1x32xf32, #tpu.memory_space<vmem>>, vector<1x1x32xf32>
    %293 = vector.shape_cast %292 : vector<1x1x32xf32> to vector<1x32xf32>
    %cst_118 = arith.constant dense<0.000000e+00> : vector<16xf32>
    %294 = vector.multi_reduction <add>, %289, %cst_118 [1] : vector<16x32xf32> to vector<16xf32>
    %295 = vector.shape_cast %294 : vector<16xf32> to vector<16x1xf32>
    %cst_119 = arith.constant 3.200000e+01 : f32
    %296 = vector.broadcast %cst_119 : f32 to vector<16x1xf32>
    %297 = arith.divf %295, %296 : vector<16x1xf32>
    %298 = vector.broadcast %297 : vector<16x1xf32> to vector<16x32xf32>
    %299 = arith.subf %289, %298 : vector<16x32xf32>
    %300 = vector.broadcast %297 : vector<16x1xf32> to vector<16x32xf32>
    %301 = arith.subf %289, %300 : vector<16x32xf32>
    %302 = arith.mulf %299, %301 : vector<16x32xf32>
    %cst_120 = arith.constant dense<0.000000e+00> : vector<16xf32>
    %303 = vector.multi_reduction <add>, %302, %cst_120 [1] : vector<16x32xf32> to vector<16xf32>
    %304 = vector.shape_cast %303 : vector<16xf32> to vector<16x1xf32>
    %cst_121 = arith.constant 3.200000e+01 : f32
    %305 = vector.broadcast %cst_121 : f32 to vector<16x1xf32>
    %306 = arith.divf %304, %305 : vector<16x1xf32>
    %307 = vector.broadcast %297 : vector<16x1xf32> to vector<16x32xf32>
    %308 = arith.subf %289, %307 : vector<16x32xf32>
    %cst_122 = arith.constant 9.99999996E-13 : f32
    %309 = vector.broadcast %cst_122 : f32 to vector<16x1xf32>
    %310 = arith.addf %306, %309 : vector<16x1xf32>
    %311 = math.rsqrt %310 : vector<16x1xf32>
    %312 = vector.broadcast %311 : vector<16x1xf32> to vector<16x32xf32>
    %313 = arith.mulf %308, %312 : vector<16x32xf32>
    %314 = vector.broadcast %291 : vector<1x32xf32> to vector<16x32xf32>
    %315 = arith.mulf %313, %314 : vector<16x32xf32>
    %316 = vector.broadcast %293 : vector<1x32xf32> to vector<16x32xf32>
    %317 = arith.addf %315, %316 : vector<16x32xf32>
    %c1_123 = arith.constant 1 : index
    %c0_124 = arith.constant 0 : index
    %c0_125 = arith.constant 0 : index
    %318 = vector.load %arg11[%c1_123, %c0_124, %c0_125] : memref<2x32x64xf32, #tpu.memory_space<vmem>>, vector<1x32x64xf32>
    %319 = vector.shape_cast %318 : vector<1x32x64xf32> to vector<32x64xf32>
    %cst_126 = arith.constant dense<0.000000e+00> : vector<16x64xf32>
    %320 = tpu.matmul %317, %319, %cst_126 {dimension_numbers = #tpu.dot_dimension_numbers<[1], [0], [0], [1], [0, 0, 1, 1], [], []>} : vector<16x32xf32>, vector<32x64xf32>, vector<16x64xf32> -> vector<16x64xf32>
    %c1_127 = arith.constant 1 : index
    %c0_128 = arith.constant 0 : index
    %c0_129 = arith.constant 0 : index
    %321 = vector.load %arg12[%c1_127, %c0_128, %c0_129] : memref<2x1x64xf32, #tpu.memory_space<vmem>>, vector<1x1x64xf32>
    %322 = vector.shape_cast %321 : vector<1x1x64xf32> to vector<1x64xf32>
    %323 = vector.broadcast %322 : vector<1x64xf32> to vector<16x64xf32>
    %324 = arith.addf %320, %323 : vector<16x64xf32>
    %cst_130 = arith.constant 5.000000e-01 : f32
    %325 = vector.broadcast %cst_130 : f32 to vector<16x64xf32>
    %326 = arith.mulf %325, %324 : vector<16x64xf32>
    %cst_131 = arith.constant 4.471500e-02 : f32
    %327 = vector.broadcast %cst_131 : f32 to vector<16x64xf32>
    %328 = arith.mulf %327, %324 : vector<16x64xf32>
    %329 = arith.mulf %328, %324 : vector<16x64xf32>
    %330 = arith.mulf %329, %324 : vector<16x64xf32>
    %331 = arith.addf %324, %330 : vector<16x64xf32>
    %cst_132 = arith.constant 0.797884583 : f32
    %332 = vector.broadcast %cst_132 : f32 to vector<16x64xf32>
    %333 = arith.mulf %332, %331 : vector<16x64xf32>
    %334 = math.tanh %333 : vector<16x64xf32>
    %cst_133 = arith.constant 1.000000e+00 : f32
    %335 = vector.broadcast %cst_133 : f32 to vector<16x64xf32>
    %336 = arith.addf %335, %334 : vector<16x64xf32>
    %337 = arith.mulf %326, %336 : vector<16x64xf32>
    %c1_134 = arith.constant 1 : index
    %c0_135 = arith.constant 0 : index
    %c0_136 = arith.constant 0 : index
    %338 = vector.load %arg13[%c1_134, %c0_135, %c0_136] : memref<2x64x32xf32, #tpu.memory_space<vmem>>, vector<1x64x32xf32>
    %339 = vector.shape_cast %338 : vector<1x64x32xf32> to vector<64x32xf32>
    %cst_137 = arith.constant dense<0.000000e+00> : vector<16x32xf32>
    %340 = tpu.matmul %337, %339, %cst_137 {dimension_numbers = #tpu.dot_dimension_numbers<[1], [0], [0], [1], [0, 0, 1, 1], [], []>} : vector<16x64xf32>, vector<64x32xf32>, vector<16x32xf32> -> vector<16x32xf32>
    %c1_138 = arith.constant 1 : index
    %c0_139 = arith.constant 0 : index
    %c0_140 = arith.constant 0 : index
    %341 = vector.load %arg14[%c1_138, %c0_139, %c0_140] : memref<2x1x32xf32, #tpu.memory_space<vmem>>, vector<1x1x32xf32>
    %342 = vector.shape_cast %341 : vector<1x1x32xf32> to vector<1x32xf32>
    %343 = vector.broadcast %342 : vector<1x32xf32> to vector<16x32xf32>
    %344 = arith.addf %340, %343 : vector<16x32xf32>
    %345 = arith.addf %317, %344 : vector<16x32xf32>
    %c1_141 = arith.constant 1 : index
    %c0_142 = arith.constant 0 : index
    %c0_143 = arith.constant 0 : index
    %346 = vector.load %arg15[%c1_141, %c0_142, %c0_143] : memref<2x1x32xf32, #tpu.memory_space<vmem>>, vector<1x1x32xf32>
    %347 = vector.shape_cast %346 : vector<1x1x32xf32> to vector<1x32xf32>
    %c1_144 = arith.constant 1 : index
    %c0_145 = arith.constant 0 : index
    %c0_146 = arith.constant 0 : index
    %348 = vector.load %arg16[%c1_144, %c0_145, %c0_146] : memref<2x1x32xf32, #tpu.memory_space<vmem>>, vector<1x1x32xf32>
    %349 = vector.shape_cast %348 : vector<1x1x32xf32> to vector<1x32xf32>
    %cst_147 = arith.constant dense<0.000000e+00> : vector<16xf32>
    %350 = vector.multi_reduction <add>, %345, %cst_147 [1] : vector<16x32xf32> to vector<16xf32>
    %351 = vector.shape_cast %350 : vector<16xf32> to vector<16x1xf32>
    %cst_148 = arith.constant 3.200000e+01 : f32
    %352 = vector.broadcast %cst_148 : f32 to vector<16x1xf32>
    %353 = arith.divf %351, %352 : vector<16x1xf32>
    %354 = vector.broadcast %353 : vector<16x1xf32> to vector<16x32xf32>
    %355 = arith.subf %345, %354 : vector<16x32xf32>
    %356 = vector.broadcast %353 : vector<16x1xf32> to vector<16x32xf32>
    %357 = arith.subf %345, %356 : vector<16x32xf32>
    %358 = arith.mulf %355, %357 : vector<16x32xf32>
    %cst_149 = arith.constant dense<0.000000e+00> : vector<16xf32>
    %359 = vector.multi_reduction <add>, %358, %cst_149 [1] : vector<16x32xf32> to vector<16xf32>
    %360 = vector.shape_cast %359 : vector<16xf32> to vector<16x1xf32>
    %cst_150 = arith.constant 3.200000e+01 : f32
    %361 = vector.broadcast %cst_150 : f32 to vector<16x1xf32>
    %362 = arith.divf %360, %361 : vector<16x1xf32>
    %363 = vector.broadcast %353 : vector<16x1xf32> to vector<16x32xf32>
    %364 = arith.subf %345, %363 : vector<16x32xf32>
    %cst_151 = arith.constant 9.99999996E-13 : f32
    %365 = vector.broadcast %cst_151 : f32 to vector<16x1xf32>
    %366 = arith.addf %362, %365 : vector<16x1xf32>
    %367 = math.rsqrt %366 : vector<16x1xf32>
    %368 = vector.broadcast %367 : vector<16x1xf32> to vector<16x32xf32>
    %369 = arith.mulf %364, %368 : vector<16x32xf32>
    %370 = vector.broadcast %347 : vector<1x32xf32> to vector<16x32xf32>
    %371 = arith.mulf %369, %370 : vector<16x32xf32>
    %372 = vector.broadcast %349 : vector<1x32xf32> to vector<16x32xf32>
    %373 = arith.addf %371, %372 : vector<16x32xf32>
    %374 = vector.extract_strided_slice %373 {offsets = [0, 0], sizes = [1, 32], strides = [1, 1]} : vector<16x32xf32> to vector<1x32xf32>
    %375 = vector.extract_strided_slice %373 {offsets = [8, 0], sizes = [1, 32], strides = [1, 1]} : vector<16x32xf32> to vector<1x32xf32>
    %376 = tpu.concatenate %374, %375 in 0 : vector<1x32xf32>, vector<1x32xf32> -> vector<2x32xf32>
    %c0_152 = arith.constant 0 : index
    %c0_153 = arith.constant 0 : index
    %377 = vector.load %arg17[%c0_152, %c0_153] : memref<32x32xf32, #tpu.memory_space<vmem>>, vector<32x32xf32>
    %cst_154 = arith.constant dense<0.000000e+00> : vector<2x32xf32>
    %378 = tpu.matmul %376, %377, %cst_154 {dimension_numbers = #tpu.dot_dimension_numbers<[1], [0], [0], [1], [0, 0, 1, 1], [], []>} : vector<2x32xf32>, vector<32x32xf32>, vector<2x32xf32> -> vector<2x32xf32>
    %c0_155 = arith.constant 0 : index
    %c0_156 = arith.constant 0 : index
    %379 = vector.load %arg18[%c0_155, %c0_156] : memref<1x32xf32, #tpu.memory_space<vmem>>, vector<1x32xf32>
    %380 = vector.broadcast %379 : vector<1x32xf32> to vector<2x32xf32>
    %381 = arith.addf %378, %380 : vector<2x32xf32>
    %382 = math.tanh %381 : vector<2x32xf32>
    %c0_157 = arith.constant 0 : index
    %c0_158 = arith.constant 0 : index
    %383 = vector.load %arg19[%c0_157, %c0_158] : memref<32x3xf32, #tpu.memory_space<vmem>>, vector<32x3xf32>
    %cst_159 = arith.constant dense<0.000000e+00> : vector<2x3xf32>
    %384 = tpu.matmul %382, %383, %cst_159 {dimension_numbers = #tpu.dot_dimension_numbers<[1], [0], [0], [1], [0, 0, 1, 1], [], []>} : vector<2x32xf32>, vector<32x3xf32>, vector<2x3xf32> -> vector<2x3xf32>
    %c0_160 = arith.constant 0 : index
    %c0_161 = arith.constant 0 : index
    %385 = vector.load %arg20[%c0_160, %c0_161] : memref<1x3xf32, #tpu.memory_space<vmem>>, vector<1x3xf32>
    %386 = vector.broadcast %385 : vector<1x3xf32> to vector<2x3xf32>
    %387 = arith.addf %384, %386 : vector<2x3xf32>
    %c0_162 = arith.constant 0 : index
    %c0_163 = arith.constant 0 : index
    %388 = vector.load %arg21[%c0_162, %c0_163] : memref<2x3xf32, #tpu.memory_space<vmem>>, vector<2x3xf32>
    tpu.vector_store %arg21[%c0_162, %c0_163], %387 {strides = array<i32>} : memref<2x3xf32, #tpu.memory_space<vmem>>, vector<2x3xf32>,
    return
  }
  func.func @transform_0(%arg0: i32) -> (i32, i32) {
    %c0_i32 = arith.constant 0 : i32
    %c0_i32_0 = arith.constant 0 : i32
    %c0_i32_1 = arith.constant 0 : i32
    return %c0_i32, %c0_i32_0 : i32, i32
  }
  func.func @transform_1(%arg0: i32) -> (i32, i32) {
    %c0_i32 = arith.constant 0 : i32
    %c0_i32_0 = arith.constant 0 : i32
    %c0_i32_1 = arith.constant 0 : i32
    return %c0_i32, %c0_i32_0 : i32, i32
  }
  func.func @transform_2(%arg0: i32) -> (i32, i32) {
    %c0_i32 = arith.constant 0 : i32
    %c0_i32_0 = arith.constant 0 : i32
    %c0_i32_1 = arith.constant 0 : i32
    return %c0_i32, %c0_i32_0 : i32, i32
  }
  func.func @transform_3(%arg0: i32) -> (i32, i32) {
    %c0_i32 = arith.constant 0 : i32
    %c0_i32_0 = arith.constant 0 : i32
    %c0_i32_1 = arith.constant 0 : i32
    return %c0_i32, %c0_i32_0 : i32, i32
  }
  func.func @transform_4(%arg0: i32) -> (i32, i32, i32) {
    %c0_i32 = arith.constant 0 : i32
    %c0_i32_0 = arith.constant 0 : i32
    %c0_i32_1 = arith.constant 0 : i32
    %c0_i32_2 = arith.constant 0 : i32
    return %c0_i32, %c0_i32_0, %c0_i32_1 : i32, i32, i32
  }
  func.func @transform_5(%arg0: i32) -> (i32, i32, i32) {
    %c0_i32 = arith.constant 0 : i32
    %c0_i32_0 = arith.constant 0 : i32
    %c0_i32_1 = arith.constant 0 : i32
    %c0_i32_2 = arith.constant 0 : i32
    return %c0_i32, %c0_i32_0, %c0_i32_1 : i32, i32, i32
  }
  func.func @transform_6(%arg0: i32) -> (i32, i32, i32) {
    %c0_i32 = arith.constant 0 : i32
    %c0_i32_0 = arith.constant 0 : i32
    %c0_i32_1 = arith.constant 0 : i32
    %c0_i32_2 = arith.constant 0 : i32
    return %c0_i32, %c0_i32_0, %c0_i32_1 : i32, i32, i32
  }
  func.func @transform_7(%arg0: i32) -> (i32, i32, i32) {
    %c0_i32 = arith.constant 0 : i32
    %c0_i32_0 = arith.constant 0 : i32
    %c0_i32_1 = arith.constant 0 : i32
    %c0_i32_2 = arith.constant 0 : i32
    return %c0_i32, %c0_i32_0, %c0_i32_1 : i32, i32, i32
  }
  func.func @transform_8(%arg0: i32) -> (i32, i32, i32) {
    %c0_i32 = arith.constant 0 : i32
    %c0_i32_0 = arith.constant 0 : i32
    %c0_i32_1 = arith.constant 0 : i32
    %c0_i32_2 = arith.constant 0 : i32
    return %c0_i32, %c0_i32_0, %c0_i32_1 : i32, i32, i32
  }
  func.func @transform_9(%arg0: i32) -> (i32, i32, i32) {
    %c0_i32 = arith.constant 0 : i32
    %c0_i32_0 = arith.constant 0 : i32
    %c0_i32_1 = arith.constant 0 : i32
    %c0_i32_2 = arith.constant 0 : i32
    return %c0_i32, %c0_i32_0, %c0_i32_1 : i32, i32, i32
  }
  func.func @transform_10(%arg0: i32) -> (i32, i32, i32) {
    %c0_i32 = arith.constant 0 : i32
    %c0_i32_0 = arith.constant 0 : i32
    %c0_i32_1 = arith.constant 0 : i32
    %c0_i32_2 = arith.constant 0 : i32
    return %c0_i32, %c0_i32_0, %c0_i32_1 : i32, i32, i32
  }
  func.func @transform_11(%arg0: i32) -> (i32, i32, i32) {
    %c0_i32 = arith.constant 0 : i32
    %c0_i32_0 = arith.constant 0 : i32
    %c0_i32_1 = arith.constant 0 : i32
    %c0_i32_2 = arith.constant 0 : i32
    return %c0_i32, %c0_i32_0, %c0_i32_1 : i32, i32, i32
  }
  func.func @transform_12(%arg0: i32) -> (i32, i32, i32) {
    %c0_i32 = arith.constant 0 : i32
    %c0_i32_0 = arith.constant 0 : i32
    %c0_i32_1 = arith.constant 0 : i32
    %c0_i32_2 = arith.constant 0 : i32
    return %c0_i32, %c0_i32_0, %c0_i32_1 : i32, i32, i32
  }
  func.func @transform_13(%arg0: i32) -> (i32, i32, i32) {
    %c0_i32 = arith.constant 0 : i32
    %c0_i32_0 = arith.constant 0 : i32
    %c0_i32_1 = arith.constant 0 : i32
    %c0_i32_2 = arith.constant 0 : i32
    return %c0_i32, %c0_i32_0, %c0_i32_1 : i32, i32, i32
  }
  func.func @transform_14(%arg0: i32) -> (i32, i32, i32) {
    %c0_i32 = arith.constant 0 : i32
    %c0_i32_0 = arith.constant 0 : i32
    %c0_i32_1 = arith.constant 0 : i32
    %c0_i32_2 = arith.constant 0 : i32
    return %c0_i32, %c0_i32_0, %c0_i32_1 : i32, i32, i32
  }
  func.func @transform_15(%arg0: i32) -> (i32, i32, i32) {
    %c0_i32 = arith.constant 0 : i32
    %c0_i32_0 = arith.constant 0 : i32
    %c0_i32_1 = arith.constant 0 : i32
    %c0_i32_2 = arith.constant 0 : i32
    return %c0_i32, %c0_i32_0, %c0_i32_1 : i32, i32, i32
  }
  func.func @transform_16(%arg0: i32) -> (i32, i32) {
    %c0_i32 = arith.constant 0 : i32
    %c0_i32_0 = arith.constant 0 : i32
    %c0_i32_1 = arith.constant 0 : i32
    return %c0_i32, %c0_i32_0 : i32, i32
  }
  func.func @transform_17(%arg0: i32) -> (i32, i32) {
    %c0_i32 = arith.constant 0 : i32
    %c0_i32_0 = arith.constant 0 : i32
    %c0_i32_1 = arith.constant 0 : i32
    return %c0_i32, %c0_i32_0 : i32, i32
  }
  func.func @transform_18(%arg0: i32) -> (i32, i32) {
    %c0_i32 = arith.constant 0 : i32
    %c0_i32_0 = arith.constant 0 : i32
    %c0_i32_1 = arith.constant 0 : i32
    return %c0_i32, %c0_i32_0 : i32, i32
  }
  func.func @transform_19(%arg0: i32) -> (i32, i32) {
    %c0_i32 = arith.constant 0 : i32
    %c0_i32_0 = arith.constant 0 : i32
    %c0_i32_1 = arith.constant 0 : i32
    return %c0_i32, %c0_i32_0 : i32, i32
  }
  func.func @transform_20(%arg0: i32) -> (i32, i32) {
    %c0_i32 = arith.constant 0 : i32
    %c0_i32_0 = arith.constant 0 : i32
    %c0_i32_1 = arith.constant 0 : i32
    return %c0_i32, %c0_i32_0 : i32, i32
  }
}

</mosaic_0001>

<llo_original>
// kernel: _lambda_.1
$region0: #{_lambda_.1}
  #allocation0 [shape = 'u32[]', space=smem, size = 0x4, offset = 0x4, fixed_abs, tag = 'smem constant byte address 0x4 - core index']
  #allocation1 [shape = 'u32[144,128]{1,0:T(1,128)}', space=vmem, size = 0x12000, scoped, tag = 'internal scratch']
  %s0 = inlined_call_operand.vmem [shape: f32[16,32], index: 0, kind: input, shape index: {}]
  %s1 = inlined_call_operand.vmem [shape: f32[16,16], index: 1, kind: input, shape index: {}]
  %s2 = inlined_call_operand.vmem [shape: f32[1,32], index: 2, kind: input, shape index: {}]
  %s3 = inlined_call_operand.vmem [shape: f32[1,32], index: 3, kind: input, shape index: {}, may-alias: {3,17}]
  %s4 = inlined_call_operand.vmem [shape: f32[2,32,96], index: 4, kind: input, shape index: {}]
  %s5 = inlined_call_operand.vmem [shape: f32[2,1,96], index: 5, kind: input, shape index: {}]
  %s6 = inlined_call_operand.hbm [shape: f32[2,32,32], index: 6, kind: input, shape index: {}]
  %s7 = inlined_call_operand.vmem [shape: f32[2,1,32], index: 7, kind: input, shape index: {}, may-alias: {7,9,13,15}]
  %s8 = inlined_call_operand.vmem [shape: f32[2,1,32], index: 8, kind: input, shape index: {}, may-alias: {8,14}]
  %s9 = inlined_call_operand.vmem [shape: f32[2,1,32], index: 9, kind: input, shape index: {}, may-alias: {7,9,13,15}]
  %s10 = inlined_call_operand.hbm [shape: f32[2,32,64], index: 10, kind: input, shape index: {}]
  %s11 = inlined_call_operand.vmem [shape: f32[2,1,64], index: 11, kind: input, shape index: {}]
  %s12 = inlined_call_operand.vmem [shape: f32[2,64,32], index: 12, kind: input, shape index: {}]
  %s13 = inlined_call_operand.vmem [shape: f32[2,1,32], index: 13, kind: input, shape index: {}, may-alias: {7,9,13,15}]
  %s14 = inlined_call_operand.vmem [shape: f32[2,1,32], index: 14, kind: input, shape index: {}, may-alias: {8,14}]
  %s15 = inlined_call_operand.vmem [shape: f32[2,1,32], index: 15, kind: input, shape index: {}, may-alias: {7,9,13,15}]
  %s16 = inlined_call_operand.vmem [shape: f32[32,32], index: 16, kind: input, shape index: {}]
  %s17 = inlined_call_operand.vmem [shape: f32[1,32], index: 17, kind: input, shape index: {}, may-alias: {3,17}]
  %s18 = inlined_call_operand.hbm [shape: f32[32,3], index: 18, kind: input, shape index: {}]
  %s19 = inlined_call_operand.vmem [shape: f32[1,3], index: 19, kind: input, shape index: {}]
  %s20 = inlined_call_operand.hbm [shape: f32[2,3], index: 20, kind: output, shape index: {}]
  %s21 = sld [smem:[#allocation0]]
  $region102: #{_lambda_.1} parent=0
    _
  %s23 = ssub.s32 1, %s21
  %s24 = scalar_select 0, %s23, %s21
  $region1: #{_lambda_.1} parent=0
    #allocation2 [shape = 'u8[32768]{0}', space=vmem, size = 0x8000, scoped, tag = 'input window, operand 6, single buffered']
    #allocation3 [shape = 's32[1]{0}', space=sflag, size = 0x4, scoped, tag = 'scoped memory for _lambda_.1']
    #allocation4 [shape = 's32[1]{0}', space=sflag, size = 0x4, scoped, tag = 'scoped memory for _lambda_.1']
    #allocation5 [shape = 'u8[32768]{0}', space=vmem, size = 0x8000, scoped, tag = 'input window, operand 10, single buffered']
    #allocation6 [shape = 's32[1]{0}', space=sflag, size = 0x4, scoped, tag = 'scoped memory for _lambda_.1']
    #allocation7 [shape = 'u8[16384]{0}', space=vmem, size = 0x4000, scoped, tag = 'input window, operand 18, single buffered']
    #allocation8 [shape = 'u8[1024]{0}', space=vmem, size = 0x400, scoped, tag = 'output window, operand 0, single buffered']
    %25 = vsyncpa [#allocation3], 0
    %26 = vsyncpa [#allocation6], 0
    %27 = vsyncpa [#allocation4], 0
    // Predicated region
    $region2: #{_lambda_.1} parent=1 // pred_check
      _
    $region3: #{_lambda_.1} parent=1 // pred_check_branch
      %29 = sbr.rel (0) target = $region5
    $region4: #{_lambda_.1} parent=1 // pred_region
      _
    $region5: #{_lambda_.1} parent=1 // pred_fallthru
      _
    // Predicated region
    $region6: #{_lambda_.1} parent=1 // pred_check
      _
    $region7: #{_lambda_.1} parent=1 // pred_check_branch
      %31 = sbr.rel (0) target = $region9
    $region8: #{_lambda_.1} parent=1 // pred_region
      _
    $region9: #{_lambda_.1} parent=1 // pred_fallthru
      _
    // Predicated region
    $region10: #{_lambda_.1} parent=1 // pred_check
      _
    $region11: #{_lambda_.1} parent=1 // pred_check_branch
      %33 = sbr.rel (0) target = $region13
    $region12: #{_lambda_.1} parent=1 // pred_region
      _
    $region13: #{_lambda_.1} parent=1 // pred_fallthru
      _
    // Predicated region
    $region14: #{_lambda_.1} parent=1 // pred_check
      _
    $region15: #{_lambda_.1} parent=1 // pred_check_branch
      %35 = sbr.rel (0) target = $region17
    $region16: #{_lambda_.1} parent=1 // pred_region
      _
    $region17: #{_lambda_.1} parent=1 // pred_fallthru
      _
    // Predicated region
    $region18: #{_lambda_.1} parent=1 // pred_check
      _
    $region19: #{_lambda_.1} parent=1 // pred_check_branch
      %37 = sbr.rel (0) target = $region21
    $region20: #{_lambda_.1} parent=1 // pred_region
      _
    $region21: #{_lambda_.1} parent=1 // pred_fallthru
      _
    // Predicated region
    $region22: #{_lambda_.1} parent=1 // pred_check
      _
    $region23: #{_lambda_.1} parent=1 // pred_check_branch
      %39 = sbr.rel (0) target = $region25
    $region24: #{_lambda_.1} parent=1 // pred_region
      _
    $region25: #{_lambda_.1} parent=1 // pred_fallthru
      _
    // Predicated region
    $region26: #{_lambda_.1} parent=1 // pred_check
      _
    $region27: #{_lambda_.1} parent=1 // pred_check_branch
      %41 = sbr.rel (0) target = $region29
    $region28: #{_lambda_.1} parent=1 // pred_region
      %s43 = ssub.s32 1024, 1024
      %44 = vsyncadd [#allocation3], %s43
      %s45 = sshll.u32 [#allocation2], 4
      %s46 = int_to_ptr.vmem [resolvable:$true] %s45
      %51 = dma.hbm_to_vmem [thread:$0]  %s6, 1024, %s46, [#allocation3], 128, 128, 8
    $region29: #{_lambda_.1} parent=1 // pred_fallthru
      _
    // Predicated region
    $region30: #{_lambda_.1} parent=1 // pred_check
      _
    $region31: #{_lambda_.1} parent=1 // pred_check_branch
      %53 = sbr.rel (0) target = $region33
    $region32: #{_lambda_.1} parent=1 // pred_region
      _
    $region33: #{_lambda_.1} parent=1 // pred_fallthru
      _
    // Predicated region
    $region34: #{_lambda_.1} parent=1 // pred_check
      _
    $region35: #{_lambda_.1} parent=1 // pred_check_branch
      %55 = sbr.rel (0) target = $region37
    $region36: #{_lambda_.1} parent=1 // pred_region
      _
    $region37: #{_lambda_.1} parent=1 // pred_fallthru
      _
    // Predicated region
    $region38: #{_lambda_.1} parent=1 // pred_check
      _
    $region39: #{_lambda_.1} parent=1 // pred_check_branch
      %57 = sbr.rel (0) target = $region41
    $region40: #{_lambda_.1} parent=1 // pred_region
      _
    $region41: #{_lambda_.1} parent=1 // pred_fallthru
      _
    // Predicated region
    $region42: #{_lambda_.1} parent=1 // pred_check
      _
    $region43: #{_lambda_.1} parent=1 // pred_check_branch
      %59 = sbr.rel (0) target = $region45
    $region44: #{_lambda_.1} parent=1 // pred_region
      %s61 = ssub.s32 1024, 1024
      %62 = vsyncadd [#allocation6], %s61
      %s63 = sshll.u32 [#allocation5], 4
      %s64 = int_to_ptr.vmem [resolvable:$true] %s63
      %69 = dma.hbm_to_vmem [thread:$0]  %s10, 1024, %s64, [#allocation6], 128, 128, 8
    $region45: #{_lambda_.1} parent=1 // pred_fallthru
      _
    // Predicated region
    $region46: #{_lambda_.1} parent=1 // pred_check
      _
    $region47: #{_lambda_.1} parent=1 // pred_check_branch
      %71 = sbr.rel (0) target = $region49
    $region48: #{_lambda_.1} parent=1 // pred_region
      _
    $region49: #{_lambda_.1} parent=1 // pred_fallthru
      _
    // Predicated region
    $region50: #{_lambda_.1} parent=1 // pred_check
      _
    $region51: #{_lambda_.1} parent=1 // pred_check_branch
      %73 = sbr.rel (0) target = $region53
    $region52: #{_lambda_.1} parent=1 // pred_region
      _
    $region53: #{_lambda_.1} parent=1 // pred_fallthru
      _
    // Predicated region
    $region54: #{_lambda_.1} parent=1 // pred_check
      _
    $region55: #{_lambda_.1} parent=1 // pred_check_branch
      %75 = sbr.rel (0) target = $region57
    $region56: #{_lambda_.1} parent=1 // pred_region
      _
    $region57: #{_lambda_.1} parent=1 // pred_fallthru
      _
    // Predicated region
    $region58: #{_lambda_.1} parent=1 // pred_check
      _
    $region59: #{_lambda_.1} parent=1 // pred_check_branch
      %77 = sbr.rel (0) target = $region61
    $region60: #{_lambda_.1} parent=1 // pred_region
      _
    $region61: #{_lambda_.1} parent=1 // pred_fallthru
      _
    // Predicated region
    $region62: #{_lambda_.1} parent=1 // pred_check
      _
    $region63: #{_lambda_.1} parent=1 // pred_check_branch
      %79 = sbr.rel (0) target = $region65
    $region64: #{_lambda_.1} parent=1 // pred_region
      _
    $region65: #{_lambda_.1} parent=1 // pred_fallthru
      _
    // Predicated region
    $region66: #{_lambda_.1} parent=1 // pred_check
      _
    $region67: #{_lambda_.1} parent=1 // pred_check_branch
      %81 = sbr.rel (0) target = $region69
    $region68: #{_lambda_.1} parent=1 // pred_region
      _
    $region69: #{_lambda_.1} parent=1 // pred_fallthru
      _
    // Predicated region
    $region70: #{_lambda_.1} parent=1 // pred_check
      _
    $region71: #{_lambda_.1} parent=1 // pred_check_branch
      %83 = sbr.rel (0) target = $region73
    $region72: #{_lambda_.1} parent=1 // pred_region
      _
    $region73: #{_lambda_.1} parent=1 // pred_fallthru
      _
    // Predicated region
    $region74: #{_lambda_.1} parent=1 // pred_check
      _
    $region75: #{_lambda_.1} parent=1 // pred_check_branch
      %85 = sbr.rel (0) target = $region77
    $region76: #{_lambda_.1} parent=1 // pred_region
      %s87 = ssub.s32 512, 512
      %88 = vsyncadd [#allocation6], %s87
      %s89 = sshll.u32 [#allocation7], 4
      %s90 = int_to_ptr.vmem [resolvable:$true] %s89
      %95 = dma.hbm_to_vmem [thread:$0]  %s18, 512, %s90, [#allocation6], 128, 128, 8
    $region77: #{_lambda_.1} parent=1 // pred_fallthru
      _
    // Predicated region
    $region78: #{_lambda_.1} parent=1 // pred_check
      _
    $region79: #{_lambda_.1} parent=1 // pred_check_branch
      %97 = sbr.rel (0) target = $region81
    $region80: #{_lambda_.1} parent=1 // pred_region
      _
    $region81: #{_lambda_.1} parent=1 // pred_fallthru
      _
    // Predicated region
    $region82: #{_lambda_.1} parent=1 // pred_check
      _
    $region83: #{_lambda_.1} parent=1 // pred_check_branch
      %99 = sbr.rel (0) target = $region85
    $region84: #{_lambda_.1} parent=1 // pred_region
      %100 = dma.done [#allocation3], 1024
    $region85: #{_lambda_.1} parent=1 // pred_fallthru
      _
    // Predicated region
    $region86: #{_lambda_.1} parent=1 // pred_check
      _
    $region87: #{_lambda_.1} parent=1 // pred_check_branch
      %102 = sbr.rel (0) target = $region89
    $region88: #{_lambda_.1} parent=1 // pred_region
      %103 = dma.done [#allocation6], 1024
    $region89: #{_lambda_.1} parent=1 // pred_fallthru
      _
    // Predicated region
    $region90: #{_lambda_.1} parent=1 // pred_check
      _
    $region91: #{_lambda_.1} parent=1 // pred_check_branch
      %105 = sbr.rel (0) target = $region93
    $region92: #{_lambda_.1} parent=1 // pred_region
      %106 = dma.done [#allocation6], 512
    $region93: #{_lambda_.1} parent=1 // pred_fallthru
      _
    %v107 = vld [vmem:[%s1] sm:$0xff]
    %v108 = vld [vmem:[%s1 + $0x8] sm:$0xff]
    %v109 = vld [vmem:[%s0] sm:$0xff]
    %v110 = vld [vmem:[%s0 + $0x8] sm:$0xff]
    %v111 = vld [vmem:[%s2] sm:$0x1]
    %v112 = vld [vmem:[%s3] sm:$0x1]
    %vm113 = vcmask 261120
    %v114 = vsel %vm113, %v109, 0.0
    %115 = vadd.xlane.f32.xlu0 %v114
    %v116 = vpop.xlane.xlu0 %115
    %v117 = vsel %vm113, %v110, 0.0
    %118 = vadd.xlane.f32.xlu0 %v117
    %v119 = vpop.xlane.xlu0 %118
    %v120 = vrcp.pop 32.0
    %v121 = vmul.f32 %v116, %v120
    %v122 = vmul.f32 %v119, %v120
    %v123 = vsub.f32 %v109, %v121
    %v124 = vsub.f32 %v110, %v122
    %v125 = vmul.f32 %v123, %v123
    %v126 = vmul.f32 %v124, %v124
    %v127 = vsel %vm113, %v125, 0.0
    %128 = vadd.xlane.f32.xlu0 %v127
    %v129 = vpop.xlane.xlu0 %128
    %v130 = vsel %vm113, %v126, 0.0
    %131 = vadd.xlane.f32.xlu0 %v130
    %v132 = vpop.xlane.xlu0 %131
    %v133 = vmul.f32 %v129, %v120
    %v134 = vmul.f32 %v132, %v120
    %v135 = vadd.f32 %v133, 1e-12
    %v136 = vadd.f32 %v134, 1e-12
    %v137 = vrsqrt.pop %v135
    %v138 = vrsqrt.pop %v136
    %v139 = vmul.f32 %v123, %v137
    %v140 = vmul.f32 %v124, %v138
    %v142 = vlaneseq
    %v143 = vshrl.u32 %v142, 7
    %v144 = vsub.s32 0, %v143
    %v145 = vrot.slane %v111, %v144
    %v147 = vmul.f32 %v139, %v145
    %v148 = vmul.f32 %v140, %v145
    %v150 = vlaneseq
    %v151 = vshrl.u32 %v150, 7
    %v152 = vsub.s32 0, %v151
    %v153 = vrot.slane %v112, %v152
    %v155 = vadd.f32 %v147, %v153
    %v156 = vadd.f32 %v148, %v153
    %v157 = vld [vmem:[%s4] sm:$0xff]
    %v158 = vld [vmem:[%s4 + $0x8] sm:$0xff]
    %v159 = vld [vmem:[%s4 + $0x10] sm:$0xff]
    %v160 = vld [vmem:[%s4 + $0x18] sm:$0xff]
    %v161 = vld [vmem:[%s5] sm:$0x1]
    %v163 = vlaneseq
    %v164 = vshrl.u32 %v163, 7
    %v165 = vsub.s32 0, %v164
    %v166 = vrot.slane %v161, %v165
    %v169 = vsel %vm113, %v155, 0
    %v172 = vsel %vm113, %v156, 0
    %174 = vmatprep.subr.mxu0 0.0
    %175 = vmatpush1.msra.mxu0 %v157
    %176 = vmatprep.subr.mxu0 0.0
    %177 = vmatpush1.msra.mxu0 %v158
    %178 = vmatprep.subr.mxu0 0.0
    %179 = vmatpush1.msra.mxu0 %v159
    %180 = vmatprep.subr.mxu0 0.0
    %181 = vmatpush1.msra.mxu0 %v160
    %182 = vmatprep.subr.mxu0 0.0
    %183 = vmatpush1.msra.mxu0 0.0
    %184 = vmatprep.subr.mxu0 0.0
    %185 = vmatpush1.msra.mxu0 0.0
    %186 = vmatprep.subr.mxu0 0.0
    %187 = vmatpush1.msra.mxu0 0.0
    %188 = vmatprep.subr.mxu0 0.0
    %189 = vmatpush1.msra.mxu0 0.0
    %190 = vmatprep.subr.mxu0 0.0
    %191 = vmatpush1.msra.mxu0 0.0
    %192 = vmatprep.subr.mxu0 0.0
    %193 = vmatpush1.msra.mxu0 0.0
    %194 = vmatprep.subr.mxu0 0.0
    %195 = vmatpush1.msra.mxu0 0.0
    %196 = vmatprep.subr.mxu0 0.0
    %197 = vmatpush1.msra.mxu0 0.0
    %198 = vmatprep.subr.mxu0 0.0
    %199 = vmatpush1.msra.mxu0 0.0
    %200 = vmatprep.subr.mxu0 0.0
    %201 = vmatpush1.msra.mxu0 0.0
    %202 = vmatprep.subr.mxu0 0.0
    %203 = vmatpush1.msra.mxu0 0.0
    %204 = vmatprep.subr.mxu0 0.0
    %205 = vmatpush1.msra.mxu0 0.0
    %206 = vmatprep.subr.mxu0 0.0
    %207 = vmatpush1.msra.mxu0 0.0
    %208 = vmatprep.subr.mxu0 0.0
    %209 = vmatpush1.msra.mxu0 0.0
    %210 = vmatprep.subr.mxu0 0.0
    %211 = vmatpush1.msra.mxu0 0.0
    %212 = vmatprep.subr.mxu0 0.0
    %213 = vmatpush1.msra.mxu0 0.0
    %214 = vmatprep.subr.mxu0 0.0
    %215 = vmatpush1.msra.mxu0 0.0
    %216 = vmatprep.subr.mxu0 0.0
    %217 = vmatpush1.msra.mxu0 0.0
    %218 = vmatprep.subr.mxu0 0.0
    %219 = vmatpush1.msra.mxu0 0.0
    %220 = vmatprep.subr.mxu0 0.0
    %221 = vmatpush1.msra.mxu0 0.0
    %222 = vmatprep.subr.mxu0 0.0
    %223 = vmatpush1.msra.mxu0 0.0
    %224 = vmatprep.subr.mxu0 0.0
    %225 = vmatpush1.msra.mxu0 0.0
    %226 = vmatprep.subr.mxu0 0.0
    %227 = vmatpush1.msra.mxu0 0.0
    %228 = vmatprep.subr.mxu0 0.0
    %229 = vmatpush1.msra.mxu0 0.0
    %230 = vmatprep.subr.mxu0 0.0
    %231 = vmatpush1.msra.mxu0 0.0
    %232 = vmatprep.subr.mxu0 0.0
    %233 = vmatpush1.msra.mxu0 0.0
    %234 = vmatprep.subr.mxu0 0.0
    %235 = vmatpush1.msra.mxu0 0.0
    %236 = vmatprep.subr.mxu0 0.0
    %237 = vmatpush1.msra.mxu0 0.0
    %238 = vmatprep.mubr.f32.mxu0 0.0
    %239 = vmatmul.mubr.f32.gmra.mrb[0].mxu0 %v169
    %v240 = vpop.f32.mrb[0].mxu0
    %v241 = vadd.f32 %v166, %v240
    %v242 = vpop.f32.mrb[0].mxu0
    %243 = vmatprep.mubr.f32.mxu0 0.0
    %244 = vmatmul.mubr.f32.gmra.mrb[0].mxu0 %v172
    %v245 = vpop.f32.mrb[0].mxu0
    %v246 = vadd.f32 %v166, %v245
    %v247 = vpop.f32.mrb[0].mxu0
    %248 = vdwg.mxu0
    %v249 = vmul.f32 %v241, 0.35355338
    %v250 = vmul.f32 %v246, 0.35355338
    %253 = vrot.lane.b32.xlu0 %v241, 96
    %v254 = vpop.permute.xlu0 %253
    %255 = vrot.lane.b32.xlu0 %v246, 96
    %v256 = vpop.permute.xlu0 %255
    %vm257 = vcmask 64512
    %v259 = vsel %vm257, %v249, 0
    %v262 = vsel %vm257, %v250, 0
    %v264 = vsel %vm257, %v254, 0
    %v266 = vsel %vm257, %v256, 0
    %268 = vmatprep.subr.mxu0 0.0
    %269 = vmatpush1.xpose.msra.mxu0 %v264
    %270 = vmatprep.subr.mxu0 0.0
    %271 = vmatpush1.xpose.msra.mxu0 %v266
    %272 = vmatprep.subr.mxu0 0.0
    %273 = vmatpush1.xpose.msra.mxu0 0.0
    %274 = vmatprep.subr.mxu0 0.0
    %275 = vmatpush1.xpose.msra.mxu0 0.0
    %276 = vmatprep.subr.mxu0 0.0
    %277 = vmatpush1.xpose.msra.mxu0 0.0
    %278 = vmatprep.subr.mxu0 0.0
    %279 = vmatpush1.xpose.msra.mxu0 0.0
    %280 = vmatprep.subr.mxu0 0.0
    %281 = vmatpush1.xpose.msra.mxu0 0.0
    %282 = vmatprep.subr.mxu0 0.0
    %283 = vmatpush1.xpose.msra.mxu0 0.0
    %284 = vmatprep.subr.mxu0 0.0
    %285 = vmatpush1.xpose.msra.mxu0 0.0
    %286 = vmatprep.subr.mxu0 0.0
    %287 = vmatpush1.xpose.msra.mxu0 0.0
    %288 = vmatprep.subr.mxu0 0.0
    %289 = vmatpush1.xpose.msra.mxu0 0.0
    %290 = vmatprep.subr.mxu0 0.0
    %291 = vmatpush1.xpose.msra.mxu0 0.0
    %292 = vmatprep.subr.mxu0 0.0
    %293 = vmatpush1.xpose.msra.mxu0 0.0
    %294 = vmatprep.subr.mxu0 0.0
    %295 = vmatpush1.xpose.msra.mxu0 0.0
    %296 = vmatprep.subr.mxu0 0.0
    %297 = vmatpush1.xpose.msra.mxu0 0.0
    %298 = vmatprep.subr.mxu0 0.0
    %299 = vmatpush1.xpose.msra.mxu0 0.0
    %300 = vmatprep.subr.mxu0 0.0
    %301 = vmatpush1.xpose.msra.mxu0 0.0
    %302 = vmatprep.subr.mxu0 0.0
    %303 = vmatpush1.xpose.msra.mxu0 0.0
    %304 = vmatprep.subr.mxu0 0.0
    %305 = vmatpush1.xpose.msra.mxu0 0.0
    %306 = vmatprep.subr.mxu0 0.0
    %307 = vmatpush1.xpose.msra.mxu0 0.0
    %308 = vmatprep.subr.mxu0 0.0
    %309 = vmatpush1.xpose.msra.mxu0 0.0
    %310 = vmatprep.subr.mxu0 0.0
    %311 = vmatpush1.xpose.msra.mxu0 0.0
    %312 = vmatprep.subr.mxu0 0.0
    %313 = vmatpush1.xpose.msra.mxu0 0.0
    %314 = vmatprep.subr.mxu0 0.0
    %315 = vmatpush1.xpose.msra.mxu0 0.0
    %316 = vmatprep.subr.mxu0 0.0
    %317 = vmatpush1.xpose.msra.mxu0 0.0
    %318 = vmatprep.subr.mxu0 0.0
    %319 = vmatpush1.xpose.msra.mxu0 0.0
    %320 = vmatprep.subr.mxu0 0.0
    %321 = vmatpush1.xpose.msra.mxu0 0.0
    %322 = vmatprep.subr.mxu0 0.0
    %323 = vmatpush1.xpose.msra.mxu0 0.0
    %324 = vmatprep.subr.mxu0 0.0
    %325 = vmatpush1.xpose.msra.mxu0 0.0
    %326 = vmatprep.subr.mxu0 0.0
    %327 = vmatpush1.xpose.msra.mxu0 0.0
    %328 = vmatprep.subr.mxu0 0.0
    %329 = vmatpush1.xpose.msra.mxu0 0.0
    %330 = vmatprep.subr.mxu0 0.0
    %331 = vmatpush1.xpose.msra.mxu0 0.0
    %332 = vmatprep.mubr.f32.mxu0 0.0
    %333 = vmatmul.mubr.f32.gmra.mrb[0].mxu0 %v259
    %v334 = vpop.f32.mrb[0].mxu0
    %v335 = vadd.f32 %v107, %v334
    %v336 = vpop.f32.mrb[0].mxu0
    %337 = vmatprep.mubr.f32.mxu0 0.0
    %338 = vmatmul.mubr.f32.gmra.mrb[0].mxu0 %v262
    %v339 = vpop.f32.mrb[0].mxu0
    %v340 = vadd.f32 %v108, %v339
    %v341 = vpop.f32.mrb[0].mxu0
    %342 = vdwg.mxu0
    %vm343 = vcmask 130048
    %v344 = vsel %vm343, %v335, -inf
    %345 = vmax.xlane.f32.xlu0 %v344
    %v346 = vpop.xlane.xlu0 %345
    %v347 = vsel %vm343, %v340, -inf
    %348 = vmax.xlane.f32.xlu0 %v347
    %v349 = vpop.xlane.xlu0 %348
    %v350 = vsub.f32 %v335, %v346
    %v351 = vsub.f32 %v340, %v349
    %v352 = vmul.f32 %v350, 1.442695
    %v353 = vpow.pop %v352
    %v354 = vmul.f32 %v351, 1.442695
    %v355 = vpow.pop %v354
    %v356 = vsel %vm343, %v353, 0.0
    %357 = vadd.xlane.f32.xlu0 %v356
    %v358 = vpop.xlane.xlu0 %357
    %v359 = vsel %vm343, %v355, 0.0
    %360 = vadd.xlane.f32.xlu0 %v359
    %v361 = vpop.xlane.xlu0 %360
    %v362 = vrcp.pop %v358
    %v363 = vrcp.pop %v361
    %v364 = vmul.f32 %v353, %v362
    %v365 = vmul.f32 %v355, %v363
    %366 = vrot.lane.b32.xlu0 %v241, 64
    %v367 = vpop.permute.xlu0 %366
    %368 = vrot.lane.b32.xlu0 %v246, 64
    %v369 = vpop.permute.xlu0 %368
    %v373 = vsel %vm343, %v364, 0
    %v376 = vsel %vm343, %v365, 0
    %378 = vmatprep.subr.mxu0 0.0
    %379 = vmatpush1.msra.mxu0 %v367
    %380 = vmatprep.subr.mxu0 0.0
    %381 = vmatpush1.msra.mxu0 %v369
    %382 = vmatprep.subr.mxu0 0.0
    %383 = vmatpush1.msra.mxu0 0.0
    %384 = vmatprep.subr.mxu0 0.0
    %385 = vmatpush1.msra.mxu0 0.0
    %386 = vmatprep.subr.mxu0 0.0
    %387 = vmatpush1.msra.mxu0 0.0
    %388 = vmatprep.subr.mxu0 0.0
    %389 = vmatpush1.msra.mxu0 0.0
    %390 = vmatprep.subr.mxu0 0.0
    %391 = vmatpush1.msra.mxu0 0.0
    %392 = vmatprep.subr.mxu0 0.0
    %393 = vmatpush1.msra.mxu0 0.0
    %394 = vmatprep.subr.mxu0 0.0
    %395 = vmatpush1.msra.mxu0 0.0
    %396 = vmatprep.subr.mxu0 0.0
    %397 = vmatpush1.msra.mxu0 0.0
    %398 = vmatprep.subr.mxu0 0.0
    %399 = vmatpush1.msra.mxu0 0.0
    %400 = vmatprep.subr.mxu0 0.0
    %401 = vmatpush1.msra.mxu0 0.0
    %402 = vmatprep.subr.mxu0 0.0
    %403 = vmatpush1.msra.mxu0 0.0
    %404 = vmatprep.subr.mxu0 0.0
    %405 = vmatpush1.msra.mxu0 0.0
    %406 = vmatprep.subr.mxu0 0.0
    %407 = vmatpush1.msra.mxu0 0.0
    %408 = vmatprep.subr.mxu0 0.0
    %409 = vmatpush1.msra.mxu0 0.0
    %410 = vmatprep.subr.mxu0 0.0
    %411 = vmatpush1.msra.mxu0 0.0
    %412 = vmatprep.subr.mxu0 0.0
    %413 = vmatpush1.msra.mxu0 0.0
    %414 = vmatprep.subr.mxu0 0.0
    %415 = vmatpush1.msra.mxu0 0.0
    %416 = vmatprep.subr.mxu0 0.0
    %417 = vmatpush1.msra.mxu0 0.0
    %418 = vmatprep.subr.mxu0 0.0
    %419 = vmatpush1.msra.mxu0 0.0
    %420 = vmatprep.subr.mxu0 0.0
    %421 = vmatpush1.msra.mxu0 0.0
    %422 = vmatprep.subr.mxu0 0.0
    %423 = vmatpush1.msra.mxu0 0.0
    %424 = vmatprep.subr.mxu0 0.0
    %425 = vmatpush1.msra.mxu0 0.0
    %426 = vmatprep.subr.mxu0 0.0
    %427 = vmatpush1.msra.mxu0 0.0
    %428 = vmatprep.subr.mxu0 0.0
    %429 = vmatpush1.msra.mxu0 0.0
    %430 = vmatprep.subr.mxu0 0.0
    %431 = vmatpush1.msra.mxu0 0.0
    %432 = vmatprep.subr.mxu0 0.0
    %433 = vmatpush1.msra.mxu0 0.0
    %434 = vmatprep.subr.mxu0 0.0
    %435 = vmatpush1.msra.mxu0 0.0
    %436 = vmatprep.subr.mxu0 0.0
    %437 = vmatpush1.msra.mxu0 0.0
    %438 = vmatprep.subr.mxu0 0.0
    %439 = vmatpush1.msra.mxu0 0.0
    %440 = vmatprep.subr.mxu0 0.0
    %441 = vmatpush1.msra.mxu0 0.0
    %442 = vmatprep.mubr.f32.mxu0 0.0
    %443 = vmatmul.mubr.f32.gmra.mrb[0].mxu0 %v373
    %v444 = vpop.f32.mrb[0].mxu0
    %v445 = vadd.f32 0.0, %v444
    %v446 = vpop.f32.mrb[0].mxu0
    %447 = vmatprep.mubr.f32.mxu0 0.0
    %448 = vmatmul.mubr.f32.gmra.mrb[0].mxu0 %v376
    %v449 = vpop.f32.mrb[0].mxu0
    %v450 = vadd.f32 0.0, %v449
    %v451 = vpop.f32.mrb[0].mxu0
    %452 = vdwg.mxu0
    %453 = vrot.lane.b32.xlu0 %v249, 120
    %v454 = vpop.permute.xlu0 %453
    %455 = vrot.lane.b32.xlu0 %v250, 120
    %v456 = vpop.permute.xlu0 %455
    %457 = vrot.lane.b32.xlu0 %v241, 88
    %v458 = vpop.permute.xlu0 %457
    %459 = vrot.lane.b32.xlu0 %v246, 88
    %v460 = vpop.permute.xlu0 %459
    %v461 = vsel %vm257, %v454, 0
    %v463 = vsel %vm257, %v456, 0
    %v465 = vsel %vm257, %v458, 0
    %v467 = vsel %vm257, %v460, 0
    %469 = vmatprep.subr.mxu0 0.0
    %470 = vmatpush1.xpose.msra.mxu0 %v465
    %471 = vmatprep.subr.mxu0 0.0
    %472 = vmatpush1.xpose.msra.mxu0 %v467
    %473 = vmatprep.subr.mxu0 0.0
    %474 = vmatpush1.xpose.msra.mxu0 0.0
    %475 = vmatprep.subr.mxu0 0.0
    %476 = vmatpush1.xpose.msra.mxu0 0.0
    %477 = vmatprep.subr.mxu0 0.0
    %478 = vmatpush1.xpose.msra.mxu0 0.0
    %479 = vmatprep.subr.mxu0 0.0
    %480 = vmatpush1.xpose.msra.mxu0 0.0
    %481 = vmatprep.subr.mxu0 0.0
    %482 = vmatpush1.xpose.msra.mxu0 0.0
    %483 = vmatprep.subr.mxu0 0.0
    %484 = vmatpush1.xpose.msra.mxu0 0.0
    %485 = vmatprep.subr.mxu0 0.0
    %486 = vmatpush1.xpose.msra.mxu0 0.0
    %487 = vmatprep.subr.mxu0 0.0
    %488 = vmatpush1.xpose.msra.mxu0 0.0
    %489 = vmatprep.subr.mxu0 0.0
    %490 = vmatpush1.xpose.msra.mxu0 0.0
    %491 = vmatprep.subr.mxu0 0.0
    %492 = vmatpush1.xpose.msra.mxu0 0.0
    %493 = vmatprep.subr.mxu0 0.0
    %494 = vmatpush1.xpose.msra.mxu0 0.0
    %495 = vmatprep.subr.mxu0 0.0
    %496 = vmatpush1.xpose.msra.mxu0 0.0
    %497 = vmatprep.subr.mxu0 0.0
    %498 = vmatpush1.xpose.msra.mxu0 0.0
    %499 = vmatprep.subr.mxu0 0.0
    %500 = vmatpush1.xpose.msra.mxu0 0.0
    %501 = vmatprep.subr.mxu0 0.0
    %502 = vmatpush1.xpose.msra.mxu0 0.0
    %503 = vmatprep.subr.mxu0 0.0
    %504 = vmatpush1.xpose.msra.mxu0 0.0
    %505 = vmatprep.subr.mxu0 0.0
    %506 = vmatpush1.xpose.msra.mxu0 0.0
    %507 = vmatprep.subr.mxu0 0.0
    %508 = vmatpush1.xpose.msra.mxu0 0.0
    %509 = vmatprep.subr.mxu0 0.0
    %510 = vmatpush1.xpose.msra.mxu0 0.0
    %511 = vmatprep.subr.mxu0 0.0
    %512 = vmatpush1.xpose.msra.mxu0 0.0
    %513 = vmatprep.subr.mxu0 0.0
    %514 = vmatpush1.xpose.msra.mxu0 0.0
    %515 = vmatprep.subr.mxu0 0.0
    %516 = vmatpush1.xpose.msra.mxu0 0.0
    %517 = vmatprep.subr.mxu0 0.0
    %518 = vmatpush1.xpose.msra.mxu0 0.0
    %519 = vmatprep.subr.mxu0 0.0
    %520 = vmatpush1.xpose.msra.mxu0 0.0
    %521 = vmatprep.subr.mxu0 0.0
    %522 = vmatpush1.xpose.msra.mxu0 0.0
    %523 = vmatprep.subr.mxu0 0.0
    %524 = vmatpush1.xpose.msra.mxu0 0.0
    %525 = vmatprep.subr.mxu0 0.0
    %526 = vmatpush1.xpose.msra.mxu0 0.0
    %527 = vmatprep.subr.mxu0 0.0
    %528 = vmatpush1.xpose.msra.mxu0 0.0
    %529 = vmatprep.subr.mxu0 0.0
    %530 = vmatpush1.xpose.msra.mxu0 0.0
    %531 = vmatprep.subr.mxu0 0.0
    %532 = vmatpush1.xpose.msra.mxu0 0.0
    %533 = vmatprep.mubr.f32.mxu0 0.0
    %534 = vmatmul.mubr.f32.gmra.mrb[0].mxu0 %v461
    %v535 = vpop.f32.mrb[0].mxu0
    %v536 = vadd.f32 %v107, %v535
    %v537 = vpop.f32.mrb[0].mxu0
    %538 = vmatprep.mubr.f32.mxu0 0.0
    %539 = vmatmul.mubr.f32.gmra.mrb[0].mxu0 %v463
    %v540 = vpop.f32.mrb[0].mxu0
    %v541 = vadd.f32 %v108, %v540
    %v542 = vpop.f32.mrb[0].mxu0
    %543 = vdwg.mxu0
    %v544 = vsel %vm343, %v536, -inf
    %545 = vmax.xlane.f32.xlu0 %v544
    %v546 = vpop.xlane.xlu0 %545
    %v547 = vsel %vm343, %v541, -inf
    %548 = vmax.xlane.f32.xlu0 %v547
    %v549 = vpop.xlane.xlu0 %548
    %v550 = vsub.f32 %v536, %v546
    %v551 = vsub.f32 %v541, %v549
    %v552 = vmul.f32 %v550, 1.442695
    %v553 = vpow.pop %v552
    %v554 = vmul.f32 %v551, 1.442695
    %v555 = vpow.pop %v554
    %v556 = vsel %vm343, %v553, 0.0
    %557 = vadd.xlane.f32.xlu0 %v556
    %v558 = vpop.xlane.xlu0 %557
    %v559 = vsel %vm343, %v555, 0.0
    %560 = vadd.xlane.f32.xlu0 %v559
    %v561 = vpop.xlane.xlu0 %560
    %v562 = vrcp.pop %v558
    %v563 = vrcp.pop %v561
    %v564 = vmul.f32 %v553, %v562
    %v565 = vmul.f32 %v555, %v563
    %566 = vrot.lane.b32.xlu0 %v241, 56
    %v567 = vpop.permute.xlu0 %566
    %568 = vrot.lane.b32.xlu0 %v246, 56
    %v569 = vpop.permute.xlu0 %568
    %v573 = vsel %vm343, %v564, 0
    %v576 = vsel %vm343, %v565, 0
    %578 = vmatprep.subr.mxu0 0.0
    %579 = vmatpush1.msra.mxu0 %v567
    %580 = vmatprep.subr.mxu0 0.0
    %581 = vmatpush1.msra.mxu0 %v569
    %582 = vmatprep.subr.mxu0 0.0
    %583 = vmatpush1.msra.mxu0 0.0
    %584 = vmatprep.subr.mxu0 0.0
    %585 = vmatpush1.msra.mxu0 0.0
    %586 = vmatprep.subr.mxu0 0.0
    %587 = vmatpush1.msra.mxu0 0.0
    %588 = vmatprep.subr.mxu0 0.0
    %589 = vmatpush1.msra.mxu0 0.0
    %590 = vmatprep.subr.mxu0 0.0
    %591 = vmatpush1.msra.mxu0 0.0
    %592 = vmatprep.subr.mxu0 0.0
    %593 = vmatpush1.msra.mxu0 0.0
    %594 = vmatprep.subr.mxu0 0.0
    %595 = vmatpush1.msra.mxu0 0.0
    %596 = vmatprep.subr.mxu0 0.0
    %597 = vmatpush1.msra.mxu0 0.0
    %598 = vmatprep.subr.mxu0 0.0
    %599 = vmatpush1.msra.mxu0 0.0
    %600 = vmatprep.subr.mxu0 0.0
    %601 = vmatpush1.msra.mxu0 0.0
    %602 = vmatprep.subr.mxu0 0.0
    %603 = vmatpush1.msra.mxu0 0.0
    %604 = vmatprep.subr.mxu0 0.0
    %605 = vmatpush1.msra.mxu0 0.0
    %606 = vmatprep.subr.mxu0 0.0
    %607 = vmatpush1.msra.mxu0 0.0
    %608 = vmatprep.subr.mxu0 0.0
    %609 = vmatpush1.msra.mxu0 0.0
    %610 = vmatprep.subr.mxu0 0.0
    %611 = vmatpush1.msra.mxu0 0.0
    %612 = vmatprep.subr.mxu0 0.0
    %613 = vmatpush1.msra.mxu0 0.0
    %614 = vmatprep.subr.mxu0 0.0
    %615 = vmatpush1.msra.mxu0 0.0
    %616 = vmatprep.subr.mxu0 0.0
    %617 = vmatpush1.msra.mxu0 0.0
    %618 = vmatprep.subr.mxu0 0.0
    %619 = vmatpush1.msra.mxu0 0.0
    %620 = vmatprep.subr.mxu0 0.0
    %621 = vmatpush1.msra.mxu0 0.0
    %622 = vmatprep.subr.mxu0 0.0
    %623 = vmatpush1.msra.mxu0 0.0
    %624 = vmatprep.subr.mxu0 0.0
    %625 = vmatpush1.msra.mxu0 0.0
    %626 = vmatprep.subr.mxu0 0.0
    %627 = vmatpush1.msra.mxu0 0.0
    %628 = vmatprep.subr.mxu0 0.0
    %629 = vmatpush1.msra.mxu0 0.0
    %630 = vmatprep.subr.mxu0 0.0
    %631 = vmatpush1.msra.mxu0 0.0
    %632 = vmatprep.subr.mxu0 0.0
    %633 = vmatpush1.msra.mxu0 0.0
    %634 = vmatprep.subr.mxu0 0.0
    %635 = vmatpush1.msra.mxu0 0.0
    %636 = vmatprep.subr.mxu0 0.0
    %637 = vmatpush1.msra.mxu0 0.0
    %638 = vmatprep.subr.mxu0 0.0
    %639 = vmatpush1.msra.mxu0 0.0
    %640 = vmatprep.subr.mxu0 0.0
    %641 = vmatpush1.msra.mxu0 0.0
    %642 = vmatprep.mubr.f32.mxu0 0.0
    %643 = vmatmul.mubr.f32.gmra.mrb[0].mxu0 %v573
    %v644 = vpop.f32.mrb[0].mxu0
    %v645 = vadd.f32 0.0, %v644
    %v646 = vpop.f32.mrb[0].mxu0
    %647 = vmatprep.mubr.f32.mxu0 0.0
    %648 = vmatmul.mubr.f32.gmra.mrb[0].mxu0 %v576
    %v649 = vpop.f32.mrb[0].mxu0
    %v650 = vadd.f32 0.0, %v649
    %v651 = vpop.f32.mrb[0].mxu0
    %652 = vdwg.mxu0
    %653 = vrot.lane.b32.xlu0 %v249, 112
    %v654 = vpop.permute.xlu0 %653
    %655 = vrot.lane.b32.xlu0 %v250, 112
    %v656 = vpop.permute.xlu0 %655
    %657 = vrot.lane.b32.xlu0 %v241, 80
    %v658 = vpop.permute.xlu0 %657
    %659 = vrot.lane.b32.xlu0 %v246, 80
    %v660 = vpop.permute.xlu0 %659
    %v661 = vsel %vm257, %v654, 0
    %v663 = vsel %vm257, %v656, 0
    %v665 = vsel %vm257, %v658, 0
    %v667 = vsel %vm257, %v660, 0
    %669 = vmatprep.subr.mxu0 0.0
    %670 = vmatpush1.xpose.msra.mxu0 %v665
    %671 = vmatprep.subr.mxu0 0.0
    %672 = vmatpush1.xpose.msra.mxu0 %v667
    %673 = vmatprep.subr.mxu0 0.0
    %674 = vmatpush1.xpose.msra.mxu0 0.0
    %675 = vmatprep.subr.mxu0 0.0
    %676 = vmatpush1.xpose.msra.mxu0 0.0
    %677 = vmatprep.subr.mxu0 0.0
    %678 = vmatpush1.xpose.msra.mxu0 0.0
    %679 = vmatprep.subr.mxu0 0.0
    %680 = vmatpush1.xpose.msra.mxu0 0.0
    %681 = vmatprep.subr.mxu0 0.0
    %682 = vmatpush1.xpose.msra.mxu0 0.0
    %683 = vmatprep.subr.mxu0 0.0
    %684 = vmatpush1.xpose.msra.mxu0 0.0
    %685 = vmatprep.subr.mxu0 0.0
    %686 = vmatpush1.xpose.msra.mxu0 0.0
    %687 = vmatprep.subr.mxu0 0.0
    %688 = vmatpush1.xpose.msra.mxu0 0.0
    %689 = vmatprep.subr.mxu0 0.0
    %690 = vmatpush1.xpose.msra.mxu0 0.0
    %691 = vmatprep.subr.mxu0 0.0
    %692 = vmatpush1.xpose.msra.mxu0 0.0
    %693 = vmatprep.subr.mxu0 0.0
    %694 = vmatpush1.xpose.msra.mxu0 0.0
    %695 = vmatprep.subr.mxu0 0.0
    %696 = vmatpush1.xpose.msra.mxu0 0.0
    %697 = vmatprep.subr.mxu0 0.0
    %698 = vmatpush1.xpose.msra.mxu0 0.0
    %699 = vmatprep.subr.mxu0 0.0
    %700 = vmatpush1.xpose.msra.mxu0 0.0
    %701 = vmatprep.subr.mxu0 0.0
    %702 = vmatpush1.xpose.msra.mxu0 0.0
    %703 = vmatprep.subr.mxu0 0.0
    %704 = vmatpush1.xpose.msra.mxu0 0.0
    %705 = vmatprep.subr.mxu0 0.0
    %706 = vmatpush1.xpose.msra.mxu0 0.0
    %707 = vmatprep.subr.mxu0 0.0
    %708 = vmatpush1.xpose.msra.mxu0 0.0
    %709 = vmatprep.subr.mxu0 0.0
    %710 = vmatpush1.xpose.msra.mxu0 0.0
    %711 = vmatprep.subr.mxu0 0.0
    %712 = vmatpush1.xpose.msra.mxu0 0.0
    %713 = vmatprep.subr.mxu0 0.0
    %714 = vmatpush1.xpose.msra.mxu0 0.0
    %715 = vmatprep.subr.mxu0 0.0
    %716 = vmatpush1.xpose.msra.mxu0 0.0
    %717 = vmatprep.subr.mxu0 0.0
    %718 = vmatpush1.xpose.msra.mxu0 0.0
    %719 = vmatprep.subr.mxu0 0.0
    %720 = vmatpush1.xpose.msra.mxu0 0.0
    %721 = vmatprep.subr.mxu0 0.0
    %722 = vmatpush1.xpose.msra.mxu0 0.0
    %723 = vmatprep.subr.mxu0 0.0
    %724 = vmatpush1.xpose.msra.mxu0 0.0
    %725 = vmatprep.subr.mxu0 0.0
    %726 = vmatpush1.xpose.msra.mxu0 0.0
    %727 = vmatprep.subr.mxu0 0.0
    %728 = vmatpush1.xpose.msra.mxu0 0.0
    %729 = vmatprep.subr.mxu0 0.0
    %730 = vmatpush1.xpose.msra.mxu0 0.0
    %731 = vmatprep.subr.mxu0 0.0
    %732 = vmatpush1.xpose.msra.mxu0 0.0
    %733 = vmatprep.mubr.f32.mxu0 0.0
    %734 = vmatmul.mubr.f32.gmra.mrb[0].mxu0 %v661
    %v735 = vpop.f32.mrb[0].mxu0
    %v736 = vadd.f32 %v107, %v735
    %v737 = vpop.f32.mrb[0].mxu0
    %738 = vmatprep.mubr.f32.mxu0 0.0
    %739 = vmatmul.mubr.f32.gmra.mrb[0].mxu0 %v663
    %v740 = vpop.f32.mrb[0].mxu0
    %v741 = vadd.f32 %v108, %v740
    %v742 = vpop.f32.mrb[0].mxu0
    %743 = vdwg.mxu0
    %v744 = vsel %vm343, %v736, -inf
    %745 = vmax.xlane.f32.xlu0 %v744
    %v746 = vpop.xlane.xlu0 %745
    %v747 = vsel %vm343, %v741, -inf
    %748 = vmax.xlane.f32.xlu0 %v747
    %v749 = vpop.xlane.xlu0 %748
    %v750 = vsub.f32 %v736, %v746
    %v751 = vsub.f32 %v741, %v749
    %v752 = vmul.f32 %v750, 1.442695
    %v753 = vpow.pop %v752
    %v754 = vmul.f32 %v751, 1.442695
    %v755 = vpow.pop %v754
    %v756 = vsel %vm343, %v753, 0.0
    %757 = vadd.xlane.f32.xlu0 %v756
    %v758 = vpop.xlane.xlu0 %757
    %v759 = vsel %vm343, %v755, 0.0
    %760 = vadd.xlane.f32.xlu0 %v759
    %v761 = vpop.xlane.xlu0 %760
    %v762 = vrcp.pop %v758
    %v763 = vrcp.pop %v761
    %v764 = vmul.f32 %v753, %v762
    %v765 = vmul.f32 %v755, %v763
    %766 = vrot.lane.b32.xlu0 %v241, 48
    %v767 = vpop.permute.xlu0 %766
    %768 = vrot.lane.b32.xlu0 %v246, 48
    %v769 = vpop.permute.xlu0 %768
    %v773 = vsel %vm343, %v764, 0
    %v776 = vsel %vm343, %v765, 0
    %778 = vmatprep.subr.mxu0 0.0
    %779 = vmatpush1.msra.mxu0 %v767
    %780 = vmatprep.subr.mxu0 0.0
    %781 = vmatpush1.msra.mxu0 %v769
    %782 = vmatprep.subr.mxu0 0.0
    %783 = vmatpush1.msra.mxu0 0.0
    %784 = vmatprep.subr.mxu0 0.0
    %785 = vmatpush1.msra.mxu0 0.0
    %786 = vmatprep.subr.mxu0 0.0
    %787 = vmatpush1.msra.mxu0 0.0
    %788 = vmatprep.subr.mxu0 0.0
    %789 = vmatpush1.msra.mxu0 0.0
    %790 = vmatprep.subr.mxu0 0.0
    %791 = vmatpush1.msra.mxu0 0.0
    %792 = vmatprep.subr.mxu0 0.0
    %793 = vmatpush1.msra.mxu0 0.0
    %794 = vmatprep.subr.mxu0 0.0
    %795 = vmatpush1.msra.mxu0 0.0
    %796 = vmatprep.subr.mxu0 0.0
    %797 = vmatpush1.msra.mxu0 0.0
    %798 = vmatprep.subr.mxu0 0.0
    %799 = vmatpush1.msra.mxu0 0.0
    %800 = vmatprep.subr.mxu0 0.0
    %801 = vmatpush1.msra.mxu0 0.0
    %802 = vmatprep.subr.mxu0 0.0
    %803 = vmatpush1.msra.mxu0 0.0
    %804 = vmatprep.subr.mxu0 0.0
    %805 = vmatpush1.msra.mxu0 0.0
    %806 = vmatprep.subr.mxu0 0.0
    %807 = vmatpush1.msra.mxu0 0.0
    %808 = vmatprep.subr.mxu0 0.0
    %809 = vmatpush1.msra.mxu0 0.0
    %810 = vmatprep.subr.mxu0 0.0
    %811 = vmatpush1.msra.mxu0 0.0
    %812 = vmatprep.subr.mxu0 0.0
    %813 = vmatpush1.msra.mxu0 0.0
    %814 = vmatprep.subr.mxu0 0.0
    %815 = vmatpush1.msra.mxu0 0.0
    %816 = vmatprep.subr.mxu0 0.0
    %817 = vmatpush1.msra.mxu0 0.0
    %818 = vmatprep.subr.mxu0 0.0
    %819 = vmatpush1.msra.mxu0 0.0
    %820 = vmatprep.subr.mxu0 0.0
    %821 = vmatpush1.msra.mxu0 0.0
    %822 = vmatprep.subr.mxu0 0.0
    %823 = vmatpush1.msra.mxu0 0.0
    %824 = vmatprep.subr.mxu0 0.0
    %825 = vmatpush1.msra.mxu0 0.0
    %826 = vmatprep.subr.mxu0 0.0
    %827 = vmatpush1.msra.mxu0 0.0
    %828 = vmatprep.subr.mxu0 0.0
    %829 = vmatpush1.msra.mxu0 0.0
    %830 = vmatprep.subr.mxu0 0.0
    %831 = vmatpush1.msra.mxu0 0.0
    %832 = vmatprep.subr.mxu0 0.0
    %833 = vmatpush1.msra.mxu0 0.0
    %834 = vmatprep.subr.mxu0 0.0
    %835 = vmatpush1.msra.mxu0 0.0
    %836 = vmatprep.subr.mxu0 0.0
    %837 = vmatpush1.msra.mxu0 0.0
    %838 = vmatprep.subr.mxu0 0.0
    %839 = vmatpush1.msra.mxu0 0.0
    %840 = vmatprep.subr.mxu0 0.0
    %841 = vmatpush1.msra.mxu0 0.0
    %842 = vmatprep.mubr.f32.mxu0 0.0
    %843 = vmatmul.mubr.f32.gmra.mrb[0].mxu0 %v773
    %v844 = vpop.f32.mrb[0].mxu0
    %v845 = vadd.f32 0.0, %v844
    %v846 = vpop.f32.mrb[0].mxu0
    %847 = vmatprep.mubr.f32.mxu0 0.0
    %848 = vmatmul.mubr.f32.gmra.mrb[0].mxu0 %v776
    %v849 = vpop.f32.mrb[0].mxu0
    %v850 = vadd.f32 0.0, %v849
    %v851 = vpop.f32.mrb[0].mxu0
    %852 = vdwg.mxu0
    %853 = vrot.lane.b32.xlu0 %v249, 104
    %v854 = vpop.permute.xlu0 %853
    %855 = vrot.lane.b32.xlu0 %v250, 104
    %v856 = vpop.permute.xlu0 %855
    %857 = vrot.lane.b32.xlu0 %v241, 72
    %v858 = vpop.permute.xlu0 %857
    %859 = vrot.lane.b32.xlu0 %v246, 72
    %v860 = vpop.permute.xlu0 %859
    %v861 = vsel %vm257, %v854, 0
    %v863 = vsel %vm257, %v856, 0
    %v865 = vsel %vm257, %v858, 0
    %v867 = vsel %vm257, %v860, 0
    %869 = vmatprep.subr.mxu0 0.0
    %870 = vmatpush1.xpose.msra.mxu0 %v865
    %871 = vmatprep.subr.mxu0 0.0
    %872 = vmatpush1.xpose.msra.mxu0 %v867
    %873 = vmatprep.subr.mxu0 0.0
    %874 = vmatpush1.xpose.msra.mxu0 0.0
    %875 = vmatprep.subr.mxu0 0.0
    %876 = vmatpush1.xpose.msra.mxu0 0.0
    %877 = vmatprep.subr.mxu0 0.0
    %878 = vmatpush1.xpose.msra.mxu0 0.0
    %879 = vmatprep.subr.mxu0 0.0
    %880 = vmatpush1.xpose.msra.mxu0 0.0
    %881 = vmatprep.subr.mxu0 0.0
    %882 = vmatpush1.xpose.msra.mxu0 0.0
    %883 = vmatprep.subr.mxu0 0.0
    %884 = vmatpush1.xpose.msra.mxu0 0.0
    %885 = vmatprep.subr.mxu0 0.0
    %886 = vmatpush1.xpose.msra.mxu0 0.0
    %887 = vmatprep.subr.mxu0 0.0
    %888 = vmatpush1.xpose.msra.mxu0 0.0
    %889 = vmatprep.subr.mxu0 0.0
    %890 = vmatpush1.xpose.msra.mxu0 0.0
    %891 = vmatprep.subr.mxu0 0.0
    %892 = vmatpush1.xpose.msra.mxu0 0.0
    %893 = vmatprep.subr.mxu0 0.0
    %894 = vmatpush1.xpose.msra.mxu0 0.0
    %895 = vmatprep.subr.mxu0 0.0
    %896 = vmatpush1.xpose.msra.mxu0 0.0
    %897 = vmatprep.subr.mxu0 0.0
    %898 = vmatpush1.xpose.msra.mxu0 0.0
    %899 = vmatprep.subr.mxu0 0.0
    %900 = vmatpush1.xpose.msra.mxu0 0.0
    %901 = vmatprep.subr.mxu0 0.0
    %902 = vmatpush1.xpose.msra.mxu0 0.0
    %903 = vmatprep.subr.mxu0 0.0
    %904 = vmatpush1.xpose.msra.mxu0 0.0
    %905 = vmatprep.subr.mxu0 0.0
    %906 = vmatpush1.xpose.msra.mxu0 0.0
    %907 = vmatprep.subr.mxu0 0.0
    %908 = vmatpush1.xpose.msra.mxu0 0.0
    %909 = vmatprep.subr.mxu0 0.0
    %910 = vmatpush1.xpose.msra.mxu0 0.0
    %911 = vmatprep.subr.mxu0 0.0
    %912 = vmatpush1.xpose.msra.mxu0 0.0
    %913 = vmatprep.subr.mxu0 0.0
    %914 = vmatpush1.xpose.msra.mxu0 0.0
    %915 = vmatprep.subr.mxu0 0.0
    %916 = vmatpush1.xpose.msra.mxu0 0.0
    %917 = vmatprep.subr.mxu0 0.0
    %918 = vmatpush1.xpose.msra.mxu0 0.0
    %919 = vmatprep.subr.mxu0 0.0
    %920 = vmatpush1.xpose.msra.mxu0 0.0
    %921 = vmatprep.subr.mxu0 0.0
    %922 = vmatpush1.xpose.msra.mxu0 0.0
    %923 = vmatprep.subr.mxu0 0.0
    %924 = vmatpush1.xpose.msra.mxu0 0.0
    %925 = vmatprep.subr.mxu0 0.0
    %926 = vmatpush1.xpose.msra.mxu0 0.0
    %927 = vmatprep.subr.mxu0 0.0
    %928 = vmatpush1.xpose.msra.mxu0 0.0
    %929 = vmatprep.subr.mxu0 0.0
    %930 = vmatpush1.xpose.msra.mxu0 0.0
    %931 = vmatprep.subr.mxu0 0.0
    %932 = vmatpush1.xpose.msra.mxu0 0.0
    %933 = vmatprep.mubr.f32.mxu0 0.0
    %934 = vmatmul.mubr.f32.gmra.mrb[0].mxu0 %v861
    %v935 = vpop.f32.mrb[0].mxu0
    %v936 = vadd.f32 %v107, %v935
    %v937 = vpop.f32.mrb[0].mxu0
    %938 = vmatprep.mubr.f32.mxu0 0.0
    %939 = vmatmul.mubr.f32.gmra.mrb[0].mxu0 %v863
    %v940 = vpop.f32.mrb[0].mxu0
    %v941 = vadd.f32 %v108, %v940
    %v942 = vpop.f32.mrb[0].mxu0
    %943 = vdwg.mxu0
    %v944 = vsel %vm343, %v936, -inf
    %945 = vmax.xlane.f32.xlu0 %v944
    %v946 = vpop.xlane.xlu0 %945
    %v947 = vsel %vm343, %v941, -inf
    %948 = vmax.xlane.f32.xlu0 %v947
    %v949 = vpop.xlane.xlu0 %948
    %v950 = vsub.f32 %v936, %v946
    %v951 = vsub.f32 %v941, %v949
    %v952 = vmul.f32 %v950, 1.442695
    %v953 = vpow.pop %v952
    %v954 = vmul.f32 %v951, 1.442695
    %v955 = vpow.pop %v954
    %v956 = vsel %vm343, %v953, 0.0
    %957 = vadd.xlane.f32.xlu0 %v956
    %v958 = vpop.xlane.xlu0 %957
    %v959 = vsel %vm343, %v955, 0.0
    %960 = vadd.xlane.f32.xlu0 %v959
    %v961 = vpop.xlane.xlu0 %960
    %v962 = vrcp.pop %v958
    %v963 = vrcp.pop %v961
    %v964 = vmul.f32 %v953, %v962
    %v965 = vmul.f32 %v955, %v963
    %966 = vrot.lane.b32.xlu0 %v241, 40
    %v967 = vpop.permute.xlu0 %966
    %968 = vrot.lane.b32.xlu0 %v246, 40
    %v969 = vpop.permute.xlu0 %968
    %v973 = vsel %vm343, %v964, 0
    %v976 = vsel %vm343, %v965, 0
    %978 = vmatprep.subr.mxu0 0.0
    %979 = vmatpush1.msra.mxu0 %v967
    %980 = vmatprep.subr.mxu0 0.0
    %981 = vmatpush1.msra.mxu0 %v969
    %982 = vmatprep.subr.mxu0 0.0
    %983 = vmatpush1.msra.mxu0 0.0
    %984 = vmatprep.subr.mxu0 0.0
    %985 = vmatpush1.msra.mxu0 0.0
    %986 = vmatprep.subr.mxu0 0.0
    %987 = vmatpush1.msra.mxu0 0.0
    %988 = vmatprep.subr.mxu0 0.0
    %989 = vmatpush1.msra.mxu0 0.0
    %990 = vmatprep.subr.mxu0 0.0
    %991 = vmatpush1.msra.mxu0 0.0
    %992 = vmatprep.subr.mxu0 0.0
    %993 = vmatpush1.msra.mxu0 0.0
    %994 = vmatprep.subr.mxu0 0.0
    %995 = vmatpush1.msra.mxu0 0.0
    %996 = vmatprep.subr.mxu0 0.0
    %997 = vmatpush1.msra.mxu0 0.0
    %998 = vmatprep.subr.mxu0 0.0
    %999 = vmatpush1.msra.mxu0 0.0
    %1000 = vmatprep.subr.mxu0 0.0
    %1001 = vmatpush1.msra.mxu0 0.0
    %1002 = vmatprep.subr.mxu0 0.0
    %1003 = vmatpush1.msra.mxu0 0.0
    %1004 = vmatprep.subr.mxu0 0.0
    %1005 = vmatpush1.msra.mxu0 0.0
    %1006 = vmatprep.subr.mxu0 0.0
    %1007 = vmatpush1.msra.mxu0 0.0
    %1008 = vmatprep.subr.mxu0 0.0
    %1009 = vmatpush1.msra.mxu0 0.0
    %1010 = vmatprep.subr.mxu0 0.0
    %1011 = vmatpush1.msra.mxu0 0.0
    %1012 = vmatprep.subr.mxu0 0.0
    %1013 = vmatpush1.msra.mxu0 0.0
    %1014 = vmatprep.subr.mxu0 0.0
    %1015 = vmatpush1.msra.mxu0 0.0
    %1016 = vmatprep.subr.mxu0 0.0
    %1017 = vmatpush1.msra.mxu0 0.0
    %1018 = vmatprep.subr.mxu0 0.0
    %1019 = vmatpush1.msra.mxu0 0.0
    %1020 = vmatprep.subr.mxu0 0.0
    %1021 = vmatpush1.msra.mxu0 0.0
    %1022 = vmatprep.subr.mxu0 0.0
    %1023 = vmatpush1.msra.mxu0 0.0
    %1024 = vmatprep.subr.mxu0 0.0
    %1025 = vmatpush1.msra.mxu0 0.0
    %1026 = vmatprep.subr.mxu0 0.0
    %1027 = vmatpush1.msra.mxu0 0.0
    %1028 = vmatprep.subr.mxu0 0.0
    %1029 = vmatpush1.msra.mxu0 0.0
    %1030 = vmatprep.subr.mxu0 0.0
    %1031 = vmatpush1.msra.mxu0 0.0
    %1032 = vmatprep.subr.mxu0 0.0
    %1033 = vmatpush1.msra.mxu0 0.0
    %1034 = vmatprep.subr.mxu0 0.0
    %1035 = vmatpush1.msra.mxu0 0.0
    %1036 = vmatprep.subr.mxu0 0.0
    %1037 = vmatpush1.msra.mxu0 0.0
    %1038 = vmatprep.subr.mxu0 0.0
    %1039 = vmatpush1.msra.mxu0 0.0
    %1040 = vmatprep.subr.mxu0 0.0
    %1041 = vmatpush1.msra.mxu0 0.0
    %1042 = vmatprep.mubr.f32.mxu0 0.0
    %1043 = vmatmul.mubr.f32.gmra.mrb[0].mxu0 %v973
    %v1044 = vpop.f32.mrb[0].mxu0
    %v1045 = vadd.f32 0.0, %v1044
    %v1046 = vpop.f32.mrb[0].mxu0
    %1047 = vmatprep.mubr.f32.mxu0 0.0
    %1048 = vmatmul.mubr.f32.gmra.mrb[0].mxu0 %v976
    %v1049 = vpop.f32.mrb[0].mxu0
    %v1050 = vadd.f32 0.0, %v1049
    %v1051 = vpop.f32.mrb[0].mxu0
    %1052 = vdwg.mxu0
    %1055 = vrot.lane.b32.xlu0 %v645, 8
    %v1056 = vpop.permute.xlu0 %1055
    %1057 = vrot.lane.b32.xlu0 %v650, 8
    %v1058 = vpop.permute.xlu0 %1057
    %1063 = vrot.lane.b32.xlu0 %v845, 16
    %v1064 = vpop.permute.xlu0 %1063
    %1065 = vrot.lane.b32.xlu0 %v850, 16
    %v1066 = vpop.permute.xlu0 %1065
    %1071 = vrot.lane.b32.xlu0 %v1045, 24
    %v1072 = vpop.permute.xlu0 %1071
    %1073 = vrot.lane.b32.xlu0 %v1050, 24
    %v1074 = vpop.permute.xlu0 %1073
    %v1077 = vsel %vm257, %v445, %v1056
    %v1078 = vsel %vm257, %v450, %v1058
    %v1079 = vsel %vm343, %v1077, %v1064
    %v1080 = vsel %vm343, %v1078, %v1066
    %vm1081 = vcmask 195584
    %v1082 = vsel %vm1081, %v1079, %v1072
    %v1083 = vsel %vm1081, %v1080, %v1074
    %v1084 = vld [vmem:[#allocation2] sm:$0xff]
    %v1085 = vld [vmem:[#allocation2 + $0x8] sm:$0xff]
    %v1086 = vld [vmem:[#allocation2 + $0x10] sm:$0xff]
    %v1087 = vld [vmem:[#allocation2 + $0x18] sm:$0xff]
    %v1088 = vld [vmem:[%s7] sm:$0x1]
    %v1090 = vlaneseq
    %v1091 = vshrl.u32 %v1090, 7
    %v1092 = vsub.s32 0, %v1091
    %v1093 = vrot.slane %v1088, %v1092
    %v1096 = vsel %vm113, %v1082, 0
    %v1099 = vsel %vm113, %v1083, 0
    %1101 = vmatprep.subr.mxu0 0.0
    %1102 = vmatpush1.msra.mxu0 %v1084
    %1103 = vmatprep.subr.mxu0 0.0
    %1104 = vmatpush1.msra.mxu0 %v1085
    %1105 = vmatprep.subr.mxu0 0.0
    %1106 = vmatpush1.msra.mxu0 %v1086
    %1107 = vmatprep.subr.mxu0 0.0
    %1108 = vmatpush1.msra.mxu0 %v1087
    %1109 = vmatprep.subr.mxu0 0.0
    %1110 = vmatpush1.msra.mxu0 0.0
    %1111 = vmatprep.subr.mxu0 0.0
    %1112 = vmatpush1.msra.mxu0 0.0
    %1113 = vmatprep.subr.mxu0 0.0
    %1114 = vmatpush1.msra.mxu0 0.0
    %1115 = vmatprep.subr.mxu0 0.0
    %1116 = vmatpush1.msra.mxu0 0.0
    %1117 = vmatprep.subr.mxu0 0.0
    %1118 = vmatpush1.msra.mxu0 0.0
    %1119 = vmatprep.subr.mxu0 0.0
    %1120 = vmatpush1.msra.mxu0 0.0
    %1121 = vmatprep.subr.mxu0 0.0
    %1122 = vmatpush1.msra.mxu0 0.0
    %1123 = vmatprep.subr.mxu0 0.0
    %1124 = vmatpush1.msra.mxu0 0.0
    %1125 = vmatprep.subr.mxu0 0.0
    %1126 = vmatpush1.msra.mxu0 0.0
    %1127 = vmatprep.subr.mxu0 0.0
    %1128 = vmatpush1.msra.mxu0 0.0
    %1129 = vmatprep.subr.mxu0 0.0
    %1130 = vmatpush1.msra.mxu0 0.0
    %1131 = vmatprep.subr.mxu0 0.0
    %1132 = vmatpush1.msra.mxu0 0.0
    %1133 = vmatprep.subr.mxu0 0.0
    %1134 = vmatpush1.msra.mxu0 0.0
    %1135 = vmatprep.subr.mxu0 0.0
    %1136 = vmatpush1.msra.mxu0 0.0
    %1137 = vmatprep.subr.mxu0 0.0
    %1138 = vmatpush1.msra.mxu0 0.0
    %1139 = vmatprep.subr.mxu0 0.0
    %1140 = vmatpush1.msra.mxu0 0.0
    %1141 = vmatprep.subr.mxu0 0.0
    %1142 = vmatpush1.msra.mxu0 0.0
    %1143 = vmatprep.subr.mxu0 0.0
    %1144 = vmatpush1.msra.mxu0 0.0
    %1145 = vmatprep.subr.mxu0 0.0
    %1146 = vmatpush1.msra.mxu0 0.0
    %1147 = vmatprep.subr.mxu0 0.0
    %1148 = vmatpush1.msra.mxu0 0.0
    %1149 = vmatprep.subr.mxu0 0.0
    %1150 = vmatpush1.msra.mxu0 0.0
    %1151 = vmatprep.subr.mxu0 0.0
    %1152 = vmatpush1.msra.mxu0 0.0
    %1153 = vmatprep.subr.mxu0 0.0
    %1154 = vmatpush1.msra.mxu0 0.0
    %1155 = vmatprep.subr.mxu0 0.0
    %1156 = vmatpush1.msra.mxu0 0.0
    %1157 = vmatprep.subr.mxu0 0.0
    %1158 = vmatpush1.msra.mxu0 0.0
    %1159 = vmatprep.subr.mxu0 0.0
    %1160 = vmatpush1.msra.mxu0 0.0
    %1161 = vmatprep.subr.mxu0 0.0
    %1162 = vmatpush1.msra.mxu0 0.0
    %1163 = vmatprep.subr.mxu0 0.0
    %1164 = vmatpush1.msra.mxu0 0.0
    %1165 = vmatprep.mubr.f32.mxu0 0.0
    %1166 = vmatmul.mubr.f32.gmra.mrb[0].mxu0 %v1096
    %v1167 = vpop.f32.mrb[0].mxu0
    %v1168 = vadd.f32 %v1093, %v1167
    %v1169 = vpop.f32.mrb[0].mxu0
    %1170 = vmatprep.mubr.f32.mxu0 0.0
    %1171 = vmatmul.mubr.f32.gmra.mrb[0].mxu0 %v1099
    %v1172 = vpop.f32.mrb[0].mxu0
    %v1173 = vadd.f32 %v1093, %v1172
    %v1174 = vpop.f32.mrb[0].mxu0
    %1175 = vdwg.mxu0
    %v1176 = vadd.f32 %v155, %v1168
    %v1177 = vadd.f32 %v156, %v1173
    %v1178 = vld [vmem:[%s8] sm:$0x1]
    %v1179 = vld [vmem:[%s9] sm:$0x1]
    %v1180 = vsel %vm113, %v1176, 0.0
    %1181 = vadd.xlane.f32.xlu0 %v1180
    %v1182 = vpop.xlane.xlu0 %1181
    %v1183 = vsel %vm113, %v1177, 0.0
    %1184 = vadd.xlane.f32.xlu0 %v1183
    %v1185 = vpop.xlane.xlu0 %1184
    %v1186 = vmul.f32 %v1182, %v120
    %v1187 = vmul.f32 %v1185, %v120
    %v1188 = vsub.f32 %v1176, %v1186
    %v1189 = vsub.f32 %v1177, %v1187
    %v1190 = vmul.f32 %v1188, %v1188
    %v1191 = vmul.f32 %v1189, %v1189
    %v1192 = vsel %vm113, %v1190, 0.0
    %1193 = vadd.xlane.f32.xlu0 %v1192
    %v1194 = vpop.xlane.xlu0 %1193
    %v1195 = vsel %vm113, %v1191, 0.0
    %1196 = vadd.xlane.f32.xlu0 %v1195
    %v1197 = vpop.xlane.xlu0 %1196
    %v1198 = vmul.f32 %v1194, %v120
    %v1199 = vmul.f32 %v1197, %v120
    %v1200 = vadd.f32 %v1198, 1e-12
    %v1201 = vadd.f32 %v1199, 1e-12
    %v1202 = vrsqrt.pop %v1200
    %v1203 = vrsqrt.pop %v1201
    %v1204 = vmul.f32 %v1188, %v1202
    %v1205 = vmul.f32 %v1189, %v1203
    %v1207 = vlaneseq
    %v1208 = vshrl.u32 %v1207, 7
    %v1209 = vsub.s32 0, %v1208
    %v1210 = vrot.slane %v1178, %v1209
    %v1212 = vmul.f32 %v1204, %v1210
    %v1213 = vmul.f32 %v1205, %v1210
    %v1215 = vlaneseq
    %v1216 = vshrl.u32 %v1215, 7
    %v1217 = vsub.s32 0, %v1216
    %v1218 = vrot.slane %v1179, %v1217
    %v1220 = vadd.f32 %v1212, %v1218
    %v1221 = vadd.f32 %v1213, %v1218
    %v1222 = vld [vmem:[#allocation5] sm:$0xff]
    %v1223 = vld [vmem:[#allocation5 + $0x8] sm:$0xff]
    %v1224 = vld [vmem:[#allocation5 + $0x10] sm:$0xff]
    %v1225 = vld [vmem:[#allocation5 + $0x18] sm:$0xff]
    %v1226 = vld [vmem:[%s11] sm:$0x1]
    %v1228 = vlaneseq
    %v1229 = vshrl.u32 %v1228, 7
    %v1230 = vsub.s32 0, %v1229
    %v1231 = vrot.slane %v1226, %v1230
    %v1234 = vsel %vm113, %v1220, 0
    %v1237 = vsel %vm113, %v1221, 0
    %1239 = vmatprep.subr.mxu0 0.0
    %1240 = vmatpush1.msra.mxu0 %v1222
    %1241 = vmatprep.subr.mxu0 0.0
    %1242 = vmatpush1.msra.mxu0 %v1223
    %1243 = vmatprep.subr.mxu0 0.0
    %1244 = vmatpush1.msra.mxu0 %v1224
    %1245 = vmatprep.subr.mxu0 0.0
    %1246 = vmatpush1.msra.mxu0 %v1225
    %1247 = vmatprep.subr.mxu0 0.0
    %1248 = vmatpush1.msra.mxu0 0.0
    %1249 = vmatprep.subr.mxu0 0.0
    %1250 = vmatpush1.msra.mxu0 0.0
    %1251 = vmatprep.subr.mxu0 0.0
    %1252 = vmatpush1.msra.mxu0 0.0
    %1253 = vmatprep.subr.mxu0 0.0
    %1254 = vmatpush1.msra.mxu0 0.0
    %1255 = vmatprep.subr.mxu0 0.0
    %1256 = vmatpush1.msra.mxu0 0.0
    %1257 = vmatprep.subr.mxu0 0.0
    %1258 = vmatpush1.msra.mxu0 0.0
    %1259 = vmatprep.subr.mxu0 0.0
    %1260 = vmatpush1.msra.mxu0 0.0
    %1261 = vmatprep.subr.mxu0 0.0
    %1262 = vmatpush1.msra.mxu0 0.0
    %1263 = vmatprep.subr.mxu0 0.0
    %1264 = vmatpush1.msra.mxu0 0.0
    %1265 = vmatprep.subr.mxu0 0.0
    %1266 = vmatpush1.msra.mxu0 0.0
    %1267 = vmatprep.subr.mxu0 0.0
    %1268 = vmatpush1.msra.mxu0 0.0
    %1269 = vmatprep.subr.mxu0 0.0
    %1270 = vmatpush1.msra.mxu0 0.0
    %1271 = vmatprep.subr.mxu0 0.0
    %1272 = vmatpush1.msra.mxu0 0.0
    %1273 = vmatprep.subr.mxu0 0.0
    %1274 = vmatpush1.msra.mxu0 0.0
    %1275 = vmatprep.subr.mxu0 0.0
    %1276 = vmatpush1.msra.mxu0 0.0
    %1277 = vmatprep.subr.mxu0 0.0
    %1278 = vmatpush1.msra.mxu0 0.0
    %1279 = vmatprep.subr.mxu0 0.0
    %1280 = vmatpush1.msra.mxu0 0.0
    %1281 = vmatprep.subr.mxu0 0.0
    %1282 = vmatpush1.msra.mxu0 0.0
    %1283 = vmatprep.subr.mxu0 0.0
    %1284 = vmatpush1.msra.mxu0 0.0
    %1285 = vmatprep.subr.mxu0 0.0
    %1286 = vmatpush1.msra.mxu0 0.0
    %1287 = vmatprep.subr.mxu0 0.0
    %1288 = vmatpush1.msra.mxu0 0.0
    %1289 = vmatprep.subr.mxu0 0.0
    %1290 = vmatpush1.msra.mxu0 0.0
    %1291 = vmatprep.subr.mxu0 0.0
    %1292 = vmatpush1.msra.mxu0 0.0
    %1293 = vmatprep.subr.mxu0 0.0
    %1294 = vmatpush1.msra.mxu0 0.0
    %1295 = vmatprep.subr.mxu0 0.0
    %1296 = vmatpush1.msra.mxu0 0.0
    %1297 = vmatprep.subr.mxu0 0.0
    %1298 = vmatpush1.msra.mxu0 0.0
    %1299 = vmatprep.subr.mxu0 0.0
    %1300 = vmatpush1.msra.mxu0 0.0
    %1301 = vmatprep.subr.mxu0 0.0
    %1302 = vmatpush1.msra.mxu0 0.0
    %1303 = vmatprep.mubr.f32.mxu0 0.0
    %1304 = vmatmul.mubr.f32.gmra.mrb[0].mxu0 %v1234
    %v1305 = vpop.f32.mrb[0].mxu0
    %v1306 = vadd.f32 %v1231, %v1305
    %v1307 = vpop.f32.mrb[0].mxu0
    %1308 = vmatprep.mubr.f32.mxu0 0.0
    %1309 = vmatmul.mubr.f32.gmra.mrb[0].mxu0 %v1237
    %v1310 = vpop.f32.mrb[0].mxu0
    %v1311 = vadd.f32 %v1231, %v1310
    %v1312 = vpop.f32.mrb[0].mxu0
    %1313 = vdwg.mxu0
    %v1314 = vmul.f32 %v1306, 0.5
    %v1315 = vmul.f32 %v1311, 0.5
    %v1316 = vmul.f32 %v1306, 0.044715
    %v1317 = vmul.f32 %v1311, 0.044715
    %v1318 = vmul.f32 %v1316, %v1306
    %v1319 = vmul.f32 %v1317, %v1311
    %v1320 = vmul.f32 %v1318, %v1306
    %v1321 = vmul.f32 %v1319, %v1311
    %v1322 = vadd.f32 %v1306, %v1320
    %v1323 = vadd.f32 %v1311, %v1321
    %v1324 = vmul.f32 %v1322, 0.7978846
    %v1325 = vmul.f32 %v1323, 0.7978846
    %v1326 = vtanh.pop %v1324
    %v1327 = vtanh.pop %v1325
    %v1328 = vadd.f32 %v1326, 1.0
    %v1329 = vadd.f32 %v1327, 1.0
    %v1330 = vmul.f32 %v1314, %v1328
    %v1331 = vmul.f32 %v1315, %v1329
    %v1332 = vld [vmem:[%s12] sm:$0xff]
    %v1333 = vld [vmem:[%s12 + $0x8] sm:$0xff]
    %v1334 = vld [vmem:[%s12 + $0x10] sm:$0xff]
    %v1335 = vld [vmem:[%s12 + $0x18] sm:$0xff]
    %v1336 = vld [vmem:[%s12 + $0x20] sm:$0xff]
    %v1337 = vld [vmem:[%s12 + $0x28] sm:$0xff]
    %v1338 = vld [vmem:[%s12 + $0x30] sm:$0xff]
    %v1339 = vld [vmem:[%s12 + $0x38] sm:$0xff]
    %v1340 = vld [vmem:[%s13] sm:$0x1]
    %v1342 = vlaneseq
    %v1343 = vshrl.u32 %v1342, 7
    %v1344 = vsub.s32 0, %v1343
    %v1345 = vrot.slane %v1340, %v1344
    %vm1347 = vcmask 523264
    %v1349 = vsel %vm1347, %v1330, 0
    %v1352 = vsel %vm1347, %v1331, 0
    %1354 = vmatprep.subr.mxu0 0.0
    %1355 = vmatpush1.msra.mxu0 %v1332
    %1356 = vmatprep.subr.mxu0 0.0
    %1357 = vmatpush1.msra.mxu0 %v1333
    %1358 = vmatprep.subr.mxu0 0.0
    %1359 = vmatpush1.msra.mxu0 %v1334
    %1360 = vmatprep.subr.mxu0 0.0
    %1361 = vmatpush1.msra.mxu0 %v1335
    %1362 = vmatprep.subr.mxu0 0.0
    %1363 = vmatpush1.msra.mxu0 %v1336
    %1364 = vmatprep.subr.mxu0 0.0
    %1365 = vmatpush1.msra.mxu0 %v1337
    %1366 = vmatprep.subr.mxu0 0.0
    %1367 = vmatpush1.msra.mxu0 %v1338
    %1368 = vmatprep.subr.mxu0 0.0
    %1369 = vmatpush1.msra.mxu0 %v1339
    %1370 = vmatprep.subr.mxu0 0.0
    %1371 = vmatpush1.msra.mxu0 0.0
    %1372 = vmatprep.subr.mxu0 0.0
    %1373 = vmatpush1.msra.mxu0 0.0
    %1374 = vmatprep.subr.mxu0 0.0
    %1375 = vmatpush1.msra.mxu0 0.0
    %1376 = vmatprep.subr.mxu0 0.0
    %1377 = vmatpush1.msra.mxu0 0.0
    %1378 = vmatprep.subr.mxu0 0.0
    %1379 = vmatpush1.msra.mxu0 0.0
    %1380 = vmatprep.subr.mxu0 0.0
    %1381 = vmatpush1.msra.mxu0 0.0
    %1382 = vmatprep.subr.mxu0 0.0
    %1383 = vmatpush1.msra.mxu0 0.0
    %1384 = vmatprep.subr.mxu0 0.0
    %1385 = vmatpush1.msra.mxu0 0.0
    %1386 = vmatprep.subr.mxu0 0.0
    %1387 = vmatpush1.msra.mxu0 0.0
    %1388 = vmatprep.subr.mxu0 0.0
    %1389 = vmatpush1.msra.mxu0 0.0
    %1390 = vmatprep.subr.mxu0 0.0
    %1391 = vmatpush1.msra.mxu0 0.0
    %1392 = vmatprep.subr.mxu0 0.0
    %1393 = vmatpush1.msra.mxu0 0.0
    %1394 = vmatprep.subr.mxu0 0.0
    %1395 = vmatpush1.msra.mxu0 0.0
    %1396 = vmatprep.subr.mxu0 0.0
    %1397 = vmatpush1.msra.mxu0 0.0
    %1398 = vmatprep.subr.mxu0 0.0
    %1399 = vmatpush1.msra.mxu0 0.0
    %1400 = vmatprep.subr.mxu0 0.0
    %1401 = vmatpush1.msra.mxu0 0.0
    %1402 = vmatprep.subr.mxu0 0.0
    %1403 = vmatpush1.msra.mxu0 0.0
    %1404 = vmatprep.subr.mxu0 0.0
    %1405 = vmatpush1.msra.mxu0 0.0
    %1406 = vmatprep.subr.mxu0 0.0
    %1407 = vmatpush1.msra.mxu0 0.0
    %1408 = vmatprep.subr.mxu0 0.0
    %1409 = vmatpush1.msra.mxu0 0.0
    %1410 = vmatprep.subr.mxu0 0.0
    %1411 = vmatpush1.msra.mxu0 0.0
    %1412 = vmatprep.subr.mxu0 0.0
    %1413 = vmatpush1.msra.mxu0 0.0
    %1414 = vmatprep.subr.mxu0 0.0
    %1415 = vmatpush1.msra.mxu0 0.0
    %1416 = vmatprep.subr.mxu0 0.0
    %1417 = vmatpush1.msra.mxu0 0.0
    %1418 = vmatprep.mubr.f32.mxu0 0.0
    %1419 = vmatmul.mubr.f32.gmra.mrb[0].mxu0 %v1349
    %v1420 = vpop.f32.mrb[0].mxu0
    %v1421 = vadd.f32 %v1345, %v1420
    %v1422 = vpop.f32.mrb[0].mxu0
    %1423 = vmatprep.mubr.f32.mxu0 0.0
    %1424 = vmatmul.mubr.f32.gmra.mrb[0].mxu0 %v1352
    %v1425 = vpop.f32.mrb[0].mxu0
    %v1426 = vadd.f32 %v1345, %v1425
    %v1427 = vpop.f32.mrb[0].mxu0
    %1428 = vdwg.mxu0
    %v1429 = vadd.f32 %v1220, %v1421
    %v1430 = vadd.f32 %v1221, %v1426
    %v1431 = vld [vmem:[%s14] sm:$0x1]
    %v1432 = vld [vmem:[%s15] sm:$0x1]
    %v1433 = vsel %vm113, %v1429, 0.0
    %1434 = vadd.xlane.f32.xlu0 %v1433
    %v1435 = vpop.xlane.xlu0 %1434
    %v1436 = vsel %vm113, %v1430, 0.0
    %1437 = vadd.xlane.f32.xlu0 %v1436
    %v1438 = vpop.xlane.xlu0 %1437
    %v1439 = vmul.f32 %v1435, %v120
    %v1440 = vmul.f32 %v1438, %v120
    %v1441 = vsub.f32 %v1429, %v1439
    %v1442 = vsub.f32 %v1430, %v1440
    %v1443 = vmul.f32 %v1441, %v1441
    %v1444 = vmul.f32 %v1442, %v1442
    %v1445 = vsel %vm113, %v1443, 0.0
    %1446 = vadd.xlane.f32.xlu0 %v1445
    %v1447 = vpop.xlane.xlu0 %1446
    %v1448 = vsel %vm113, %v1444, 0.0
    %1449 = vadd.xlane.f32.xlu0 %v1448
    %v1450 = vpop.xlane.xlu0 %1449
    %v1451 = vmul.f32 %v1447, %v120
    %v1452 = vmul.f32 %v1450, %v120
    %v1453 = vadd.f32 %v1451, 1e-12
    %v1454 = vadd.f32 %v1452, 1e-12
    %v1455 = vrsqrt.pop %v1453
    %v1456 = vrsqrt.pop %v1454
    %v1457 = vmul.f32 %v1441, %v1455
    %v1458 = vmul.f32 %v1442, %v1456
    %v1460 = vlaneseq
    %v1461 = vshrl.u32 %v1460, 7
    %v1462 = vsub.s32 0, %v1461
    %v1463 = vrot.slane %v1431, %v1462
    %v1465 = vmul.f32 %v1457, %v1463
    %v1466 = vmul.f32 %v1458, %v1463
    %v1468 = vlaneseq
    %v1469 = vshrl.u32 %v1468, 7
    %v1470 = vsub.s32 0, %v1469
    %v1471 = vrot.slane %v1432, %v1470
    %v1473 = vadd.f32 %v1465, %v1471
    %v1474 = vadd.f32 %v1466, %v1471
    %s1475 = scalar_lea.vmem %s4, 32
    %v1476 = vld [vmem:[%s1475] sm:$0xff]
    %v1477 = vld [vmem:[%s1475 + $0x8] sm:$0xff]
    %v1478 = vld [vmem:[%s1475 + $0x10] sm:$0xff]
    %v1479 = vld [vmem:[%s1475 + $0x18] sm:$0xff]
    %s1480 = scalar_lea.vmem %s5, 1
    %v1481 = vld [vmem:[%s1480] sm:$0x1]
    %v1483 = vlaneseq
    %v1484 = vshrl.u32 %v1483, 7
    %v1485 = vsub.s32 0, %v1484
    %v1486 = vrot.slane %v1481, %v1485
    %v1489 = vsel %vm113, %v1473, 0
    %v1492 = vsel %vm113, %v1474, 0
    %1494 = vmatprep.subr.mxu0 0.0
    %1495 = vmatpush1.msra.mxu0 %v1476
    %1496 = vmatprep.subr.mxu0 0.0
    %1497 = vmatpush1.msra.mxu0 %v1477
    %1498 = vmatprep.subr.mxu0 0.0
    %1499 = vmatpush1.msra.mxu0 %v1478
    %1500 = vmatprep.subr.mxu0 0.0
    %1501 = vmatpush1.msra.mxu0 %v1479
    %1502 = vmatprep.subr.mxu0 0.0
    %1503 = vmatpush1.msra.mxu0 0.0
    %1504 = vmatprep.subr.mxu0 0.0
    %1505 = vmatpush1.msra.mxu0 0.0
    %1506 = vmatprep.subr.mxu0 0.0
    %1507 = vmatpush1.msra.mxu0 0.0
    %1508 = vmatprep.subr.mxu0 0.0
    %1509 = vmatpush1.msra.mxu0 0.0
    %1510 = vmatprep.subr.mxu0 0.0
    %1511 = vmatpush1.msra.mxu0 0.0
    %1512 = vmatprep.subr.mxu0 0.0
    %1513 = vmatpush1.msra.mxu0 0.0
    %1514 = vmatprep.subr.mxu0 0.0
    %1515 = vmatpush1.msra.mxu0 0.0
    %1516 = vmatprep.subr.mxu0 0.0
    %1517 = vmatpush1.msra.mxu0 0.0
    %1518 = vmatprep.subr.mxu0 0.0
    %1519 = vmatpush1.msra.mxu0 0.0
    %1520 = vmatprep.subr.mxu0 0.0
    %1521 = vmatpush1.msra.mxu0 0.0
    %1522 = vmatprep.subr.mxu0 0.0
    %1523 = vmatpush1.msra.mxu0 0.0
    %1524 = vmatprep.subr.mxu0 0.0
    %1525 = vmatpush1.msra.mxu0 0.0
    %1526 = vmatprep.subr.mxu0 0.0
    %1527 = vmatpush1.msra.mxu0 0.0
    %1528 = vmatprep.subr.mxu0 0.0
    %1529 = vmatpush1.msra.mxu0 0.0
    %1530 = vmatprep.subr.mxu0 0.0
    %1531 = vmatpush1.msra.mxu0 0.0
    %1532 = vmatprep.subr.mxu0 0.0
    %1533 = vmatpush1.msra.mxu0 0.0
    %1534 = vmatprep.subr.mxu0 0.0
    %1535 = vmatpush1.msra.mxu0 0.0
    %1536 = vmatprep.subr.mxu0 0.0
    %1537 = vmatpush1.msra.mxu0 0.0
    %1538 = vmatprep.subr.mxu0 0.0
    %1539 = vmatpush1.msra.mxu0 0.0
    %1540 = vmatprep.subr.mxu0 0.0
    %1541 = vmatpush1.msra.mxu0 0.0
    %1542 = vmatprep.subr.mxu0 0.0
    %1543 = vmatpush1.msra.mxu0 0.0
    %1544 = vmatprep.subr.mxu0 0.0
    %1545 = vmatpush1.msra.mxu0 0.0
    %1546 = vmatprep.subr.mxu0 0.0
    %1547 = vmatpush1.msra.mxu0 0.0
    %1548 = vmatprep.subr.mxu0 0.0
    %1549 = vmatpush1.msra.mxu0 0.0
    %1550 = vmatprep.subr.mxu0 0.0
    %1551 = vmatpush1.msra.mxu0 0.0
    %1552 = vmatprep.subr.mxu0 0.0
    %1553 = vmatpush1.msra.mxu0 0.0
    %1554 = vmatprep.subr.mxu0 0.0
    %1555 = vmatpush1.msra.mxu0 0.0
    %1556 = vmatprep.subr.mxu0 0.0
    %1557 = vmatpush1.msra.mxu0 0.0
    %1558 = vmatprep.mubr.f32.mxu0 0.0
    %1559 = vmatmul.mubr.f32.gmra.mrb[0].mxu0 %v1489
    %v1560 = vpop.f32.mrb[0].mxu0
    %v1561 = vadd.f32 %v1486, %v1560
    %v1562 = vpop.f32.mrb[0].mxu0
    %1563 = vmatprep.mubr.f32.mxu0 0.0
    %1564 = vmatmul.mubr.f32.gmra.mrb[0].mxu0 %v1492
    %v1565 = vpop.f32.mrb[0].mxu0
    %v1566 = vadd.f32 %v1486, %v1565
    %v1567 = vpop.f32.mrb[0].mxu0
    %1568 = vdwg.mxu0
    %v1569 = vmul.f32 %v1561, 0.35355338
    %v1570 = vmul.f32 %v1566, 0.35355338
    %1573 = vrot.lane.b32.xlu0 %v1561, 96
    %v1574 = vpop.permute.xlu0 %1573
    %1575 = vrot.lane.b32.xlu0 %v1566, 96
    %v1576 = vpop.permute.xlu0 %1575
    %v1578 = vsel %vm257, %v1569, 0
    %v1581 = vsel %vm257, %v1570, 0
    %v1583 = vsel %vm257, %v1574, 0
    %v1585 = vsel %vm257, %v1576, 0
    %1587 = vmatprep.subr.mxu0 0.0
    %1588 = vmatpush1.xpose.msra.mxu0 %v1583
    %1589 = vmatprep.subr.mxu0 0.0
    %1590 = vmatpush1.xpose.msra.mxu0 %v1585
    %1591 = vmatprep.subr.mxu0 0.0
    %1592 = vmatpush1.xpose.msra.mxu0 0.0
    %1593 = vmatprep.subr.mxu0 0.0
    %1594 = vmatpush1.xpose.msra.mxu0 0.0
    %1595 = vmatprep.subr.mxu0 0.0
    %1596 = vmatpush1.xpose.msra.mxu0 0.0
    %1597 = vmatprep.subr.mxu0 0.0
    %1598 = vmatpush1.xpose.msra.mxu0 0.0
    %1599 = vmatprep.subr.mxu0 0.0
    %1600 = vmatpush1.xpose.msra.mxu0 0.0
    %1601 = vmatprep.subr.mxu0 0.0
    %1602 = vmatpush1.xpose.msra.mxu0 0.0
    %1603 = vmatprep.subr.mxu0 0.0
    %1604 = vmatpush1.xpose.msra.mxu0 0.0
    %1605 = vmatprep.subr.mxu0 0.0
    %1606 = vmatpush1.xpose.msra.mxu0 0.0
    %1607 = vmatprep.subr.mxu0 0.0
    %1608 = vmatpush1.xpose.msra.mxu0 0.0
    %1609 = vmatprep.subr.mxu0 0.0
    %1610 = vmatpush1.xpose.msra.mxu0 0.0
    %1611 = vmatprep.subr.mxu0 0.0
    %1612 = vmatpush1.xpose.msra.mxu0 0.0
    %1613 = vmatprep.subr.mxu0 0.0
    %1614 = vmatpush1.xpose.msra.mxu0 0.0
    %1615 = vmatprep.subr.mxu0 0.0
    %1616 = vmatpush1.xpose.msra.mxu0 0.0
    %1617 = vmatprep.subr.mxu0 0.0
    %1618 = vmatpush1.xpose.msra.mxu0 0.0
    %1619 = vmatprep.subr.mxu0 0.0
    %1620 = vmatpush1.xpose.msra.mxu0 0.0
    %1621 = vmatprep.subr.mxu0 0.0
    %1622 = vmatpush1.xpose.msra.mxu0 0.0
    %1623 = vmatprep.subr.mxu0 0.0
    %1624 = vmatpush1.xpose.msra.mxu0 0.0
    %1625 = vmatprep.subr.mxu0 0.0
    %1626 = vmatpush1.xpose.msra.mxu0 0.0
    %1627 = vmatprep.subr.mxu0 0.0
    %1628 = vmatpush1.xpose.msra.mxu0 0.0
    %1629 = vmatprep.subr.mxu0 0.0
    %1630 = vmatpush1.xpose.msra.mxu0 0.0
    %1631 = vmatprep.subr.mxu0 0.0
    %1632 = vmatpush1.xpose.msra.mxu0 0.0
    %1633 = vmatprep.subr.mxu0 0.0
    %1634 = vmatpush1.xpose.msra.mxu0 0.0
    %1635 = vmatprep.subr.mxu0 0.0
    %1636 = vmatpush1.xpose.msra.mxu0 0.0
    %1637 = vmatprep.subr.mxu0 0.0
    %1638 = vmatpush1.xpose.msra.mxu0 0.0
    %1639 = vmatprep.subr.mxu0 0.0
    %1640 = vmatpush1.xpose.msra.mxu0 0.0
    %1641 = vmatprep.subr.mxu0 0.0
    %1642 = vmatpush1.xpose.msra.mxu0 0.0
    %1643 = vmatprep.subr.mxu0 0.0
    %1644 = vmatpush1.xpose.msra.mxu0 0.0
    %1645 = vmatprep.subr.mxu0 0.0
    %1646 = vmatpush1.xpose.msra.mxu0 0.0
    %1647 = vmatprep.subr.mxu0 0.0
    %1648 = vmatpush1.xpose.msra.mxu0 0.0
    %1649 = vmatprep.subr.mxu0 0.0
    %1650 = vmatpush1.xpose.msra.mxu0 0.0
    %1651 = vmatprep.mubr.f32.mxu0 0.0
    %1652 = vmatmul.mubr.f32.gmra.mrb[0].mxu0 %v1578
    %v1653 = vpop.f32.mrb[0].mxu0
    %v1654 = vadd.f32 %v107, %v1653
    %v1655 = vpop.f32.mrb[0].mxu0
    %1656 = vmatprep.mubr.f32.mxu0 0.0
    %1657 = vmatmul.mubr.f32.gmra.mrb[0].mxu0 %v1581
    %v1658 = vpop.f32.mrb[0].mxu0
    %v1659 = vadd.f32 %v108, %v1658
    %v1660 = vpop.f32.mrb[0].mxu0
    %1661 = vdwg.mxu0
    %v1662 = vsel %vm343, %v1654, -inf
    %1663 = vmax.xlane.f32.xlu0 %v1662
    %v1664 = vpop.xlane.xlu0 %1663
    %v1665 = vsel %vm343, %v1659, -inf
    %1666 = vmax.xlane.f32.xlu0 %v1665
    %v1667 = vpop.xlane.xlu0 %1666
    %v1668 = vsub.f32 %v1654, %v1664
    %v1669 = vsub.f32 %v1659, %v1667
    %v1670 = vmul.f32 %v1668, 1.442695
    %v1671 = vpow.pop %v1670
    %v1672 = vmul.f32 %v1669, 1.442695
    %v1673 = vpow.pop %v1672
    %v1674 = vsel %vm343, %v1671, 0.0
    %1675 = vadd.xlane.f32.xlu0 %v1674
    %v1676 = vpop.xlane.xlu0 %1675
    %v1677 = vsel %vm343, %v1673, 0.0
    %1678 = vadd.xlane.f32.xlu0 %v1677
    %v1679 = vpop.xlane.xlu0 %1678
    %v1680 = vrcp.pop %v1676
    %v1681 = vrcp.pop %v1679
    %v1682 = vmul.f32 %v1671, %v1680
    %v1683 = vmul.f32 %v1673, %v1681
    %1684 = vrot.lane.b32.xlu0 %v1561, 64
    %v1685 = vpop.permute.xlu0 %1684
    %1686 = vrot.lane.b32.xlu0 %v1566, 64
    %v1687 = vpop.permute.xlu0 %1686
    %v1691 = vsel %vm343, %v1682, 0
    %v1694 = vsel %vm343, %v1683, 0
    %1696 = vmatprep.subr.mxu0 0.0
    %1697 = vmatpush1.msra.mxu0 %v1685
    %1698 = vmatprep.subr.mxu0 0.0
    %1699 = vmatpush1.msra.mxu0 %v1687
    %1700 = vmatprep.subr.mxu0 0.0
    %1701 = vmatpush1.msra.mxu0 0.0
    %1702 = vmatprep.subr.mxu0 0.0
    %1703 = vmatpush1.msra.mxu0 0.0
    %1704 = vmatprep.subr.mxu0 0.0
    %1705 = vmatpush1.msra.mxu0 0.0
    %1706 = vmatprep.subr.mxu0 0.0
    %1707 = vmatpush1.msra.mxu0 0.0
    %1708 = vmatprep.subr.mxu0 0.0
    %1709 = vmatpush1.msra.mxu0 0.0
    %1710 = vmatprep.subr.mxu0 0.0
    %1711 = vmatpush1.msra.mxu0 0.0
    %1712 = vmatprep.subr.mxu0 0.0
    %1713 = vmatpush1.msra.mxu0 0.0
    %1714 = vmatprep.subr.mxu0 0.0
    %1715 = vmatpush1.msra.mxu0 0.0
    %1716 = vmatprep.subr.mxu0 0.0
    %1717 = vmatpush1.msra.mxu0 0.0
    %1718 = vmatprep.subr.mxu0 0.0
    %1719 = vmatpush1.msra.mxu0 0.0
    %1720 = vmatprep.subr.mxu0 0.0
    %1721 = vmatpush1.msra.mxu0 0.0
    %1722 = vmatprep.subr.mxu0 0.0
    %1723 = vmatpush1.msra.mxu0 0.0
    %1724 = vmatprep.subr.mxu0 0.0
    %1725 = vmatpush1.msra.mxu0 0.0
    %1726 = vmatprep.subr.mxu0 0.0
    %1727 = vmatpush1.msra.mxu0 0.0
    %1728 = vmatprep.subr.mxu0 0.0
    %1729 = vmatpush1.msra.mxu0 0.0
    %1730 = vmatprep.subr.mxu0 0.0
    %1731 = vmatpush1.msra.mxu0 0.0
    %1732 = vmatprep.subr.mxu0 0.0
    %1733 = vmatpush1.msra.mxu0 0.0
    %1734 = vmatprep.subr.mxu0 0.0
    %1735 = vmatpush1.msra.mxu0 0.0
    %1736 = vmatprep.subr.mxu0 0.0
    %1737 = vmatpush1.msra.mxu0 0.0
    %1738 = vmatprep.subr.mxu0 0.0
    %1739 = vmatpush1.msra.mxu0 0.0
    %1740 = vmatprep.subr.mxu0 0.0
    %1741 = vmatpush1.msra.mxu0 0.0
    %1742 = vmatprep.subr.mxu0 0.0
    %1743 = vmatpush1.msra.mxu0 0.0
    %1744 = vmatprep.subr.mxu0 0.0
    %1745 = vmatpush1.msra.mxu0 0.0
    %1746 = vmatprep.subr.mxu0 0.0
    %1747 = vmatpush1.msra.mxu0 0.0
    %1748 = vmatprep.subr.mxu0 0.0
    %1749 = vmatpush1.msra.mxu0 0.0
    %1750 = vmatprep.subr.mxu0 0.0
    %1751 = vmatpush1.msra.mxu0 0.0
    %1752 = vmatprep.subr.mxu0 0.0
    %1753 = vmatpush1.msra.mxu0 0.0
    %1754 = vmatprep.subr.mxu0 0.0
    %1755 = vmatpush1.msra.mxu0 0.0
    %1756 = vmatprep.subr.mxu0 0.0
    %1757 = vmatpush1.msra.mxu0 0.0
    %1758 = vmatprep.subr.mxu0 0.0
    %1759 = vmatpush1.msra.mxu0 0.0
    %1760 = vmatprep.mubr.f32.mxu0 0.0
    %1761 = vmatmul.mubr.f32.gmra.mrb[0].mxu0 %v1691
    %v1762 = vpop.f32.mrb[0].mxu0
    %v1763 = vadd.f32 0.0, %v1762
    %v1764 = vpop.f32.mrb[0].mxu0
    %1765 = vmatprep.mubr.f32.mxu0 0.0
    %1766 = vmatmul.mubr.f32.gmra.mrb[0].mxu0 %v1694
    %v1767 = vpop.f32.mrb[0].mxu0
    %v1768 = vadd.f32 0.0, %v1767
    %v1769 = vpop.f32.mrb[0].mxu0
    %1770 = vdwg.mxu0
    %1771 = vrot.lane.b32.xlu0 %v1569, 120
    %v1772 = vpop.permute.xlu0 %1771
    %1773 = vrot.lane.b32.xlu0 %v1570, 120
    %v1774 = vpop.permute.xlu0 %1773
    %1775 = vrot.lane.b32.xlu0 %v1561, 88
    %v1776 = vpop.permute.xlu0 %1775
    %1777 = vrot.lane.b32.xlu0 %v1566, 88
    %v1778 = vpop.permute.xlu0 %1777
    %v1779 = vsel %vm257, %v1772, 0
    %v1781 = vsel %vm257, %v1774, 0
    %v1783 = vsel %vm257, %v1776, 0
    %v1785 = vsel %vm257, %v1778, 0
    %1787 = vmatprep.subr.mxu0 0.0
    %1788 = vmatpush1.xpose.msra.mxu0 %v1783
    %1789 = vmatprep.subr.mxu0 0.0
    %1790 = vmatpush1.xpose.msra.mxu0 %v1785
    %1791 = vmatprep.subr.mxu0 0.0
    %1792 = vmatpush1.xpose.msra.mxu0 0.0
    %1793 = vmatprep.subr.mxu0 0.0
    %1794 = vmatpush1.xpose.msra.mxu0 0.0
    %1795 = vmatprep.subr.mxu0 0.0
    %1796 = vmatpush1.xpose.msra.mxu0 0.0
    %1797 = vmatprep.subr.mxu0 0.0
    %1798 = vmatpush1.xpose.msra.mxu0 0.0
    %1799 = vmatprep.subr.mxu0 0.0
    %1800 = vmatpush1.xpose.msra.mxu0 0.0
    %1801 = vmatprep.subr.mxu0 0.0
    %1802 = vmatpush1.xpose.msra.mxu0 0.0
    %1803 = vmatprep.subr.mxu0 0.0
    %1804 = vmatpush1.xpose.msra.mxu0 0.0
    %1805 = vmatprep.subr.mxu0 0.0
    %1806 = vmatpush1.xpose.msra.mxu0 0.0
    %1807 = vmatprep.subr.mxu0 0.0
    %1808 = vmatpush1.xpose.msra.mxu0 0.0
    %1809 = vmatprep.subr.mxu0 0.0
    %1810 = vmatpush1.xpose.msra.mxu0 0.0
    %1811 = vmatprep.subr.mxu0 0.0
    %1812 = vmatpush1.xpose.msra.mxu0 0.0
    %1813 = vmatprep.subr.mxu0 0.0
    %1814 = vmatpush1.xpose.msra.mxu0 0.0
    %1815 = vmatprep.subr.mxu0 0.0
    %1816 = vmatpush1.xpose.msra.mxu0 0.0
    %1817 = vmatprep.subr.mxu0 0.0
    %1818 = vmatpush1.xpose.msra.mxu0 0.0
    %1819 = vmatprep.subr.mxu0 0.0
    %1820 = vmatpush1.xpose.msra.mxu0 0.0
    %1821 = vmatprep.subr.mxu0 0.0
    %1822 = vmatpush1.xpose.msra.mxu0 0.0
    %1823 = vmatprep.subr.mxu0 0.0
    %1824 = vmatpush1.xpose.msra.mxu0 0.0
    %1825 = vmatprep.subr.mxu0 0.0
    %1826 = vmatpush1.xpose.msra.mxu0 0.0
    %1827 = vmatprep.subr.mxu0 0.0
    %1828 = vmatpush1.xpose.msra.mxu0 0.0
    %1829 = vmatprep.subr.mxu0 0.0
    %1830 = vmatpush1.xpose.msra.mxu0 0.0
    %1831 = vmatprep.subr.mxu0 0.0
    %1832 = vmatpush1.xpose.msra.mxu0 0.0
    %1833 = vmatprep.subr.mxu0 0.0
    %1834 = vmatpush1.xpose.msra.mxu0 0.0
    %1835 = vmatprep.subr.mxu0 0.0
    %1836 = vmatpush1.xpose.msra.mxu0 0.0
    %1837 = vmatprep.subr.mxu0 0.0
    %1838 = vmatpush1.xpose.msra.mxu0 0.0
    %1839 = vmatprep.subr.mxu0 0.0
    %1840 = vmatpush1.xpose.msra.mxu0 0.0
    %1841 = vmatprep.subr.mxu0 0.0
    %1842 = vmatpush1.xpose.msra.mxu0 0.0
    %1843 = vmatprep.subr.mxu0 0.0
    %1844 = vmatpush1.xpose.msra.mxu0 0.0
    %1845 = vmatprep.subr.mxu0 0.0
    %1846 = vmatpush1.xpose.msra.mxu0 0.0
    %1847 = vmatprep.subr.mxu0 0.0
    %1848 = vmatpush1.xpose.msra.mxu0 0.0
    %1849 = vmatprep.subr.mxu0 0.0
    %1850 = vmatpush1.xpose.msra.mxu0 0.0
    %1851 = vmatprep.mubr.f32.mxu0 0.0
    %1852 = vmatmul.mubr.f32.gmra.mrb[0].mxu0 %v1779
    %v1853 = vpop.f32.mrb[0].mxu0
    %v1854 = vadd.f32 %v107, %v1853
    %v1855 = vpop.f32.mrb[0].mxu0
    %1856 = vmatprep.mubr.f32.mxu0 0.0
    %1857 = vmatmul.mubr.f32.gmra.mrb[0].mxu0 %v1781
    %v1858 = vpop.f32.mrb[0].mxu0
    %v1859 = vadd.f32 %v108, %v1858
    %v1860 = vpop.f32.mrb[0].mxu0
    %1861 = vdwg.mxu0
    %v1862 = vsel %vm343, %v1854, -inf
    %1863 = vmax.xlane.f32.xlu0 %v1862
    %v1864 = vpop.xlane.xlu0 %1863
    %v1865 = vsel %vm343, %v1859, -inf
    %1866 = vmax.xlane.f32.xlu0 %v1865
    %v1867 = vpop.xlane.xlu0 %1866
    %v1868 = vsub.f32 %v1854, %v1864
    %v1869 = vsub.f32 %v1859, %v1867
    %v1870 = vmul.f32 %v1868, 1.442695
    %v1871 = vpow.pop %v1870
    %v1872 = vmul.f32 %v1869, 1.442695
    %v1873 = vpow.pop %v1872
    %v1874 = vsel %vm343, %v1871, 0.0
    %1875 = vadd.xlane.f32.xlu0 %v1874
    %v1876 = vpop.xlane.xlu0 %1875
    %v1877 = vsel %vm343, %v1873, 0.0
    %1878 = vadd.xlane.f32.xlu0 %v1877
    %v1879 = vpop.xlane.xlu0 %1878
    %v1880 = vrcp.pop %v1876
    %v1881 = vrcp.pop %v1879
    %v1882 = vmul.f32 %v1871, %v1880
    %v1883 = vmul.f32 %v1873, %v1881
    %1884 = vrot.lane.b32.xlu0 %v1561, 56
    %v1885 = vpop.permute.xlu0 %1884
    %1886 = vrot.lane.b32.xlu0 %v1566, 56
    %v1887 = vpop.permute.xlu0 %1886
    %v1891 = vsel %vm343, %v1882, 0
    %v1894 = vsel %vm343, %v1883, 0
    %1896 = vmatprep.subr.mxu0 0.0
    %1897 = vmatpush1.msra.mxu0 %v1885
    %1898 = vmatprep.subr.mxu0 0.0
    %1899 = vmatpush1.msra.mxu0 %v1887
    %1900 = vmatprep.subr.mxu0 0.0
    %1901 = vmatpush1.msra.mxu0 0.0
    %1902 = vmatprep.subr.mxu0 0.0
    %1903 = vmatpush1.msra.mxu0 0.0
    %1904 = vmatprep.subr.mxu0 0.0
    %1905 = vmatpush1.msra.mxu0 0.0
    %1906 = vmatprep.subr.mxu0 0.0
    %1907 = vmatpush1.msra.mxu0 0.0
    %1908 = vmatprep.subr.mxu0 0.0
    %1909 = vmatpush1.msra.mxu0 0.0
    %1910 = vmatprep.subr.mxu0 0.0
    %1911 = vmatpush1.msra.mxu0 0.0
    %1912 = vmatprep.subr.mxu0 0.0
    %1913 = vmatpush1.msra.mxu0 0.0
    %1914 = vmatprep.subr.mxu0 0.0
    %1915 = vmatpush1.msra.mxu0 0.0
    %1916 = vmatprep.subr.mxu0 0.0
    %1917 = vmatpush1.msra.mxu0 0.0
    %1918 = vmatprep.subr.mxu0 0.0
    %1919 = vmatpush1.msra.mxu0 0.0
    %1920 = vmatprep.subr.mxu0 0.0
    %1921 = vmatpush1.msra.mxu0 0.0
    %1922 = vmatprep.subr.mxu0 0.0
    %1923 = vmatpush1.msra.mxu0 0.0
    %1924 = vmatprep.subr.mxu0 0.0
    %1925 = vmatpush1.msra.mxu0 0.0
    %1926 = vmatprep.subr.mxu0 0.0
    %1927 = vmatpush1.msra.mxu0 0.0
    %1928 = vmatprep.subr.mxu0 0.0
    %1929 = vmatpush1.msra.mxu0 0.0
    %1930 = vmatprep.subr.mxu0 0.0
    %1931 = vmatpush1.msra.mxu0 0.0
    %1932 = vmatprep.subr.mxu0 0.0
    %1933 = vmatpush1.msra.mxu0 0.0
    %1934 = vmatprep.subr.mxu0 0.0
    %1935 = vmatpush1.msra.mxu0 0.0
    %1936 = vmatprep.subr.mxu0 0.0
    %1937 = vmatpush1.msra.mxu0 0.0
    %1938 = vmatprep.subr.mxu0 0.0
    %1939 = vmatpush1.msra.mxu0 0.0
    %1940 = vmatprep.subr.mxu0 0.0
    %1941 = vmatpush1.msra.mxu0 0.0
    %1942 = vmatprep.subr.mxu0 0.0
    %1943 = vmatpush1.msra.mxu0 0.0
    %1944 = vmatprep.subr.mxu0 0.0
    %1945 = vmatpush1.msra.mxu0 0.0
    %1946 = vmatprep.subr.mxu0 0.0
    %1947 = vmatpush1.msra.mxu0 0.0
    %1948 = vmatprep.subr.mxu0 0.0
    %1949 = vmatpush1.msra.mxu0 0.0
    %1950 = vmatprep.subr.mxu0 0.0
    %1951 = vmatpush1.msra.mxu0 0.0
    %1952 = vmatprep.subr.mxu0 0.0
    %1953 = vmatpush1.msra.mxu0 0.0
    %1954 = vmatprep.subr.mxu0 0.0
    %1955 = vmatpush1.msra.mxu0 0.0
    %1956 = vmatprep.subr.mxu0 0.0
    %1957 = vmatpush1.msra.mxu0 0.0
    %1958 = vmatprep.subr.mxu0 0.0
    %1959 = vmatpush1.msra.mxu0 0.0
    %1960 = vmatprep.mubr.f32.mxu0 0.0
    %1961 = vmatmul.mubr.f32.gmra.mrb[0].mxu0 %v1891
    %v1962 = vpop.f32.mrb[0].mxu0
    %v1963 = vadd.f32 0.0, %v1962
    %v1964 = vpop.f32.mrb[0].mxu0
    %1965 = vmatprep.mubr.f32.mxu0 0.0
    %1966 = vmatmul.mubr.f32.gmra.mrb[0].mxu0 %v1894
    %v1967 = vpop.f32.mrb[0].mxu0
    %v1968 = vadd.f32 0.0, %v1967
    %v1969 = vpop.f32.mrb[0].mxu0
    %1970 = vdwg.mxu0
    %1971 = vrot.lane.b32.xlu0 %v1569, 112
    %v1972 = vpop.permute.xlu0 %1971
    %1973 = vrot.lane.b32.xlu0 %v1570, 112
    %v1974 = vpop.permute.xlu0 %1973
    %1975 = vrot.lane.b32.xlu0 %v1561, 80
    %v1976 = vpop.permute.xlu0 %1975
    %1977 = vrot.lane.b32.xlu0 %v1566, 80
    %v1978 = vpop.permute.xlu0 %1977
    %v1979 = vsel %vm257, %v1972, 0
    %v1981 = vsel %vm257, %v1974, 0
    %v1983 = vsel %vm257, %v1976, 0
    %v1985 = vsel %vm257, %v1978, 0
    %1987 = vmatprep.subr.mxu0 0.0
    %1988 = vmatpush1.xpose.msra.mxu0 %v1983
    %1989 = vmatprep.subr.mxu0 0.0
    %1990 = vmatpush1.xpose.msra.mxu0 %v1985
    %1991 = vmatprep.subr.mxu0 0.0
    %1992 = vmatpush1.xpose.msra.mxu0 0.0
    %1993 = vmatprep.subr.mxu0 0.0
    %1994 = vmatpush1.xpose.msra.mxu0 0.0
    %1995 = vmatprep.subr.mxu0 0.0
    %1996 = vmatpush1.xpose.msra.mxu0 0.0
    %1997 = vmatprep.subr.mxu0 0.0
    %1998 = vmatpush1.xpose.msra.mxu0 0.0
    %1999 = vmatprep.subr.mxu0 0.0
    %2000 = vmatpush1.xpose.msra.mxu0 0.0
    %2001 = vmatprep.subr.mxu0 0.0
    %2002 = vmatpush1.xpose.msra.mxu0 0.0
    %2003 = vmatprep.subr.mxu0 0.0
    %2004 = vmatpush1.xpose.msra.mxu0 0.0
    %2005 = vmatprep.subr.mxu0 0.0
    %2006 = vmatpush1.xpose.msra.mxu0 0.0
    %2007 = vmatprep.subr.mxu0 0.0
    %2008 = vmatpush1.xpose.msra.mxu0 0.0
    %2009 = vmatprep.subr.mxu0 0.0
    %2010 = vmatpush1.xpose.msra.mxu0 0.0
    %2011 = vmatprep.subr.mxu0 0.0
    %2012 = vmatpush1.xpose.msra.mxu0 0.0
    %2013 = vmatprep.subr.mxu0 0.0
    %2014 = vmatpush1.xpose.msra.mxu0 0.0
    %2015 = vmatprep.subr.mxu0 0.0
    %2016 = vmatpush1.xpose.msra.mxu0 0.0
    %2017 = vmatprep.subr.mxu0 0.0
    %2018 = vmatpush1.xpose.msra.mxu0 0.0
    %2019 = vmatprep.subr.mxu0 0.0
    %2020 = vmatpush1.xpose.msra.mxu0 0.0
    %2021 = vmatprep.subr.mxu0 0.0
    %2022 = vmatpush1.xpose.msra.mxu0 0.0
    %2023 = vmatprep.subr.mxu0 0.0
    %2024 = vmatpush1.xpose.msra.mxu0 0.0
    %2025 = vmatprep.subr.mxu0 0.0
    %2026 = vmatpush1.xpose.msra.mxu0 0.0
    %2027 = vmatprep.subr.mxu0 0.0
    %2028 = vmatpush1.xpose.msra.mxu0 0.0
    %2029 = vmatprep.subr.mxu0 0.0
    %2030 = vmatpush1.xpose.msra.mxu0 0.0
    %2031 = vmatprep.subr.mxu0 0.0
    %2032 = vmatpush1.xpose.msra.mxu0 0.0
    %2033 = vmatprep.subr.mxu0 0.0
    %2034 = vmatpush1.xpose.msra.mxu0 0.0
    %2035 = vmatprep.subr.mxu0 0.0
    %2036 = vmatpush1.xpose.msra.mxu0 0.0
    %2037 = vmatprep.subr.mxu0 0.0
    %2038 = vmatpush1.xpose.msra.mxu0 0.0
    %2039 = vmatprep.subr.mxu0 0.0
    %2040 = vmatpush1.xpose.msra.mxu0 0.0
    %2041 = vmatprep.subr.mxu0 0.0
    %2042 = vmatpush1.xpose.msra.mxu0 0.0
    %2043 = vmatprep.subr.mxu0 0.0
    %2044 = vmatpush1.xpose.msra.mxu0 0.0
    %2045 = vmatprep.subr.mxu0 0.0
    %2046 = vmatpush1.xpose.msra.mxu0 0.0
    %2047 = vmatprep.subr.mxu0 0.0
    %2048 = vmatpush1.xpose.msra.mxu0 0.0
    %2049 = vmatprep.subr.mxu0 0.0
    %2050 = vmatpush1.xpose.msra.mxu0 0.0
    %2051 = vmatprep.mubr.f32.mxu0 0.0
    %2052 = vmatmul.mubr.f32.gmra.mrb[0].mxu0 %v1979
    %v2053 = vpop.f32.mrb[0].mxu0
    %v2054 = vadd.f32 %v107, %v2053
    %v2055 = vpop.f32.mrb[0].mxu0
    %2056 = vmatprep.mubr.f32.mxu0 0.0
    %2057 = vmatmul.mubr.f32.gmra.mrb[0].mxu0 %v1981
    %v2058 = vpop.f32.mrb[0].mxu0
    %v2059 = vadd.f32 %v108, %v2058
    %v2060 = vpop.f32.mrb[0].mxu0
    %2061 = vdwg.mxu0
    %v2062 = vsel %vm343, %v2054, -inf
    %2063 = vmax.xlane.f32.xlu0 %v2062
    %v2064 = vpop.xlane.xlu0 %2063
    %v2065 = vsel %vm343, %v2059, -inf
    %2066 = vmax.xlane.f32.xlu0 %v2065
    %v2067 = vpop.xlane.xlu0 %2066
    %v2068 = vsub.f32 %v2054, %v2064
    %v2069 = vsub.f32 %v2059, %v2067
    %v2070 = vmul.f32 %v2068, 1.442695
    %v2071 = vpow.pop %v2070
    %v2072 = vmul.f32 %v2069, 1.442695
    %v2073 = vpow.pop %v2072
    %v2074 = vsel %vm343, %v2071, 0.0
    %2075 = vadd.xlane.f32.xlu0 %v2074
    %v2076 = vpop.xlane.xlu0 %2075
    %v2077 = vsel %vm343, %v2073, 0.0
    %2078 = vadd.xlane.f32.xlu0 %v2077
    %v2079 = vpop.xlane.xlu0 %2078
    %v2080 = vrcp.pop %v2076
    %v2081 = vrcp.pop %v2079
    %v2082 = vmul.f32 %v2071, %v2080
    %v2083 = vmul.f32 %v2073, %v2081
    %2084 = vrot.lane.b32.xlu0 %v1561, 48
    %v2085 = vpop.permute.xlu0 %2084
    %2086 = vrot.lane.b32.xlu0 %v1566, 48
    %v2087 = vpop.permute.xlu0 %2086
    %v2091 = vsel %vm343, %v2082, 0
    %v2094 = vsel %vm343, %v2083, 0
    %2096 = vmatprep.subr.mxu0 0.0
    %2097 = vmatpush1.msra.mxu0 %v2085
    %2098 = vmatprep.subr.mxu0 0.0
    %2099 = vmatpush1.msra.mxu0 %v2087
    %2100 = vmatprep.subr.mxu0 0.0
    %2101 = vmatpush1.msra.mxu0 0.0
    %2102 = vmatprep.subr.mxu0 0.0
    %2103 = vmatpush1.msra.mxu0 0.0
    %2104 = vmatprep.subr.mxu0 0.0
    %2105 = vmatpush1.msra.mxu0 0.0
    %2106 = vmatprep.subr.mxu0 0.0
    %2107 = vmatpush1.msra.mxu0 0.0
    %2108 = vmatprep.subr.mxu0 0.0
    %2109 = vmatpush1.msra.mxu0 0.0
    %2110 = vmatprep.subr.mxu0 0.0
    %2111 = vmatpush1.msra.mxu0 0.0
    %2112 = vmatprep.subr.mxu0 0.0
    %2113 = vmatpush1.msra.mxu0 0.0
    %2114 = vmatprep.subr.mxu0 0.0
    %2115 = vmatpush1.msra.mxu0 0.0
    %2116 = vmatprep.subr.mxu0 0.0
    %2117 = vmatpush1.msra.mxu0 0.0
    %2118 = vmatprep.subr.mxu0 0.0
    %2119 = vmatpush1.msra.mxu0 0.0
    %2120 = vmatprep.subr.mxu0 0.0
    %2121 = vmatpush1.msra.mxu0 0.0
    %2122 = vmatprep.subr.mxu0 0.0
    %2123 = vmatpush1.msra.mxu0 0.0
    %2124 = vmatprep.subr.mxu0 0.0
    %2125 = vmatpush1.msra.mxu0 0.0
    %2126 = vmatprep.subr.mxu0 0.0
    %2127 = vmatpush1.msra.mxu0 0.0
    %2128 = vmatprep.subr.mxu0 0.0
    %2129 = vmatpush1.msra.mxu0 0.0
    %2130 = vmatprep.subr.mxu0 0.0
    %2131 = vmatpush1.msra.mxu0 0.0
    %2132 = vmatprep.subr.mxu0 0.0
    %2133 = vmatpush1.msra.mxu0 0.0
    %2134 = vmatprep.subr.mxu0 0.0
    %2135 = vmatpush1.msra.mxu0 0.0
    %2136 = vmatprep.subr.mxu0 0.0
    %2137 = vmatpush1.msra.mxu0 0.0
    %2138 = vmatprep.subr.mxu0 0.0
    %2139 = vmatpush1.msra.mxu0 0.0
    %2140 = vmatprep.subr.mxu0 0.0
    %2141 = vmatpush1.msra.mxu0 0.0
    %2142 = vmatprep.subr.mxu0 0.0
    %2143 = vmatpush1.msra.mxu0 0.0
    %2144 = vmatprep.subr.mxu0 0.0
    %2145 = vmatpush1.msra.mxu0 0.0
    %2146 = vmatprep.subr.mxu0 0.0
    %2147 = vmatpush1.msra.mxu0 0.0
    %2148 = vmatprep.subr.mxu0 0.0
    %2149 = vmatpush1.msra.mxu0 0.0
    %2150 = vmatprep.subr.mxu0 0.0
    %2151 = vmatpush1.msra.mxu0 0.0
    %2152 = vmatprep.subr.mxu0 0.0
    %2153 = vmatpush1.msra.mxu0 0.0
    %2154 = vmatprep.subr.mxu0 0.0
    %2155 = vmatpush1.msra.mxu0 0.0
    %2156 = vmatprep.subr.mxu0 0.0
    %2157 = vmatpush1.msra.mxu0 0.0
    %2158 = vmatprep.subr.mxu0 0.0
    %2159 = vmatpush1.msra.mxu0 0.0
    %2160 = vmatprep.mubr.f32.mxu0 0.0
    %2161 = vmatmul.mubr.f32.gmra.mrb[0].mxu0 %v2091
    %v2162 = vpop.f32.mrb[0].mxu0
    %v2163 = vadd.f32 0.0, %v2162
    %v2164 = vpop.f32.mrb[0].mxu0
    %2165 = vmatprep.mubr.f32.mxu0 0.0
    %2166 = vmatmul.mubr.f32.gmra.mrb[0].mxu0 %v2094
    %v2167 = vpop.f32.mrb[0].mxu0
    %v2168 = vadd.f32 0.0, %v2167
    %v2169 = vpop.f32.mrb[0].mxu0
    %2170 = vdwg.mxu0
    %2171 = vrot.lane.b32.xlu0 %v1569, 104
    %v2172 = vpop.permute.xlu0 %2171
    %2173 = vrot.lane.b32.xlu0 %v1570, 104
    %v2174 = vpop.permute.xlu0 %2173
    %2175 = vrot.lane.b32.xlu0 %v1561, 72
    %v2176 = vpop.permute.xlu0 %2175
    %2177 = vrot.lane.b32.xlu0 %v1566, 72
    %v2178 = vpop.permute.xlu0 %2177
    %v2179 = vsel %vm257, %v2172, 0
    %v2181 = vsel %vm257, %v2174, 0
    %v2183 = vsel %vm257, %v2176, 0
    %v2185 = vsel %vm257, %v2178, 0
    %2187 = vmatprep.subr.mxu0 0.0
    %2188 = vmatpush1.xpose.msra.mxu0 %v2183
    %2189 = vmatprep.subr.mxu0 0.0
    %2190 = vmatpush1.xpose.msra.mxu0 %v2185
    %2191 = vmatprep.subr.mxu0 0.0
    %2192 = vmatpush1.xpose.msra.mxu0 0.0
    %2193 = vmatprep.subr.mxu0 0.0
    %2194 = vmatpush1.xpose.msra.mxu0 0.0
    %2195 = vmatprep.subr.mxu0 0.0
    %2196 = vmatpush1.xpose.msra.mxu0 0.0
    %2197 = vmatprep.subr.mxu0 0.0
    %2198 = vmatpush1.xpose.msra.mxu0 0.0
    %2199 = vmatprep.subr.mxu0 0.0
    %2200 = vmatpush1.xpose.msra.mxu0 0.0
    %2201 = vmatprep.subr.mxu0 0.0
    %2202 = vmatpush1.xpose.msra.mxu0 0.0
    %2203 = vmatprep.subr.mxu0 0.0
    %2204 = vmatpush1.xpose.msra.mxu0 0.0
    %2205 = vmatprep.subr.mxu0 0.0
    %2206 = vmatpush1.xpose.msra.mxu0 0.0
    %2207 = vmatprep.subr.mxu0 0.0
    %2208 = vmatpush1.xpose.msra.mxu0 0.0
    %2209 = vmatprep.subr.mxu0 0.0
    %2210 = vmatpush1.xpose.msra.mxu0 0.0
    %2211 = vmatprep.subr.mxu0 0.0
    %2212 = vmatpush1.xpose.msra.mxu0 0.0
    %2213 = vmatprep.subr.mxu0 0.0
    %2214 = vmatpush1.xpose.msra.mxu0 0.0
    %2215 = vmatprep.subr.mxu0 0.0
    %2216 = vmatpush1.xpose.msra.mxu0 0.0
    %2217 = vmatprep.subr.mxu0 0.0
    %2218 = vmatpush1.xpose.msra.mxu0 0.0
    %2219 = vmatprep.subr.mxu0 0.0
    %2220 = vmatpush1.xpose.msra.mxu0 0.0
    %2221 = vmatprep.subr.mxu0 0.0
    %2222 = vmatpush1.xpose.msra.mxu0 0.0
    %2223 = vmatprep.subr.mxu0 0.0
    %2224 = vmatpush1.xpose.msra.mxu0 0.0
    %2225 = vmatprep.subr.mxu0 0.0
    %2226 = vmatpush1.xpose.msra.mxu0 0.0
    %2227 = vmatprep.subr.mxu0 0.0
    %2228 = vmatpush1.xpose.msra.mxu0 0.0
    %2229 = vmatprep.subr.mxu0 0.0
    %2230 = vmatpush1.xpose.msra.mxu0 0.0
    %2231 = vmatprep.subr.mxu0 0.0
    %2232 = vmatpush1.xpose.msra.mxu0 0.0
    %2233 = vmatprep.subr.mxu0 0.0
    %2234 = vmatpush1.xpose.msra.mxu0 0.0
    %2235 = vmatprep.subr.mxu0 0.0
    %2236 = vmatpush1.xpose.msra.mxu0 0.0
    %2237 = vmatprep.subr.mxu0 0.0
    %2238 = vmatpush1.xpose.msra.mxu0 0.0
    %2239 = vmatprep.subr.mxu0 0.0
    %2240 = vmatpush1.xpose.msra.mxu0 0.0
    %2241 = vmatprep.subr.mxu0 0.0
    %2242 = vmatpush1.xpose.msra.mxu0 0.0
    %2243 = vmatprep.subr.mxu0 0.0
    %2244 = vmatpush1.xpose.msra.mxu0 0.0
    %2245 = vmatprep.subr.mxu0 0.0
    %2246 = vmatpush1.xpose.msra.mxu0 0.0
    %2247 = vmatprep.subr.mxu0 0.0
    %2248 = vmatpush1.xpose.msra.mxu0 0.0
    %2249 = vmatprep.subr.mxu0 0.0
    %2250 = vmatpush1.xpose.msra.mxu0 0.0
    %2251 = vmatprep.mubr.f32.mxu0 0.0
    %2252 = vmatmul.mubr.f32.gmra.mrb[0].mxu0 %v2179
    %v2253 = vpop.f32.mrb[0].mxu0
    %v2254 = vadd.f32 %v107, %v2253
    %v2255 = vpop.f32.mrb[0].mxu0
    %2256 = vmatprep.mubr.f32.mxu0 0.0
    %2257 = vmatmul.mubr.f32.gmra.mrb[0].mxu0 %v2181
    %v2258 = vpop.f32.mrb[0].mxu0
    %v2259 = vadd.f32 %v108, %v2258
    %v2260 = vpop.f32.mrb[0].mxu0
    %2261 = vdwg.mxu0
    %v2262 = vsel %vm343, %v2254, -inf
    %2263 = vmax.xlane.f32.xlu0 %v2262
    %v2264 = vpop.xlane.xlu0 %2263
    %v2265 = vsel %vm343, %v2259, -inf
    %2266 = vmax.xlane.f32.xlu0 %v2265
    %v2267 = vpop.xlane.xlu0 %2266
    %v2268 = vsub.f32 %v2254, %v2264
    %v2269 = vsub.f32 %v2259, %v2267
    %v2270 = vmul.f32 %v2268, 1.442695
    %v2271 = vpow.pop %v2270
    %v2272 = vmul.f32 %v2269, 1.442695
    %v2273 = vpow.pop %v2272
    %v2274 = vsel %vm343, %v2271, 0.0
    %2275 = vadd.xlane.f32.xlu0 %v2274
    %v2276 = vpop.xlane.xlu0 %2275
    %v2277 = vsel %vm343, %v2273, 0.0
    %2278 = vadd.xlane.f32.xlu0 %v2277
    %v2279 = vpop.xlane.xlu0 %2278
    %v2280 = vrcp.pop %v2276
    %v2281 = vrcp.pop %v2279
    %v2282 = vmul.f32 %v2271, %v2280
    %v2283 = vmul.f32 %v2273, %v2281
    %2284 = vrot.lane.b32.xlu0 %v1561, 40
    %v2285 = vpop.permute.xlu0 %2284
    %2286 = vrot.lane.b32.xlu0 %v1566, 40
    %v2287 = vpop.permute.xlu0 %2286
    %v2291 = vsel %vm343, %v2282, 0
    %v2294 = vsel %vm343, %v2283, 0
    %2296 = vmatprep.subr.mxu0 0.0
    %2297 = vmatpush1.msra.mxu0 %v2285
    %2298 = vmatprep.subr.mxu0 0.0
    %2299 = vmatpush1.msra.mxu0 %v2287
    %2300 = vmatprep.subr.mxu0 0.0
    %2301 = vmatpush1.msra.mxu0 0.0
    %2302 = vmatprep.subr.mxu0 0.0
    %2303 = vmatpush1.msra.mxu0 0.0
    %2304 = vmatprep.subr.mxu0 0.0
    %2305 = vmatpush1.msra.mxu0 0.0
    %2306 = vmatprep.subr.mxu0 0.0
    %2307 = vmatpush1.msra.mxu0 0.0
    %2308 = vmatprep.subr.mxu0 0.0
    %2309 = vmatpush1.msra.mxu0 0.0
    %2310 = vmatprep.subr.mxu0 0.0
    %2311 = vmatpush1.msra.mxu0 0.0
    %2312 = vmatprep.subr.mxu0 0.0
    %2313 = vmatpush1.msra.mxu0 0.0
    %2314 = vmatprep.subr.mxu0 0.0
    %2315 = vmatpush1.msra.mxu0 0.0
    %2316 = vmatprep.subr.mxu0 0.0
    %2317 = vmatpush1.msra.mxu0 0.0
    %2318 = vmatprep.subr.mxu0 0.0
    %2319 = vmatpush1.msra.mxu0 0.0
    %2320 = vmatprep.subr.mxu0 0.0
    %2321 = vmatpush1.msra.mxu0 0.0
    %2322 = vmatprep.subr.mxu0 0.0
    %2323 = vmatpush1.msra.mxu0 0.0
    %2324 = vmatprep.subr.mxu0 0.0
    %2325 = vmatpush1.msra.mxu0 0.0
    %2326 = vmatprep.subr.mxu0 0.0
    %2327 = vmatpush1.msra.mxu0 0.0
    %2328 = vmatprep.subr.mxu0 0.0
    %2329 = vmatpush1.msra.mxu0 0.0
    %2330 = vmatprep.subr.mxu0 0.0
    %2331 = vmatpush1.msra.mxu0 0.0
    %2332 = vmatprep.subr.mxu0 0.0
    %2333 = vmatpush1.msra.mxu0 0.0
    %2334 = vmatprep.subr.mxu0 0.0
    %2335 = vmatpush1.msra.mxu0 0.0
    %2336 = vmatprep.subr.mxu0 0.0
    %2337 = vmatpush1.msra.mxu0 0.0
    %2338 = vmatprep.subr.mxu0 0.0
    %2339 = vmatpush1.msra.mxu0 0.0
    %2340 = vmatprep.subr.mxu0 0.0
    %2341 = vmatpush1.msra.mxu0 0.0
    %2342 = vmatprep.subr.mxu0 0.0
    %2343 = vmatpush1.msra.mxu0 0.0
    %2344 = vmatprep.subr.mxu0 0.0
    %2345 = vmatpush1.msra.mxu0 0.0
    %2346 = vmatprep.subr.mxu0 0.0
    %2347 = vmatpush1.msra.mxu0 0.0
    %2348 = vmatprep.subr.mxu0 0.0
    %2349 = vmatpush1.msra.mxu0 0.0
    %2350 = vmatprep.subr.mxu0 0.0
    %2351 = vmatpush1.msra.mxu0 0.0
    %2352 = vmatprep.subr.mxu0 0.0
    %2353 = vmatpush1.msra.mxu0 0.0
    %2354 = vmatprep.subr.mxu0 0.0
    %2355 = vmatpush1.msra.mxu0 0.0
    %2356 = vmatprep.subr.mxu0 0.0
    %2357 = vmatpush1.msra.mxu0 0.0
    %2358 = vmatprep.subr.mxu0 0.0
    %2359 = vmatpush1.msra.mxu0 0.0
    %2360 = vmatprep.mubr.f32.mxu0 0.0
    %2361 = vmatmul.mubr.f32.gmra.mrb[0].mxu0 %v2291
    %v2362 = vpop.f32.mrb[0].mxu0
    %v2363 = vadd.f32 0.0, %v2362
    %v2364 = vpop.f32.mrb[0].mxu0
    %2365 = vmatprep.mubr.f32.mxu0 0.0
    %2366 = vmatmul.mubr.f32.gmra.mrb[0].mxu0 %v2294
    %v2367 = vpop.f32.mrb[0].mxu0
    %v2368 = vadd.f32 0.0, %v2367
    %v2369 = vpop.f32.mrb[0].mxu0
    %2370 = vdwg.mxu0
    %2373 = vrot.lane.b32.xlu0 %v1963, 8
    %v2374 = vpop.permute.xlu0 %2373
    %2375 = vrot.lane.b32.xlu0 %v1968, 8
    %v2376 = vpop.permute.xlu0 %2375
    %2381 = vrot.lane.b32.xlu0 %v2163, 16
    %v2382 = vpop.permute.xlu0 %2381
    %2383 = vrot.lane.b32.xlu0 %v2168, 16
    %v2384 = vpop.permute.xlu0 %2383
    %2389 = vrot.lane.b32.xlu0 %v2363, 24
    %v2390 = vpop.permute.xlu0 %2389
    %2391 = vrot.lane.b32.xlu0 %v2368, 24
    %v2392 = vpop.permute.xlu0 %2391
    %v2395 = vsel %vm257, %v1763, %v2374
    %v2396 = vsel %vm257, %v1768, %v2376
    %v2397 = vsel %vm343, %v2395, %v2382
    %v2398 = vsel %vm343, %v2396, %v2384
    %v2399 = vsel %vm1081, %v2397, %v2390
    %v2400 = vsel %vm1081, %v2398, %v2392
    %s2401 = scalar_lea.vmem [#allocation2], 32
    %v2402 = vld [vmem:[%s2401] sm:$0xff]
    %v2403 = vld [vmem:[%s2401 + $0x8] sm:$0xff]
    %v2404 = vld [vmem:[%s2401 + $0x10] sm:$0xff]
    %v2405 = vld [vmem:[%s2401 + $0x18] sm:$0xff]
    %s2406 = scalar_lea.vmem %s7, 1
    %v2407 = vld [vmem:[%s2406] sm:$0x1]
    %v2409 = vlaneseq
    %v2410 = vshrl.u32 %v2409, 7
    %v2411 = vsub.s32 0, %v2410
    %v2412 = vrot.slane %v2407, %v2411
    %v2415 = vsel %vm113, %v2399, 0
    %v2418 = vsel %vm113, %v2400, 0
    %2420 = vmatprep.subr.mxu0 0.0
    %2421 = vmatpush1.msra.mxu0 %v2402
    %2422 = vmatprep.subr.mxu0 0.0
    %2423 = vmatpush1.msra.mxu0 %v2403
    %2424 = vmatprep.subr.mxu0 0.0
    %2425 = vmatpush1.msra.mxu0 %v2404
    %2426 = vmatprep.subr.mxu0 0.0
    %2427 = vmatpush1.msra.mxu0 %v2405
    %2428 = vmatprep.subr.mxu0 0.0
    %2429 = vmatpush1.msra.mxu0 0.0
    %2430 = vmatprep.subr.mxu0 0.0
    %2431 = vmatpush1.msra.mxu0 0.0
    %2432 = vmatprep.subr.mxu0 0.0
    %2433 = vmatpush1.msra.mxu0 0.0
    %2434 = vmatprep.subr.mxu0 0.0
    %2435 = vmatpush1.msra.mxu0 0.0
    %2436 = vmatprep.subr.mxu0 0.0
    %2437 = vmatpush1.msra.mxu0 0.0
    %2438 = vmatprep.subr.mxu0 0.0
    %2439 = vmatpush1.msra.mxu0 0.0
    %2440 = vmatprep.subr.mxu0 0.0
    %2441 = vmatpush1.msra.mxu0 0.0
    %2442 = vmatprep.subr.mxu0 0.0
    %2443 = vmatpush1.msra.mxu0 0.0
    %2444 = vmatprep.subr.mxu0 0.0
    %2445 = vmatpush1.msra.mxu0 0.0
    %2446 = vmatprep.subr.mxu0 0.0
    %2447 = vmatpush1.msra.mxu0 0.0
    %2448 = vmatprep.subr.mxu0 0.0
    %2449 = vmatpush1.msra.mxu0 0.0
    %2450 = vmatprep.subr.mxu0 0.0
    %2451 = vmatpush1.msra.mxu0 0.0
    %2452 = vmatprep.subr.mxu0 0.0
    %2453 = vmatpush1.msra.mxu0 0.0
    %2454 = vmatprep.subr.mxu0 0.0
    %2455 = vmatpush1.msra.mxu0 0.0
    %2456 = vmatprep.subr.mxu0 0.0
    %2457 = vmatpush1.msra.mxu0 0.0
    %2458 = vmatprep.subr.mxu0 0.0
    %2459 = vmatpush1.msra.mxu0 0.0
    %2460 = vmatprep.subr.mxu0 0.0
    %2461 = vmatpush1.msra.mxu0 0.0
    %2462 = vmatprep.subr.mxu0 0.0
    %2463 = vmatpush1.msra.mxu0 0.0
    %2464 = vmatprep.subr.mxu0 0.0
    %2465 = vmatpush1.msra.mxu0 0.0
    %2466 = vmatprep.subr.mxu0 0.0
    %2467 = vmatpush1.msra.mxu0 0.0
    %2468 = vmatprep.subr.mxu0 0.0
    %2469 = vmatpush1.msra.mxu0 0.0
    %2470 = vmatprep.subr.mxu0 0.0
    %2471 = vmatpush1.msra.mxu0 0.0
    %2472 = vmatprep.subr.mxu0 0.0
    %2473 = vmatpush1.msra.mxu0 0.0
    %2474 = vmatprep.subr.mxu0 0.0
    %2475 = vmatpush1.msra.mxu0 0.0
    %2476 = vmatprep.subr.mxu0 0.0
    %2477 = vmatpush1.msra.mxu0 0.0
    %2478 = vmatprep.subr.mxu0 0.0
    %2479 = vmatpush1.msra.mxu0 0.0
    %2480 = vmatprep.subr.mxu0 0.0
    %2481 = vmatpush1.msra.mxu0 0.0
    %2482 = vmatprep.subr.mxu0 0.0
    %2483 = vmatpush1.msra.mxu0 0.0
    %2484 = vmatprep.mubr.f32.mxu0 0.0
    %2485 = vmatmul.mubr.f32.gmra.mrb[0].mxu0 %v2415
    %v2486 = vpop.f32.mrb[0].mxu0
    %v2487 = vadd.f32 %v2412, %v2486
    %v2488 = vpop.f32.mrb[0].mxu0
    %2489 = vmatprep.mubr.f32.mxu0 0.0
    %2490 = vmatmul.mubr.f32.gmra.mrb[0].mxu0 %v2418
    %v2491 = vpop.f32.mrb[0].mxu0
    %v2492 = vadd.f32 %v2412, %v2491
    %v2493 = vpop.f32.mrb[0].mxu0
    %2494 = vdwg.mxu0
    %v2495 = vadd.f32 %v1473, %v2487
    %v2496 = vadd.f32 %v1474, %v2492
    %s2497 = scalar_lea.vmem %s8, 1
    %v2498 = vld [vmem:[%s2497] sm:$0x1]
    %s2499 = scalar_lea.vmem %s9, 1
    %v2500 = vld [vmem:[%s2499] sm:$0x1]
    %v2501 = vsel %vm113, %v2495, 0.0
    %2502 = vadd.xlane.f32.xlu0 %v2501
    %v2503 = vpop.xlane.xlu0 %2502
    %v2504 = vsel %vm113, %v2496, 0.0
    %2505 = vadd.xlane.f32.xlu0 %v2504
    %v2506 = vpop.xlane.xlu0 %2505
    %v2507 = vmul.f32 %v2503, %v120
    %v2508 = vmul.f32 %v2506, %v120
    %v2509 = vsub.f32 %v2495, %v2507
    %v2510 = vsub.f32 %v2496, %v2508
    %v2511 = vmul.f32 %v2509, %v2509
    %v2512 = vmul.f32 %v2510, %v2510
    %v2513 = vsel %vm113, %v2511, 0.0
    %2514 = vadd.xlane.f32.xlu0 %v2513
    %v2515 = vpop.xlane.xlu0 %2514
    %v2516 = vsel %vm113, %v2512, 0.0
    %2517 = vadd.xlane.f32.xlu0 %v2516
    %v2518 = vpop.xlane.xlu0 %2517
    %v2519 = vmul.f32 %v2515, %v120
    %v2520 = vmul.f32 %v2518, %v120
    %v2521 = vadd.f32 %v2519, 1e-12
    %v2522 = vadd.f32 %v2520, 1e-12
    %v2523 = vrsqrt.pop %v2521
    %v2524 = vrsqrt.pop %v2522
    %v2525 = vmul.f32 %v2509, %v2523
    %v2526 = vmul.f32 %v2510, %v2524
    %v2528 = vlaneseq
    %v2529 = vshrl.u32 %v2528, 7
    %v2530 = vsub.s32 0, %v2529
    %v2531 = vrot.slane %v2498, %v2530
    %v2533 = vmul.f32 %v2525, %v2531
    %v2534 = vmul.f32 %v2526, %v2531
    %v2536 = vlaneseq
    %v2537 = vshrl.u32 %v2536, 7
    %v2538 = vsub.s32 0, %v2537
    %v2539 = vrot.slane %v2500, %v2538
    %v2541 = vadd.f32 %v2533, %v2539
    %v2542 = vadd.f32 %v2534, %v2539
    %s2543 = scalar_lea.vmem [#allocation5], 32
    %v2544 = vld [vmem:[%s2543] sm:$0xff]
    %v2545 = vld [vmem:[%s2543 + $0x8] sm:$0xff]
    %v2546 = vld [vmem:[%s2543 + $0x10] sm:$0xff]
    %v2547 = vld [vmem:[%s2543 + $0x18] sm:$0xff]
    %s2548 = scalar_lea.vmem %s11, 1
    %v2549 = vld [vmem:[%s2548] sm:$0x1]
    %v2551 = vlaneseq
    %v2552 = vshrl.u32 %v2551, 7
    %v2553 = vsub.s32 0, %v2552
    %v2554 = vrot.slane %v2549, %v2553
    %v2557 = vsel %vm113, %v2541, 0
    %v2560 = vsel %vm113, %v2542, 0
    %2562 = vmatprep.subr.mxu0 0.0
    %2563 = vmatpush1.msra.mxu0 %v2544
    %2564 = vmatprep.subr.mxu0 0.0
    %2565 = vmatpush1.msra.mxu0 %v2545
    %2566 = vmatprep.subr.mxu0 0.0
    %2567 = vmatpush1.msra.mxu0 %v2546
    %2568 = vmatprep.subr.mxu0 0.0
    %2569 = vmatpush1.msra.mxu0 %v2547
    %2570 = vmatprep.subr.mxu0 0.0
    %2571 = vmatpush1.msra.mxu0 0.0
    %2572 = vmatprep.subr.mxu0 0.0
    %2573 = vmatpush1.msra.mxu0 0.0
    %2574 = vmatprep.subr.mxu0 0.0
    %2575 = vmatpush1.msra.mxu0 0.0
    %2576 = vmatprep.subr.mxu0 0.0
    %2577 = vmatpush1.msra.mxu0 0.0
    %2578 = vmatprep.subr.mxu0 0.0
    %2579 = vmatpush1.msra.mxu0 0.0
    %2580 = vmatprep.subr.mxu0 0.0
    %2581 = vmatpush1.msra.mxu0 0.0
    %2582 = vmatprep.subr.mxu0 0.0
    %2583 = vmatpush1.msra.mxu0 0.0
    %2584 = vmatprep.subr.mxu0 0.0
    %2585 = vmatpush1.msra.mxu0 0.0
    %2586 = vmatprep.subr.mxu0 0.0
    %2587 = vmatpush1.msra.mxu0 0.0
    %2588 = vmatprep.subr.mxu0 0.0
    %2589 = vmatpush1.msra.mxu0 0.0
    %2590 = vmatprep.subr.mxu0 0.0
    %2591 = vmatpush1.msra.mxu0 0.0
    %2592 = vmatprep.subr.mxu0 0.0
    %2593 = vmatpush1.msra.mxu0 0.0
    %2594 = vmatprep.subr.mxu0 0.0
    %2595 = vmatpush1.msra.mxu0 0.0
    %2596 = vmatprep.subr.mxu0 0.0
    %2597 = vmatpush1.msra.mxu0 0.0
    %2598 = vmatprep.subr.mxu0 0.0
    %2599 = vmatpush1.msra.mxu0 0.0
    %2600 = vmatprep.subr.mxu0 0.0
    %2601 = vmatpush1.msra.mxu0 0.0
    %2602 = vmatprep.subr.mxu0 0.0
    %2603 = vmatpush1.msra.mxu0 0.0
    %2604 = vmatprep.subr.mxu0 0.0
    %2605 = vmatpush1.msra.mxu0 0.0
    %2606 = vmatprep.subr.mxu0 0.0
    %2607 = vmatpush1.msra.mxu0 0.0
    %2608 = vmatprep.subr.mxu0 0.0
    %2609 = vmatpush1.msra.mxu0 0.0
    %2610 = vmatprep.subr.mxu0 0.0
    %2611 = vmatpush1.msra.mxu0 0.0
    %2612 = vmatprep.subr.mxu0 0.0
    %2613 = vmatpush1.msra.mxu0 0.0
    %2614 = vmatprep.subr.mxu0 0.0
    %2615 = vmatpush1.msra.mxu0 0.0
    %2616 = vmatprep.subr.mxu0 0.0
    %2617 = vmatpush1.msra.mxu0 0.0
    %2618 = vmatprep.subr.mxu0 0.0
    %2619 = vmatpush1.msra.mxu0 0.0
    %2620 = vmatprep.subr.mxu0 0.0
    %2621 = vmatpush1.msra.mxu0 0.0
    %2622 = vmatprep.subr.mxu0 0.0
    %2623 = vmatpush1.msra.mxu0 0.0
    %2624 = vmatprep.subr.mxu0 0.0
    %2625 = vmatpush1.msra.mxu0 0.0
    %2626 = vmatprep.mubr.f32.mxu0 0.0
    %2627 = vmatmul.mubr.f32.gmra.mrb[0].mxu0 %v2557
    %v2628 = vpop.f32.mrb[0].mxu0
    %v2629 = vadd.f32 %v2554, %v2628
    %v2630 = vpop.f32.mrb[0].mxu0
    %2631 = vmatprep.mubr.f32.mxu0 0.0
    %2632 = vmatmul.mubr.f32.gmra.mrb[0].mxu0 %v2560
    %v2633 = vpop.f32.mrb[0].mxu0
    %v2634 = vadd.f32 %v2554, %v2633
    %v2635 = vpop.f32.mrb[0].mxu0
    %2636 = vdwg.mxu0
    %v2637 = vmul.f32 %v2629, 0.5
    %v2638 = vmul.f32 %v2634, 0.5
    %v2639 = vmul.f32 %v2629, 0.044715
    %v2640 = vmul.f32 %v2634, 0.044715
    %v2641 = vmul.f32 %v2639, %v2629
    %v2642 = vmul.f32 %v2640, %v2634
    %v2643 = vmul.f32 %v2641, %v2629
    %v2644 = vmul.f32 %v2642, %v2634
    %v2645 = vadd.f32 %v2629, %v2643
    %v2646 = vadd.f32 %v2634, %v2644
    %v2647 = vmul.f32 %v2645, 0.7978846
    %v2648 = vmul.f32 %v2646, 0.7978846
    %v2649 = vtanh.pop %v2647
    %v2650 = vtanh.pop %v2648
    %v2651 = vadd.f32 %v2649, 1.0
    %v2652 = vadd.f32 %v2650, 1.0
    %v2653 = vmul.f32 %v2637, %v2651
    %v2654 = vmul.f32 %v2638, %v2652
    %s2655 = scalar_lea.vmem %s12, 64
    %v2656 = vld [vmem:[%s2655] sm:$0xff]
    %v2657 = vld [vmem:[%s2655 + $0x8] sm:$0xff]
    %v2658 = vld [vmem:[%s2655 + $0x10] sm:$0xff]
    %v2659 = vld [vmem:[%s2655 + $0x18] sm:$0xff]
    %v2660 = vld [vmem:[%s2655 + $0x20] sm:$0xff]
    %v2661 = vld [vmem:[%s2655 + $0x28] sm:$0xff]
    %v2662 = vld [vmem:[%s2655 + $0x30] sm:$0xff]
    %v2663 = vld [vmem:[%s2655 + $0x38] sm:$0xff]
    %s2664 = scalar_lea.vmem %s13, 1
    %v2665 = vld [vmem:[%s2664] sm:$0x1]
    %v2667 = vlaneseq
    %v2668 = vshrl.u32 %v2667, 7
    %v2669 = vsub.s32 0, %v2668
    %v2670 = vrot.slane %v2665, %v2669
    %v2673 = vsel %vm1347, %v2653, 0
    %v2676 = vsel %vm1347, %v2654, 0
    %2678 = vmatprep.subr.mxu0 0.0
    %2679 = vmatpush1.msra.mxu0 %v2656
    %2680 = vmatprep.subr.mxu0 0.0
    %2681 = vmatpush1.msra.mxu0 %v2657
    %2682 = vmatprep.subr.mxu0 0.0
    %2683 = vmatpush1.msra.mxu0 %v2658
    %2684 = vmatprep.subr.mxu0 0.0
    %2685 = vmatpush1.msra.mxu0 %v2659
    %2686 = vmatprep.subr.mxu0 0.0
    %2687 = vmatpush1.msra.mxu0 %v2660
    %2688 = vmatprep.subr.mxu0 0.0
    %2689 = vmatpush1.msra.mxu0 %v2661
    %2690 = vmatprep.subr.mxu0 0.0
    %2691 = vmatpush1.msra.mxu0 %v2662
    %2692 = vmatprep.subr.mxu0 0.0
    %2693 = vmatpush1.msra.mxu0 %v2663
    %2694 = vmatprep.subr.mxu0 0.0
    %2695 = vmatpush1.msra.mxu0 0.0
    %2696 = vmatprep.subr.mxu0 0.0
    %2697 = vmatpush1.msra.mxu0 0.0
    %2698 = vmatprep.subr.mxu0 0.0
    %2699 = vmatpush1.msra.mxu0 0.0
    %2700 = vmatprep.subr.mxu0 0.0
    %2701 = vmatpush1.msra.mxu0 0.0
    %2702 = vmatprep.subr.mxu0 0.0
    %2703 = vmatpush1.msra.mxu0 0.0
    %2704 = vmatprep.subr.mxu0 0.0
    %2705 = vmatpush1.msra.mxu0 0.0
    %2706 = vmatprep.subr.mxu0 0.0
    %2707 = vmatpush1.msra.mxu0 0.0
    %2708 = vmatprep.subr.mxu0 0.0
    %2709 = vmatpush1.msra.mxu0 0.0
    %2710 = vmatprep.subr.mxu0 0.0
    %2711 = vmatpush1.msra.mxu0 0.0
    %2712 = vmatprep.subr.mxu0 0.0
    %2713 = vmatpush1.msra.mxu0 0.0
    %2714 = vmatprep.subr.mxu0 0.0
    %2715 = vmatpush1.msra.mxu0 0.0
    %2716 = vmatprep.subr.mxu0 0.0
    %2717 = vmatpush1.msra.mxu0 0.0
    %2718 = vmatprep.subr.mxu0 0.0
    %2719 = vmatpush1.msra.mxu0 0.0
    %2720 = vmatprep.subr.mxu0 0.0
    %2721 = vmatpush1.msra.mxu0 0.0
    %2722 = vmatprep.subr.mxu0 0.0
    %2723 = vmatpush1.msra.mxu0 0.0
    %2724 = vmatprep.subr.mxu0 0.0
    %2725 = vmatpush1.msra.mxu0 0.0
    %2726 = vmatprep.subr.mxu0 0.0
    %2727 = vmatpush1.msra.mxu0 0.0
    %2728 = vmatprep.subr.mxu0 0.0
    %2729 = vmatpush1.msra.mxu0 0.0
    %2730 = vmatprep.subr.mxu0 0.0
    %2731 = vmatpush1.msra.mxu0 0.0
    %2732 = vmatprep.subr.mxu0 0.0
    %2733 = vmatpush1.msra.mxu0 0.0
    %2734 = vmatprep.subr.mxu0 0.0
    %2735 = vmatpush1.msra.mxu0 0.0
    %2736 = vmatprep.subr.mxu0 0.0
    %2737 = vmatpush1.msra.mxu0 0.0
    %2738 = vmatprep.subr.mxu0 0.0
    %2739 = vmatpush1.msra.mxu0 0.0
    %2740 = vmatprep.subr.mxu0 0.0
    %2741 = vmatpush1.msra.mxu0 0.0
    %2742 = vmatprep.mubr.f32.mxu0 0.0
    %2743 = vmatmul.mubr.f32.gmra.mrb[0].mxu0 %v2673
    %v2744 = vpop.f32.mrb[0].mxu0
    %v2745 = vadd.f32 %v2670, %v2744
    %v2746 = vpop.f32.mrb[0].mxu0
    %2747 = vmatprep.mubr.f32.mxu0 0.0
    %2748 = vmatmul.mubr.f32.gmra.mrb[0].mxu0 %v2676
    %v2749 = vpop.f32.mrb[0].mxu0
    %v2750 = vadd.f32 %v2670, %v2749
    %v2751 = vpop.f32.mrb[0].mxu0
    %2752 = vdwg.mxu0
    %v2753 = vadd.f32 %v2541, %v2745
    %v2754 = vadd.f32 %v2542, %v2750
    %s2755 = scalar_lea.vmem %s14, 1
    %v2756 = vld [vmem:[%s2755] sm:$0x1]
    %s2757 = scalar_lea.vmem %s15, 1
    %v2758 = vld [vmem:[%s2757] sm:$0x1]
    %v2759 = vsel %vm113, %v2753, 0.0
    %2760 = vadd.xlane.f32.xlu0 %v2759
    %v2761 = vpop.xlane.xlu0 %2760
    %v2762 = vsel %vm113, %v2754, 0.0
    %2763 = vadd.xlane.f32.xlu0 %v2762
    %v2764 = vpop.xlane.xlu0 %2763
    %v2765 = vmul.f32 %v2761, %v120
    %v2766 = vmul.f32 %v2764, %v120
    %v2767 = vsub.f32 %v2753, %v2765
    %v2768 = vsub.f32 %v2754, %v2766
    %v2769 = vmul.f32 %v2767, %v2767
    %v2770 = vmul.f32 %v2768, %v2768
    %v2771 = vsel %vm113, %v2769, 0.0
    %2772 = vadd.xlane.f32.xlu0 %v2771
    %v2773 = vpop.xlane.xlu0 %2772
    %v2774 = vsel %vm113, %v2770, 0.0
    %2775 = vadd.xlane.f32.xlu0 %v2774
    %v2776 = vpop.xlane.xlu0 %2775
    %v2777 = vmul.f32 %v2773, %v120
    %v2778 = vmul.f32 %v2776, %v120
    %v2779 = vadd.f32 %v2777, 1e-12
    %v2780 = vadd.f32 %v2778, 1e-12
    %v2781 = vrsqrt.pop %v2779
    %v2782 = vrsqrt.pop %v2780
    %v2783 = vmul.f32 %v2767, %v2781
    %v2784 = vmul.f32 %v2768, %v2782
    %v2786 = vlaneseq
    %v2787 = vshrl.u32 %v2786, 7
    %v2788 = vsub.s32 0, %v2787
    %v2789 = vrot.slane %v2756, %v2788
    %v2791 = vmul.f32 %v2783, %v2789
    %v2792 = vmul.f32 %v2784, %v2789
    %v2794 = vlaneseq
    %v2795 = vshrl.u32 %v2794, 7
    %v2796 = vsub.s32 0, %v2795
    %v2797 = vrot.slane %v2758, %v2796
    %v2799 = vadd.f32 %v2791, %v2797
    %v2800 = vadd.f32 %v2792, %v2797
    %v2802 = vrot.slane %v2800, 7
    %vm2804 = vcmask 1040384
    %v2805 = vsel %vm2804, %v2799, %v2802
    %v2806 = vld [vmem:[%s16] sm:$0xff]
    %v2807 = vld [vmem:[%s16 + $0x8] sm:$0xff]
    %v2808 = vld [vmem:[%s16 + $0x10] sm:$0xff]
    %v2809 = vld [vmem:[%s16 + $0x18] sm:$0xff]
    %v2810 = vld [vmem:[%s17] sm:$0x1]
    %v2812 = vlaneseq
    %v2813 = vshrl.u32 %v2812, 7
    %v2814 = vsub.s32 0, %v2813
    %v2815 = vrot.slane %v2810, %v2814
    %v2818 = vsel %vm113, %v2805, 0
    %2820 = vmatprep.subr.mxu0 0.0
    %2821 = vmatpush1.msra.mxu0 %v2806
    %2822 = vmatprep.subr.mxu0 0.0
    %2823 = vmatpush1.msra.mxu0 %v2807
    %2824 = vmatprep.subr.mxu0 0.0
    %2825 = vmatpush1.msra.mxu0 %v2808
    %2826 = vmatprep.subr.mxu0 0.0
    %2827 = vmatpush1.msra.mxu0 %v2809
    %2828 = vmatprep.subr.mxu0 0.0
    %2829 = vmatpush1.msra.mxu0 0.0
    %2830 = vmatprep.subr.mxu0 0.0
    %2831 = vmatpush1.msra.mxu0 0.0
    %2832 = vmatprep.subr.mxu0 0.0
    %2833 = vmatpush1.msra.mxu0 0.0
    %2834 = vmatprep.subr.mxu0 0.0
    %2835 = vmatpush1.msra.mxu0 0.0
    %2836 = vmatprep.subr.mxu0 0.0
    %2837 = vmatpush1.msra.mxu0 0.0
    %2838 = vmatprep.subr.mxu0 0.0
    %2839 = vmatpush1.msra.mxu0 0.0
    %2840 = vmatprep.subr.mxu0 0.0
    %2841 = vmatpush1.msra.mxu0 0.0
    %2842 = vmatprep.subr.mxu0 0.0
    %2843 = vmatpush1.msra.mxu0 0.0
    %2844 = vmatprep.subr.mxu0 0.0
    %2845 = vmatpush1.msra.mxu0 0.0
    %2846 = vmatprep.subr.mxu0 0.0
    %2847 = vmatpush1.msra.mxu0 0.0
    %2848 = vmatprep.subr.mxu0 0.0
    %2849 = vmatpush1.msra.mxu0 0.0
    %2850 = vmatprep.subr.mxu0 0.0
    %2851 = vmatpush1.msra.mxu0 0.0
    %2852 = vmatprep.subr.mxu0 0.0
    %2853 = vmatpush1.msra.mxu0 0.0
    %2854 = vmatprep.subr.mxu0 0.0
    %2855 = vmatpush1.msra.mxu0 0.0
    %2856 = vmatprep.subr.mxu0 0.0
    %2857 = vmatpush1.msra.mxu0 0.0
    %2858 = vmatprep.subr.mxu0 0.0
    %2859 = vmatpush1.msra.mxu0 0.0
    %2860 = vmatprep.subr.mxu0 0.0
    %2861 = vmatpush1.msra.mxu0 0.0
    %2862 = vmatprep.subr.mxu0 0.0
    %2863 = vmatpush1.msra.mxu0 0.0
    %2864 = vmatprep.subr.mxu0 0.0
    %2865 = vmatpush1.msra.mxu0 0.0
    %2866 = vmatprep.subr.mxu0 0.0
    %2867 = vmatpush1.msra.mxu0 0.0
    %2868 = vmatprep.subr.mxu0 0.0
    %2869 = vmatpush1.msra.mxu0 0.0
    %2870 = vmatprep.subr.mxu0 0.0
    %2871 = vmatpush1.msra.mxu0 0.0
    %2872 = vmatprep.subr.mxu0 0.0
    %2873 = vmatpush1.msra.mxu0 0.0
    %2874 = vmatprep.subr.mxu0 0.0
    %2875 = vmatpush1.msra.mxu0 0.0
    %2876 = vmatprep.subr.mxu0 0.0
    %2877 = vmatpush1.msra.mxu0 0.0
    %2878 = vmatprep.subr.mxu0 0.0
    %2879 = vmatpush1.msra.mxu0 0.0
    %2880 = vmatprep.subr.mxu0 0.0
    %2881 = vmatpush1.msra.mxu0 0.0
    %2882 = vmatprep.subr.mxu0 0.0
    %2883 = vmatpush1.msra.mxu0 0.0
    %2884 = vmatprep.mubr.f32.mxu0 0.0
    %2885 = vmatmul.mubr.f32.gmra.mrb[0].mxu0 %v2818
    %v2886 = vpop.f32.mrb[0].mxu0
    %v2887 = vadd.f32 %v2815, %v2886
    %v2888 = vpop.f32.mrb[0].mxu0
    %2889 = vdwg.mxu0
    %v2890 = vtanh.pop %v2887
    %v2891 = vld [vmem:[#allocation7] sm:$0xff]
    %v2892 = vld [vmem:[#allocation7 + $0x8] sm:$0xff]
    %v2893 = vld [vmem:[#allocation7 + $0x10] sm:$0xff]
    %v2894 = vld [vmem:[#allocation7 + $0x18] sm:$0xff]
    %v2895 = vld [vmem:[%s19] sm:$0x1]
    %v2897 = vlaneseq
    %v2898 = vshrl.u32 %v2897, 7
    %v2899 = vsub.s32 0, %v2898
    %v2900 = vrot.slane %v2895, %v2899
    %v2903 = vsel %vm113, %v2890, 0
    %2905 = vmatprep.subr.mxu0 0.0
    %2906 = vmatpush1.msra.mxu0 %v2891
    %2907 = vmatprep.subr.mxu0 0.0
    %2908 = vmatpush1.msra.mxu0 %v2892
    %2909 = vmatprep.subr.mxu0 0.0
    %2910 = vmatpush1.msra.mxu0 %v2893
    %2911 = vmatprep.subr.mxu0 0.0
    %2912 = vmatpush1.msra.mxu0 %v2894
    %2913 = vmatprep.subr.mxu0 0.0
    %2914 = vmatpush1.msra.mxu0 0.0
    %2915 = vmatprep.subr.mxu0 0.0
    %2916 = vmatpush1.msra.mxu0 0.0
    %2917 = vmatprep.subr.mxu0 0.0
    %2918 = vmatpush1.msra.mxu0 0.0
    %2919 = vmatprep.subr.mxu0 0.0
    %2920 = vmatpush1.msra.mxu0 0.0
    %2921 = vmatprep.subr.mxu0 0.0
    %2922 = vmatpush1.msra.mxu0 0.0
    %2923 = vmatprep.subr.mxu0 0.0
    %2924 = vmatpush1.msra.mxu0 0.0
    %2925 = vmatprep.subr.mxu0 0.0
    %2926 = vmatpush1.msra.mxu0 0.0
    %2927 = vmatprep.subr.mxu0 0.0
    %2928 = vmatpush1.msra.mxu0 0.0
    %2929 = vmatprep.subr.mxu0 0.0
    %2930 = vmatpush1.msra.mxu0 0.0
    %2931 = vmatprep.subr.mxu0 0.0
    %2932 = vmatpush1.msra.mxu0 0.0
    %2933 = vmatprep.subr.mxu0 0.0
    %2934 = vmatpush1.msra.mxu0 0.0
    %2935 = vmatprep.subr.mxu0 0.0
    %2936 = vmatpush1.msra.mxu0 0.0
    %2937 = vmatprep.subr.mxu0 0.0
    %2938 = vmatpush1.msra.mxu0 0.0
    %2939 = vmatprep.subr.mxu0 0.0
    %2940 = vmatpush1.msra.mxu0 0.0
    %2941 = vmatprep.subr.mxu0 0.0
    %2942 = vmatpush1.msra.mxu0 0.0
    %2943 = vmatprep.subr.mxu0 0.0
    %2944 = vmatpush1.msra.mxu0 0.0
    %2945 = vmatprep.subr.mxu0 0.0
    %2946 = vmatpush1.msra.mxu0 0.0
    %2947 = vmatprep.subr.mxu0 0.0
    %2948 = vmatpush1.msra.mxu0 0.0
    %2949 = vmatprep.subr.mxu0 0.0
    %2950 = vmatpush1.msra.mxu0 0.0
    %2951 = vmatprep.subr.mxu0 0.0
    %2952 = vmatpush1.msra.mxu0 0.0
    %2953 = vmatprep.subr.mxu0 0.0
    %2954 = vmatpush1.msra.mxu0 0.0
    %2955 = vmatprep.subr.mxu0 0.0
    %2956 = vmatpush1.msra.mxu0 0.0
    %2957 = vmatprep.subr.mxu0 0.0
    %2958 = vmatpush1.msra.mxu0 0.0
    %2959 = vmatprep.subr.mxu0 0.0
    %2960 = vmatpush1.msra.mxu0 0.0
    %2961 = vmatprep.subr.mxu0 0.0
    %2962 = vmatpush1.msra.mxu0 0.0
    %2963 = vmatprep.subr.mxu0 0.0
    %2964 = vmatpush1.msra.mxu0 0.0
    %2965 = vmatprep.subr.mxu0 0.0
    %2966 = vmatpush1.msra.mxu0 0.0
    %2967 = vmatprep.subr.mxu0 0.0
    %2968 = vmatpush1.msra.mxu0 0.0
    %2969 = vmatprep.mubr.f32.mxu0 0.0
    %2970 = vmatmul.mubr.f32.gmra.mrb[0].mxu0 %v2903
    %v2971 = vpop.f32.mrb[0].mxu0
    %v2972 = vadd.f32 %v2900, %v2971
    %v2973 = vpop.f32.mrb[0].mxu0
    %2974 = vdwg.mxu0
    %vm2975 = vcmask 17408
    %2976 = vst.msk [vmem:[#allocation8] sm:$0x3] %vm2975, %v2972
    // Predicated region
    $region94: #{_lambda_.1} parent=1 // pred_check
      _
    $region95: #{_lambda_.1} parent=1 // pred_check_branch
      %2978 = sbr.rel (0) target = $region97
    $region96: #{_lambda_.1} parent=1 // pred_region
      %s2980 = ssub.s32 32, 32
      %2981 = vsyncadd [#allocation4], %s2980
      %s2983 = sshll.u32 [#allocation8], 4
      %s2984 = int_to_ptr.vmem [resolvable:$true] %s2983
      %2986 = dma.vmem_to_hbm [thread:$0]  %s2984, 32, %s20, [#allocation4]
    $region97: #{_lambda_.1} parent=1 // pred_fallthru
      _
    // Predicated region
    $region98: #{_lambda_.1} parent=1 // pred_check
      _
    $region99: #{_lambda_.1} parent=1 // pred_check_branch
      %2988 = sbr.rel (0) target = $region101
    $region100: #{_lambda_.1} parent=1 // pred_region
      %2989 = dma.done [#allocation4], 32
    $region101: #{_lambda_.1} parent=1 // pred_fallthru
      _
    %2990 = vsyncpa [#allocation3], 1
    %2991 = vsyncpa [#allocation6], 1
    %2992 = vsyncpa [#allocation4], 1

</llo_original>
